<compile_context>
chip_gen: v7x
topology: tpu7x:2x2x1
jax: 0.10.0
libtpu: 0.0.40
codegen_flags: <defaults>
</compile_context>

<pallas_src>
from functools import partial

import numpy as np
import jax
import jax.numpy as jnp
from jax.experimental import pallas as pl
from jax.experimental.pallas import tpu as pltpu

N_WIRES = 4
DIM = 2 ** N_WIRES                              # 16 amplitudes
LANE = 128                                      # TPU lane width
GATE_KINDS = ["rx"] * 4 + ["ry"] * 4 + ["rz"] * 4 + ["rx"] * 4
N_GATES = len(GATE_KINDS)                       # 16 encoder gates

# ----------------------------------------------------------------------------
# Host-side constant construction (parameter / circuit setup -- "glue")
# ----------------------------------------------------------------------------
_I2 = np.eye(2, dtype=np.complex128)
_X = np.array([[0, 1], [1, 0]], dtype=np.complex128)
_MY = np.array([[0, -1], [1, 0]], dtype=np.complex128)   # -i*Y (real matrix)
_Z = np.array([[1, 0], [0, -1]], dtype=np.complex128)
_H = (1.0 / np.sqrt(2.0)) * np.array([[1, 1], [1, -1]], dtype=np.complex128)
_SX = 0.5 * np.array([[1 + 1j, 1 - 1j], [1 - 1j, 1 + 1j]], dtype=np.complex128)
_P0 = np.array([[1, 0], [0, 0]], dtype=np.complex128)
_P1 = np.array([[0, 0], [0, 1]], dtype=np.complex128)


def _kron_all(mats):
    out = mats[0]
    for m in mats[1:]:
        out = np.kron(out, m)
    return out


def _embed1(gate, wire):
    mats = [_I2] * N_WIRES
    mats[wire] = gate
    return _kron_all(mats)


def _rx_mat(t):
    c, s = np.cos(t / 2.0), np.sin(t / 2.0)
    return np.array([[c, -1j * s], [-1j * s, c]], dtype=np.complex128)


def _ry_mat(t):
    c, s = np.cos(t / 2.0), np.sin(t / 2.0)
    return np.array([[c, -s], [s, c]], dtype=np.complex128)


def _rz_mat(t):
    return np.array([[np.exp(-1j * t / 2.0), 0], [0, np.exp(1j * t / 2.0)]],
                    dtype=np.complex128)


def _zdiag(wire):
    return np.real(np.diag(_embed1(_Z, wire)))  # (16,) of +/-1


def build_constants(thetas, C, H, W):
    """thetas = (rx0, ry0, rz0, crx0) trainable scalar angles."""
    th_rx0, th_ry0, th_rz0, th_crx0 = thetas
    oh, ow = H // 6, W // 6
    hh, ww = 6 * oh, 6 * ow                     # active pooling window (12x12)
    kin = C * hh * ww
    assert C * oh * ow == DIM, "circuit expects 16 pooled features"
    z16 = np.zeros((DIM, DIM))

    # --- encoder generators: one real 32x32 block matrix per gate -------------
    # Each gate acts as  psi' = cos(t/2)*psi + sin(t/2)*(M @ psi_blk)  with
    # psi_blk = [Re; Im] and M the block-real form of (-i * generator):
    #   RX_w: -i*X_w -> [[0, X_w], [-X_w, 0]]     (X_w = bit-flip permutation)
    #   RY_w: -i*Y_w (real)       -> blkdiag(-iY_w, -iY_w)
    #   RZ_w: -i*Z_w -> [[0, Z_w], [-Z_w, 0]]     (Z_w diagonal)
    enc = []
    for k, kind in enumerate(GATE_KINDS):
        w = k % N_WIRES
        if kind == "rx":
            g = np.real(_embed1(_X, w))
            enc.append(np.block([[z16, g], [-g, z16]]))
        elif kind == "ry":
            g = np.real(_embed1(_MY, w))
            enc.append(np.block([[g, z16], [z16, g]]))
        else:  # rz
            g = np.real(_embed1(_Z, w))
            enc.append(np.block([[z16, g], [-g, z16]]))
    enc = np.stack(enc, axis=0)                 # (16, 32, 32)

    # --- fixed (batch-independent) tail folded into one 16x16 complex unitary -
    u_rx0 = _embed1(_rx_mat(th_rx0), 0)
    u_ry0 = _embed1(_ry_mat(th_ry0), 1)
    u_rz0 = _embed1(_rz_mat(th_rz0), 3)
    u_crx = _kron_all([_P0, _I2, _I2, _I2]) + _kron_all([_P1, _I2, _rx_mat(th_crx0), _I2])
    u_h3 = _embed1(_H, 3)
    u_sx2 = _embed1(_SX, 2)
    u_cnot = _kron_all([_I2, _I2, _I2, _P0]) + _kron_all([_X, _I2, _I2, _P1])
    m_qu = np.array([[1, 0, 0, 0],
                     [0, 1, 0, 0],
                     [0, 0, 0, 1j],
                     [0, 0, -1j, 0]], dtype=np.complex128)
    u_qu = _kron_all([_I2, m_qu, _I2])
    u_fixed = u_qu @ u_cnot @ u_sx2 @ u_h3 @ u_crx @ u_rz0 @ u_ry0 @ u_rx0
    ur, ui = np.real(u_fixed), np.imag(u_fixed)
    ublock = np.block([[ur, -ui], [ui, ur]])    # real 32x32 acting on [Re; Im]

    # --- avg_pool2d(kernel=6, stride=6).view(B, 16) over the ACTIVE window ----
    # feat_t = pool_t @ x_win^T  with  x_win = x[:, :, :hh, :ww].reshape(B, kin)
    pool_t = np.zeros((C * oh * ow, kin), dtype=np.float64)
    for c in range(C):
        for i in range(oh):
            for j in range(ow):
                rowk = c * (oh * ow) + i * ow + j
                for r in range(6 * i, 6 * i + 6):
                    for s in range(6 * j, 6 * j + 6):
                        pool_t[rowk, (c * hh + r) * ww + s] = 1.0 / 36.0

    consts = dict(pool_t=jnp.asarray(pool_t, jnp.float32),
                  enc=jnp.asarray(enc, jnp.float32),
                  ublock=jnp.asarray(ublock, jnp.float32))
    host = dict(u_fixed=u_fixed,
                z_diag=np.stack([_zdiag(w) for w in range(N_WIRES)], axis=0))
    return consts, host


# ----------------------------------------------------------------------------
# Pallas kernel
# ----------------------------------------------------------------------------
def qfc_kernel(x_ref, pool_ref, enc_ref, ub_ref, out_ref):
    tb = x_ref.shape[0]

    # pooled features with batch on lanes: (16, kin) @ (tb, kin)^T -> (16, tb)
    # (trans-B contraction, same pattern as q@k^T in flash attention)
    feat_t = jax.lax.dot_general(
        pool_ref[...], x_ref[...],
        dimension_numbers=(((1,), (1,)), ((), ())),
        preferred_element_type=jnp.float32)

    half = feat_t * 0.5
    # cos/sin computed once on the full (16, tb) block: only 8 EUP vreg pushes
    # per tile (vs 32 for per-gate (1, tb) slices) and ~8 extra live vregs at
    # tb=256, comfortably inside the 64-entry register file.
    cosv = jnp.cos(half)
    sinv = jnp.sin(half)

    # stacked real state [Re; Im] = |0000> on every batch lane, (32, tb)
    col = jax.lax.broadcasted_iota(jnp.int32, (2 * DIM, 1), 0)
    st = jnp.broadcast_to((col == 0).astype(jnp.float32), (2 * DIM, tb))

    # encoder: rx*4, ry*4, rz*4, rx*4 on wires k % 4, angle = feat[k].
    # Each gate is one constant 32x32 MXU dot + one VPU FMA — no per-gate
    # branching, no sublane slice/concat shuffles (MXU is otherwise idle).
    for k in range(N_GATES):
        c = cosv[k:k + 1, :]                                   # (1, tb)
        s = sinv[k:k + 1, :]
        g = jnp.dot(enc_ref[k], st, preferred_element_type=jnp.float32)
        st = c * st + s * g

    # fixed tail (rx0/ry0/rz0/crx0, H, SX, CNOT, qubitunitary): one 32x32 dot
    st = jnp.dot(ub_ref[...], st, preferred_element_type=jnp.float32)

    # MeasureAll(PauliZ) -> reshape(B,2,2).sum(-1) -> log_softmax (VPU/XLU).
    sr = st[:DIM, :]
    si = st[DIM:, :]
    probs = sr * sr + si * si                                  # (16, tb)

    arow = jax.lax.broadcasted_iota(jnp.int32, (DIM, 1), 0)    # (16, 1) column

    def zsgn(w):
        return jnp.where((arow & (DIM >> (w + 1))) != 0, -1.0, 1.0).astype(jnp.float32)

    m0 = zsgn(0) + zsgn(1)                                     # class-0 weights
    m1 = zsgn(2) + zsgn(3)                                     # class-1 weights
    l0 = jnp.sum(probs * m0, axis=0, keepdims=True)            # (1, tb)
    l1 = jnp.sum(probs * m1, axis=0, keepdims=True)
    mx = jnp.maximum(l0, l1)
    lse = jnp.log(jnp.exp(l0 - mx) + jnp.exp(l1 - mx)) + mx
    out_ref[...] = jnp.concatenate([l0, l1], axis=0) - lse     # (2, tb)


# ----------------------------------------------------------------------------
# Wrapper
# ----------------------------------------------------------------------------
def _round_up(n, m):
    return ((n + m - 1) // m) * m


@partial(jax.jit, static_argnames=("use_bf16", "max_batch_tile"))
def qfc_forward(x, consts, *, use_bf16=True, max_batch_tile=256):
    """x: (B, C, H, W) NCHW, exactly as the PyTorch module expects."""
    B, C, H, W = x.shape
    oh, ow = H // 6, W // 6
    hh, ww = 6 * oh, 6 * ow
    kin = C * hh * ww

    # Lane-aligned batch tile. Default 256 keeps the x block <= 0.6 MiB
    # (double-buffered ~1.2 MiB: trivially inside even v5e's 16 MiB scoped-VMEM
    # default) and the gate-chain live set ~30 vregs (no spills). Halve the
    # tile when that gives >= 2 grid steps so the "parallel" axis can be
    # sharded across both v7x TensorCores.
    b_lane = _round_up(B, LANE)
    tb = max(LANE, min(max_batch_tile, _round_up((b_lane + 1) // 2, LANE)))
    bp = _round_up(B, tb)

    in_dtype = jnp.bfloat16 if use_bf16 else jnp.float32
    # Single fused host pass over x: slice to the active pooling window
    # (K 1024 -> 576), cast (bf16 stream by default, i.e. cast BEFORE the copy
    # so the pass writes 2 B/elt), pad the batch. No transpose of x.
    xw = jnp.reshape(x[:, :, :hh, :ww], (B, kin)).astype(in_dtype)
    xp = jnp.pad(xw, ((0, bp - B), (0, 0)))                     # (bp, kin)

    pool_t = consts["pool_t"].astype(in_dtype)
    enc = consts["enc"]
    ublock = consts["ublock"]

    x_bytes = bp * kin * (2 if use_bf16 else 4)
    const_bytes = (pool_t.size * pool_t.dtype.itemsize
                   + enc.size * 4 + ublock.size * 4)
    cost = pl.CostEstimate(
        flops=int(bp * (2 * DIM * kin
                        + (N_GATES + 1) * 2 * (2 * DIM) ** 2
                        + 64 * DIM)),
        transcendentals=int(bp * 2 * DIM),
        bytes_accessed=int(x_bytes + const_bytes + bp * 2 * 4),
    )

    out_t = pl.pallas_call(
        qfc_kernel,
        out_shape=jax.ShapeDtypeStruct((2, bp), jnp.float32),
        grid=(bp // tb,),
        in_specs=[
            pl.BlockSpec((tb, kin), lambda i: (i, 0)),           # streamed x
            pl.BlockSpec((DIM, kin), lambda i: (0, 0)),          # resident consts
            pl.BlockSpec((N_GATES, 2 * DIM, 2 * DIM), lambda i: (0, 0, 0)),
            pl.BlockSpec((2 * DIM, 2 * DIM), lambda i: (0, 0)),
        ],
        out_specs=pl.BlockSpec((2, tb), lambda i: (0, i)),       # lane-dense out
        compiler_params=pltpu.CompilerParams(
            dimension_semantics=("parallel",)),
        cost_estimate=cost,
    )(xp, pool_t, enc, ublock)

    return jnp.transpose(out_t)[:B, :]                           # (B, 2)


# ----------------------------------------------------------------------------
# Pure numpy reference (complex128) for verification
# ----------------------------------------------------------------------------
def reference_numpy(x, thetas, host):
    xnp = np.asarray(x, dtype=np.float64)
    B, C, H, W = xnp.shape
    oh, ow = H // 6, W // 6
    pooled = np.zeros((B, C, oh, ow))
    for i in range(oh):
        for j in range(ow):
            pooled[:, :, i, j] = xnp[:, :, 6 * i:6 * i + 6, 6 * j:6 * j + 6].mean(axis=(2, 3))
    feat = pooled.reshape(B, C * oh * ow)

    gmat = {"rx": _rx_mat, "ry": _ry_mat, "rz": _rz_mat}
    psis = np.zeros((B, DIM), dtype=np.complex128)
    psis[:, 0] = 1.0
    for b in range(B):
        psi = psis[b].copy()
        for k, kind in enumerate(GATE_KINDS):
            psi = _embed1(gmat[kind](feat[b, k]), k % N_WIRES) @ psi
        psis[b] = host["u_fixed"] @ psi

    probs = np.abs(psis) ** 2
    exps = probs @ host["z_diag"].T              # (B, 4) PauliZ expectations
    logits = exps.reshape(B, 2, 2).sum(-1)       # (B, 2)
    m = logits.max(axis=1, keepdims=True)
    lse = np.log(np.exp(logits - m).sum(axis=1, keepdims=True)) + m
    return logits - lse


# ----------------------------------------------------------------------------
if __name__ == "__main__":
    key = jax.random.PRNGKey(0)
    kx, k0, k1, k2, k3 = jax.random.split(key, 5)

    B, C, H, W = 2, 4, 16, 16
    x = jax.random.normal(kx, (B, C, H, W), dtype=jnp.float32)

    # deterministic "trainable" rotation angles (tq init is uniform(-pi, pi))
    thetas = tuple(
        float(jax.random.uniform(k, (), minval=-np.pi, maxval=np.pi))
        for k in (k0, k1, k2, k3)
    )

    consts, host = build_constants(thetas, C, H, W)
    ref = reference_numpy(np.asarray(x), thetas, host)

    # f32 input path: exact forward semantics of the module
    out_f32 = jax.block_until_ready(qfc_forward(x, consts, use_bf16=False))
    assert out_f32.shape == (B, 2)
    assert np.allclose(np.asarray(out_f32), ref, atol=1e-4, rtol=1e-4), (out_f32, ref)

    # default path: bf16 x-stream (halves the only multi-MiB HBM stream).
    # Looser tolerance is purely input / pool-weight quantisation, not kernel
    # algebra (state math stays f32).
    out = jax.block_until_ready(qfc_forward(x, consts))
    assert out.shape == (B, 2)
    assert np.allclose(np.asarray(out), ref, atol=1e-1, rtol=1e-1), (out, ref)
    # log_softmax rows must exponentiate to probability distributions
    assert np.allclose(np.exp(np.asarray(out)).sum(axis=1), 1.0, atol=1e-5)

    # multi-tile grid + batch-padding path (grid > 1, bp > B)
    B2 = 300
    x2 = jax.random.normal(jax.random.PRNGKey(1), (B2, C, H, W), dtype=jnp.float32)
    ref2 = reference_numpy(np.asarray(x2), thetas, host)
    out2_f32 = jax.block_until_ready(qfc_forward(x2, consts, use_bf16=False))
    assert out2_f32.shape == (B2, 2)
    assert np.allclose(np.asarray(out2_f32), ref2, atol=1e-4, rtol=1e-4)
    out2 = jax.block_until_ready(qfc_forward(x2, consts))
    assert np.allclose(np.asarray(out2), ref2, atol=1e-1, rtol=1e-1)

    print("KERNEL_OK")
</pallas_src>

<mosaic_0001>
module attributes {stable_mosaic.version = 11 : i64} {
  func.func @qfc_kernel(%arg0: i32, %arg1: memref<128x576xf32, #tpu.memory_space<vmem>>, %arg2: memref<16x576xf32, #tpu.memory_space<vmem>>, %arg3: memref<16x32x32xf32, #tpu.memory_space<vmem>>, %arg4: memref<32x32xf32, #tpu.memory_space<vmem>>, %arg5: memref<2x128xf32, #tpu.memory_space<vmem>>) attributes {dimension_semantics = [#tpu.dimension_semantics<parallel>], iteration_bounds = array<i64: 1>, scalar_prefetch = 0 : i64, scratch_operands = 0 : i64, tpu.core_type = #tpu.core_type<tc>, window_params = [{transform_indices = @transform_0, window_bounds = array<i64: 128, 576>}, {pipeline_mode = #tpu.pipeline_mode<synchronous>, transform_indices = @transform_1, window_bounds = array<i64: 16, 576>}, {pipeline_mode = #tpu.pipeline_mode<synchronous>, transform_indices = @transform_2, window_bounds = array<i64: 16, 32, 32>}, {pipeline_mode = #tpu.pipeline_mode<synchronous>, transform_indices = @transform_3, window_bounds = array<i64: 32, 32>}, {transform_indices = @transform_4, window_bounds = array<i64: 2, 128>}]} {
    %c0 = arith.constant 0 : index
    %c0_0 = arith.constant 0 : index
    %0 = vector.load %arg2[%c0, %c0_0] : memref<16x576xf32, #tpu.memory_space<vmem>>, vector<16x576xf32>
    %c0_1 = arith.constant 0 : index
    %c0_2 = arith.constant 0 : index
    %1 = vector.load %arg1[%c0_1, %c0_2] : memref<128x576xf32, #tpu.memory_space<vmem>>, vector<128x576xf32>
    %cst = arith.constant dense<0.000000e+00> : vector<16x128xf32>
    %2 = tpu.matmul %0, %1, %cst {dimension_numbers = #tpu.dot_dimension_numbers<[1], [1], [0], [0], [0, 0, 1, 0], [], []>} : vector<16x576xf32>, vector<128x576xf32>, vector<16x128xf32> -> vector<16x128xf32>
    %cst_3 = arith.constant 5.000000e-01 : f32
    %3 = vector.broadcast %cst_3 : f32 to vector<16x128xf32>
    %4 = arith.mulf %2, %3 : vector<16x128xf32>
    %5 = math.cos %4 : vector<16x128xf32>
    %6 = math.sin %4 : vector<16x128xf32>
    %7 = tpu.iota {dimensions = array<i32: 0>} : vector<32x1xi32>
    %c0_i32 = arith.constant 0 : i32
    %8 = vector.broadcast %c0_i32 : i32 to vector<32x1xi32>
    %9 = arith.cmpi eq, %7, %8 : vector<32x1xi32>
    %10 = arith.extui %9 : vector<32x1xi1> to vector<32x1xi32>
    %11 = arith.sitofp %10 : vector<32x1xi32> to vector<32x1xf32>
    %12 = vector.shape_cast %11 : vector<32x1xf32> to vector<32x1xf32>
    %13 = vector.broadcast %12 : vector<32x1xf32> to vector<32x128xf32>
    %14 = vector.extract_strided_slice %5 {offsets = [0, 0], sizes = [1, 128], strides = [1, 1]} : vector<16x128xf32> to vector<1x128xf32>
    %15 = vector.extract_strided_slice %6 {offsets = [0, 0], sizes = [1, 128], strides = [1, 1]} : vector<16x128xf32> to vector<1x128xf32>
    %c0_4 = arith.constant 0 : index
    %c0_5 = arith.constant 0 : index
    %c0_6 = arith.constant 0 : index
    %16 = vector.load %arg3[%c0_4, %c0_5, %c0_6] : memref<16x32x32xf32, #tpu.memory_space<vmem>>, vector<1x32x32xf32>
    %17 = vector.shape_cast %16 : vector<1x32x32xf32> to vector<32x32xf32>
    %cst_7 = arith.constant dense<0.000000e+00> : vector<32x128xf32>
    %18 = tpu.matmul %17, %13, %cst_7 {dimension_numbers = #tpu.dot_dimension_numbers<[1], [0], [0], [1], [0, 0, 1, 1], [], []>} : vector<32x32xf32>, vector<32x128xf32>, vector<32x128xf32> -> vector<32x128xf32>
    %19 = vector.broadcast %14 : vector<1x128xf32> to vector<32x128xf32>
    %20 = arith.mulf %19, %13 : vector<32x128xf32>
    %21 = vector.broadcast %15 : vector<1x128xf32> to vector<32x128xf32>
    %22 = arith.mulf %21, %18 : vector<32x128xf32>
    %23 = arith.addf %20, %22 : vector<32x128xf32>
    %24 = vector.extract_strided_slice %5 {offsets = [1, 0], sizes = [1, 128], strides = [1, 1]} : vector<16x128xf32> to vector<1x128xf32>
    %25 = vector.extract_strided_slice %6 {offsets = [1, 0], sizes = [1, 128], strides = [1, 1]} : vector<16x128xf32> to vector<1x128xf32>
    %c1 = arith.constant 1 : index
    %c0_8 = arith.constant 0 : index
    %c0_9 = arith.constant 0 : index
    %26 = vector.load %arg3[%c1, %c0_8, %c0_9] : memref<16x32x32xf32, #tpu.memory_space<vmem>>, vector<1x32x32xf32>
    %27 = vector.shape_cast %26 : vector<1x32x32xf32> to vector<32x32xf32>
    %cst_10 = arith.constant dense<0.000000e+00> : vector<32x128xf32>
    %28 = tpu.matmul %27, %23, %cst_10 {dimension_numbers = #tpu.dot_dimension_numbers<[1], [0], [0], [1], [0, 0, 1, 1], [], []>} : vector<32x32xf32>, vector<32x128xf32>, vector<32x128xf32> -> vector<32x128xf32>
    %29 = vector.broadcast %24 : vector<1x128xf32> to vector<32x128xf32>
    %30 = arith.mulf %29, %23 : vector<32x128xf32>
    %31 = vector.broadcast %25 : vector<1x128xf32> to vector<32x128xf32>
    %32 = arith.mulf %31, %28 : vector<32x128xf32>
    %33 = arith.addf %30, %32 : vector<32x128xf32>
    %34 = vector.extract_strided_slice %5 {offsets = [2, 0], sizes = [1, 128], strides = [1, 1]} : vector<16x128xf32> to vector<1x128xf32>
    %35 = vector.extract_strided_slice %6 {offsets = [2, 0], sizes = [1, 128], strides = [1, 1]} : vector<16x128xf32> to vector<1x128xf32>
    %c2 = arith.constant 2 : index
    %c0_11 = arith.constant 0 : index
    %c0_12 = arith.constant 0 : index
    %36 = vector.load %arg3[%c2, %c0_11, %c0_12] : memref<16x32x32xf32, #tpu.memory_space<vmem>>, vector<1x32x32xf32>
    %37 = vector.shape_cast %36 : vector<1x32x32xf32> to vector<32x32xf32>
    %cst_13 = arith.constant dense<0.000000e+00> : vector<32x128xf32>
    %38 = tpu.matmul %37, %33, %cst_13 {dimension_numbers = #tpu.dot_dimension_numbers<[1], [0], [0], [1], [0, 0, 1, 1], [], []>} : vector<32x32xf32>, vector<32x128xf32>, vector<32x128xf32> -> vector<32x128xf32>
    %39 = vector.broadcast %34 : vector<1x128xf32> to vector<32x128xf32>
    %40 = arith.mulf %39, %33 : vector<32x128xf32>
    %41 = vector.broadcast %35 : vector<1x128xf32> to vector<32x128xf32>
    %42 = arith.mulf %41, %38 : vector<32x128xf32>
    %43 = arith.addf %40, %42 : vector<32x128xf32>
    %44 = vector.extract_strided_slice %5 {offsets = [3, 0], sizes = [1, 128], strides = [1, 1]} : vector<16x128xf32> to vector<1x128xf32>
    %45 = vector.extract_strided_slice %6 {offsets = [3, 0], sizes = [1, 128], strides = [1, 1]} : vector<16x128xf32> to vector<1x128xf32>
    %c3 = arith.constant 3 : index
    %c0_14 = arith.constant 0 : index
    %c0_15 = arith.constant 0 : index
    %46 = vector.load %arg3[%c3, %c0_14, %c0_15] : memref<16x32x32xf32, #tpu.memory_space<vmem>>, vector<1x32x32xf32>
    %47 = vector.shape_cast %46 : vector<1x32x32xf32> to vector<32x32xf32>
    %cst_16 = arith.constant dense<0.000000e+00> : vector<32x128xf32>
    %48 = tpu.matmul %47, %43, %cst_16 {dimension_numbers = #tpu.dot_dimension_numbers<[1], [0], [0], [1], [0, 0, 1, 1], [], []>} : vector<32x32xf32>, vector<32x128xf32>, vector<32x128xf32> -> vector<32x128xf32>
    %49 = vector.broadcast %44 : vector<1x128xf32> to vector<32x128xf32>
    %50 = arith.mulf %49, %43 : vector<32x128xf32>
    %51 = vector.broadcast %45 : vector<1x128xf32> to vector<32x128xf32>
    %52 = arith.mulf %51, %48 : vector<32x128xf32>
    %53 = arith.addf %50, %52 : vector<32x128xf32>
    %54 = vector.extract_strided_slice %5 {offsets = [4, 0], sizes = [1, 128], strides = [1, 1]} : vector<16x128xf32> to vector<1x128xf32>
    %55 = vector.extract_strided_slice %6 {offsets = [4, 0], sizes = [1, 128], strides = [1, 1]} : vector<16x128xf32> to vector<1x128xf32>
    %c4 = arith.constant 4 : index
    %c0_17 = arith.constant 0 : index
    %c0_18 = arith.constant 0 : index
    %56 = vector.load %arg3[%c4, %c0_17, %c0_18] : memref<16x32x32xf32, #tpu.memory_space<vmem>>, vector<1x32x32xf32>
    %57 = vector.shape_cast %56 : vector<1x32x32xf32> to vector<32x32xf32>
    %cst_19 = arith.constant dense<0.000000e+00> : vector<32x128xf32>
    %58 = tpu.matmul %57, %53, %cst_19 {dimension_numbers = #tpu.dot_dimension_numbers<[1], [0], [0], [1], [0, 0, 1, 1], [], []>} : vector<32x32xf32>, vector<32x128xf32>, vector<32x128xf32> -> vector<32x128xf32>
    %59 = vector.broadcast %54 : vector<1x128xf32> to vector<32x128xf32>
    %60 = arith.mulf %59, %53 : vector<32x128xf32>
    %61 = vector.broadcast %55 : vector<1x128xf32> to vector<32x128xf32>
    %62 = arith.mulf %61, %58 : vector<32x128xf32>
    %63 = arith.addf %60, %62 : vector<32x128xf32>
    %64 = vector.extract_strided_slice %5 {offsets = [5, 0], sizes = [1, 128], strides = [1, 1]} : vector<16x128xf32> to vector<1x128xf32>
    %65 = vector.extract_strided_slice %6 {offsets = [5, 0], sizes = [1, 128], strides = [1, 1]} : vector<16x128xf32> to vector<1x128xf32>
    %c5 = arith.constant 5 : index
    %c0_20 = arith.constant 0 : index
    %c0_21 = arith.constant 0 : index
    %66 = vector.load %arg3[%c5, %c0_20, %c0_21] : memref<16x32x32xf32, #tpu.memory_space<vmem>>, vector<1x32x32xf32>
    %67 = vector.shape_cast %66 : vector<1x32x32xf32> to vector<32x32xf32>
    %cst_22 = arith.constant dense<0.000000e+00> : vector<32x128xf32>
    %68 = tpu.matmul %67, %63, %cst_22 {dimension_numbers = #tpu.dot_dimension_numbers<[1], [0], [0], [1], [0, 0, 1, 1], [], []>} : vector<32x32xf32>, vector<32x128xf32>, vector<32x128xf32> -> vector<32x128xf32>
    %69 = vector.broadcast %64 : vector<1x128xf32> to vector<32x128xf32>
    %70 = arith.mulf %69, %63 : vector<32x128xf32>
    %71 = vector.broadcast %65 : vector<1x128xf32> to vector<32x128xf32>
    %72 = arith.mulf %71, %68 : vector<32x128xf32>
    %73 = arith.addf %70, %72 : vector<32x128xf32>
    %74 = vector.extract_strided_slice %5 {offsets = [6, 0], sizes = [1, 128], strides = [1, 1]} : vector<16x128xf32> to vector<1x128xf32>
    %75 = vector.extract_strided_slice %6 {offsets = [6, 0], sizes = [1, 128], strides = [1, 1]} : vector<16x128xf32> to vector<1x128xf32>
    %c6 = arith.constant 6 : index
    %c0_23 = arith.constant 0 : index
    %c0_24 = arith.constant 0 : index
    %76 = vector.load %arg3[%c6, %c0_23, %c0_24] : memref<16x32x32xf32, #tpu.memory_space<vmem>>, vector<1x32x32xf32>
    %77 = vector.shape_cast %76 : vector<1x32x32xf32> to vector<32x32xf32>
    %cst_25 = arith.constant dense<0.000000e+00> : vector<32x128xf32>
    %78 = tpu.matmul %77, %73, %cst_25 {dimension_numbers = #tpu.dot_dimension_numbers<[1], [0], [0], [1], [0, 0, 1, 1], [], []>} : vector<32x32xf32>, vector<32x128xf32>, vector<32x128xf32> -> vector<32x128xf32>
    %79 = vector.broadcast %74 : vector<1x128xf32> to vector<32x128xf32>
    %80 = arith.mulf %79, %73 : vector<32x128xf32>
    %81 = vector.broadcast %75 : vector<1x128xf32> to vector<32x128xf32>
    %82 = arith.mulf %81, %78 : vector<32x128xf32>
    %83 = arith.addf %80, %82 : vector<32x128xf32>
    %84 = vector.extract_strided_slice %5 {offsets = [7, 0], sizes = [1, 128], strides = [1, 1]} : vector<16x128xf32> to vector<1x128xf32>
    %85 = vector.extract_strided_slice %6 {offsets = [7, 0], sizes = [1, 128], strides = [1, 1]} : vector<16x128xf32> to vector<1x128xf32>
    %c7 = arith.constant 7 : index
    %c0_26 = arith.constant 0 : index
    %c0_27 = arith.constant 0 : index
    %86 = vector.load %arg3[%c7, %c0_26, %c0_27] : memref<16x32x32xf32, #tpu.memory_space<vmem>>, vector<1x32x32xf32>
    %87 = vector.shape_cast %86 : vector<1x32x32xf32> to vector<32x32xf32>
    %cst_28 = arith.constant dense<0.000000e+00> : vector<32x128xf32>
    %88 = tpu.matmul %87, %83, %cst_28 {dimension_numbers = #tpu.dot_dimension_numbers<[1], [0], [0], [1], [0, 0, 1, 1], [], []>} : vector<32x32xf32>, vector<32x128xf32>, vector<32x128xf32> -> vector<32x128xf32>
    %89 = vector.broadcast %84 : vector<1x128xf32> to vector<32x128xf32>
    %90 = arith.mulf %89, %83 : vector<32x128xf32>
    %91 = vector.broadcast %85 : vector<1x128xf32> to vector<32x128xf32>
    %92 = arith.mulf %91, %88 : vector<32x128xf32>
    %93 = arith.addf %90, %92 : vector<32x128xf32>
    %94 = vector.extract_strided_slice %5 {offsets = [8, 0], sizes = [1, 128], strides = [1, 1]} : vector<16x128xf32> to vector<1x128xf32>
    %95 = vector.extract_strided_slice %6 {offsets = [8, 0], sizes = [1, 128], strides = [1, 1]} : vector<16x128xf32> to vector<1x128xf32>
    %c8 = arith.constant 8 : index
    %c0_29 = arith.constant 0 : index
    %c0_30 = arith.constant 0 : index
    %96 = vector.load %arg3[%c8, %c0_29, %c0_30] : memref<16x32x32xf32, #tpu.memory_space<vmem>>, vector<1x32x32xf32>
    %97 = vector.shape_cast %96 : vector<1x32x32xf32> to vector<32x32xf32>
    %cst_31 = arith.constant dense<0.000000e+00> : vector<32x128xf32>
    %98 = tpu.matmul %97, %93, %cst_31 {dimension_numbers = #tpu.dot_dimension_numbers<[1], [0], [0], [1], [0, 0, 1, 1], [], []>} : vector<32x32xf32>, vector<32x128xf32>, vector<32x128xf32> -> vector<32x128xf32>
    %99 = vector.broadcast %94 : vector<1x128xf32> to vector<32x128xf32>
    %100 = arith.mulf %99, %93 : vector<32x128xf32>
    %101 = vector.broadcast %95 : vector<1x128xf32> to vector<32x128xf32>
    %102 = arith.mulf %101, %98 : vector<32x128xf32>
    %103 = arith.addf %100, %102 : vector<32x128xf32>
    %104 = vector.extract_strided_slice %5 {offsets = [9, 0], sizes = [1, 128], strides = [1, 1]} : vector<16x128xf32> to vector<1x128xf32>
    %105 = vector.extract_strided_slice %6 {offsets = [9, 0], sizes = [1, 128], strides = [1, 1]} : vector<16x128xf32> to vector<1x128xf32>
    %c9 = arith.constant 9 : index
    %c0_32 = arith.constant 0 : index
    %c0_33 = arith.constant 0 : index
    %106 = vector.load %arg3[%c9, %c0_32, %c0_33] : memref<16x32x32xf32, #tpu.memory_space<vmem>>, vector<1x32x32xf32>
    %107 = vector.shape_cast %106 : vector<1x32x32xf32> to vector<32x32xf32>
    %cst_34 = arith.constant dense<0.000000e+00> : vector<32x128xf32>
    %108 = tpu.matmul %107, %103, %cst_34 {dimension_numbers = #tpu.dot_dimension_numbers<[1], [0], [0], [1], [0, 0, 1, 1], [], []>} : vector<32x32xf32>, vector<32x128xf32>, vector<32x128xf32> -> vector<32x128xf32>
    %109 = vector.broadcast %104 : vector<1x128xf32> to vector<32x128xf32>
    %110 = arith.mulf %109, %103 : vector<32x128xf32>
    %111 = vector.broadcast %105 : vector<1x128xf32> to vector<32x128xf32>
    %112 = arith.mulf %111, %108 : vector<32x128xf32>
    %113 = arith.addf %110, %112 : vector<32x128xf32>
    %114 = vector.extract_strided_slice %5 {offsets = [10, 0], sizes = [1, 128], strides = [1, 1]} : vector<16x128xf32> to vector<1x128xf32>
    %115 = vector.extract_strided_slice %6 {offsets = [10, 0], sizes = [1, 128], strides = [1, 1]} : vector<16x128xf32> to vector<1x128xf32>
    %c10 = arith.constant 10 : index
    %c0_35 = arith.constant 0 : index
    %c0_36 = arith.constant 0 : index
    %116 = vector.load %arg3[%c10, %c0_35, %c0_36] : memref<16x32x32xf32, #tpu.memory_space<vmem>>, vector<1x32x32xf32>
    %117 = vector.shape_cast %116 : vector<1x32x32xf32> to vector<32x32xf32>
    %cst_37 = arith.constant dense<0.000000e+00> : vector<32x128xf32>
    %118 = tpu.matmul %117, %113, %cst_37 {dimension_numbers = #tpu.dot_dimension_numbers<[1], [0], [0], [1], [0, 0, 1, 1], [], []>} : vector<32x32xf32>, vector<32x128xf32>, vector<32x128xf32> -> vector<32x128xf32>
    %119 = vector.broadcast %114 : vector<1x128xf32> to vector<32x128xf32>
    %120 = arith.mulf %119, %113 : vector<32x128xf32>
    %121 = vector.broadcast %115 : vector<1x128xf32> to vector<32x128xf32>
    %122 = arith.mulf %121, %118 : vector<32x128xf32>
    %123 = arith.addf %120, %122 : vector<32x128xf32>
    %124 = vector.extract_strided_slice %5 {offsets = [11, 0], sizes = [1, 128], strides = [1, 1]} : vector<16x128xf32> to vector<1x128xf32>
    %125 = vector.extract_strided_slice %6 {offsets = [11, 0], sizes = [1, 128], strides = [1, 1]} : vector<16x128xf32> to vector<1x128xf32>
    %c11 = arith.constant 11 : index
    %c0_38 = arith.constant 0 : index
    %c0_39 = arith.constant 0 : index
    %126 = vector.load %arg3[%c11, %c0_38, %c0_39] : memref<16x32x32xf32, #tpu.memory_space<vmem>>, vector<1x32x32xf32>
    %127 = vector.shape_cast %126 : vector<1x32x32xf32> to vector<32x32xf32>
    %cst_40 = arith.constant dense<0.000000e+00> : vector<32x128xf32>
    %128 = tpu.matmul %127, %123, %cst_40 {dimension_numbers = #tpu.dot_dimension_numbers<[1], [0], [0], [1], [0, 0, 1, 1], [], []>} : vector<32x32xf32>, vector<32x128xf32>, vector<32x128xf32> -> vector<32x128xf32>
    %129 = vector.broadcast %124 : vector<1x128xf32> to vector<32x128xf32>
    %130 = arith.mulf %129, %123 : vector<32x128xf32>
    %131 = vector.broadcast %125 : vector<1x128xf32> to vector<32x128xf32>
    %132 = arith.mulf %131, %128 : vector<32x128xf32>
    %133 = arith.addf %130, %132 : vector<32x128xf32>
    %134 = vector.extract_strided_slice %5 {offsets = [12, 0], sizes = [1, 128], strides = [1, 1]} : vector<16x128xf32> to vector<1x128xf32>
    %135 = vector.extract_strided_slice %6 {offsets = [12, 0], sizes = [1, 128], strides = [1, 1]} : vector<16x128xf32> to vector<1x128xf32>
    %c12 = arith.constant 12 : index
    %c0_41 = arith.constant 0 : index
    %c0_42 = arith.constant 0 : index
    %136 = vector.load %arg3[%c12, %c0_41, %c0_42] : memref<16x32x32xf32, #tpu.memory_space<vmem>>, vector<1x32x32xf32>
    %137 = vector.shape_cast %136 : vector<1x32x32xf32> to vector<32x32xf32>
    %cst_43 = arith.constant dense<0.000000e+00> : vector<32x128xf32>
    %138 = tpu.matmul %137, %133, %cst_43 {dimension_numbers = #tpu.dot_dimension_numbers<[1], [0], [0], [1], [0, 0, 1, 1], [], []>} : vector<32x32xf32>, vector<32x128xf32>, vector<32x128xf32> -> vector<32x128xf32>
    %139 = vector.broadcast %134 : vector<1x128xf32> to vector<32x128xf32>
    %140 = arith.mulf %139, %133 : vector<32x128xf32>
    %141 = vector.broadcast %135 : vector<1x128xf32> to vector<32x128xf32>
    %142 = arith.mulf %141, %138 : vector<32x128xf32>
    %143 = arith.addf %140, %142 : vector<32x128xf32>
    %144 = vector.extract_strided_slice %5 {offsets = [13, 0], sizes = [1, 128], strides = [1, 1]} : vector<16x128xf32> to vector<1x128xf32>
    %145 = vector.extract_strided_slice %6 {offsets = [13, 0], sizes = [1, 128], strides = [1, 1]} : vector<16x128xf32> to vector<1x128xf32>
    %c13 = arith.constant 13 : index
    %c0_44 = arith.constant 0 : index
    %c0_45 = arith.constant 0 : index
    %146 = vector.load %arg3[%c13, %c0_44, %c0_45] : memref<16x32x32xf32, #tpu.memory_space<vmem>>, vector<1x32x32xf32>
    %147 = vector.shape_cast %146 : vector<1x32x32xf32> to vector<32x32xf32>
    %cst_46 = arith.constant dense<0.000000e+00> : vector<32x128xf32>
    %148 = tpu.matmul %147, %143, %cst_46 {dimension_numbers = #tpu.dot_dimension_numbers<[1], [0], [0], [1], [0, 0, 1, 1], [], []>} : vector<32x32xf32>, vector<32x128xf32>, vector<32x128xf32> -> vector<32x128xf32>
    %149 = vector.broadcast %144 : vector<1x128xf32> to vector<32x128xf32>
    %150 = arith.mulf %149, %143 : vector<32x128xf32>
    %151 = vector.broadcast %145 : vector<1x128xf32> to vector<32x128xf32>
    %152 = arith.mulf %151, %148 : vector<32x128xf32>
    %153 = arith.addf %150, %152 : vector<32x128xf32>
    %154 = vector.extract_strided_slice %5 {offsets = [14, 0], sizes = [1, 128], strides = [1, 1]} : vector<16x128xf32> to vector<1x128xf32>
    %155 = vector.extract_strided_slice %6 {offsets = [14, 0], sizes = [1, 128], strides = [1, 1]} : vector<16x128xf32> to vector<1x128xf32>
    %c14 = arith.constant 14 : index
    %c0_47 = arith.constant 0 : index
    %c0_48 = arith.constant 0 : index
    %156 = vector.load %arg3[%c14, %c0_47, %c0_48] : memref<16x32x32xf32, #tpu.memory_space<vmem>>, vector<1x32x32xf32>
    %157 = vector.shape_cast %156 : vector<1x32x32xf32> to vector<32x32xf32>
    %cst_49 = arith.constant dense<0.000000e+00> : vector<32x128xf32>
    %158 = tpu.matmul %157, %153, %cst_49 {dimension_numbers = #tpu.dot_dimension_numbers<[1], [0], [0], [1], [0, 0, 1, 1], [], []>} : vector<32x32xf32>, vector<32x128xf32>, vector<32x128xf32> -> vector<32x128xf32>
    %159 = vector.broadcast %154 : vector<1x128xf32> to vector<32x128xf32>
    %160 = arith.mulf %159, %153 : vector<32x128xf32>
    %161 = vector.broadcast %155 : vector<1x128xf32> to vector<32x128xf32>
    %162 = arith.mulf %161, %158 : vector<32x128xf32>
    %163 = arith.addf %160, %162 : vector<32x128xf32>
    %164 = vector.extract_strided_slice %5 {offsets = [15, 0], sizes = [1, 128], strides = [1, 1]} : vector<16x128xf32> to vector<1x128xf32>
    %165 = vector.extract_strided_slice %6 {offsets = [15, 0], sizes = [1, 128], strides = [1, 1]} : vector<16x128xf32> to vector<1x128xf32>
    %c15 = arith.constant 15 : index
    %c0_50 = arith.constant 0 : index
    %c0_51 = arith.constant 0 : index
    %166 = vector.load %arg3[%c15, %c0_50, %c0_51] : memref<16x32x32xf32, #tpu.memory_space<vmem>>, vector<1x32x32xf32>
    %167 = vector.shape_cast %166 : vector<1x32x32xf32> to vector<32x32xf32>
    %cst_52 = arith.constant dense<0.000000e+00> : vector<32x128xf32>
    %168 = tpu.matmul %167, %163, %cst_52 {dimension_numbers = #tpu.dot_dimension_numbers<[1], [0], [0], [1], [0, 0, 1, 1], [], []>} : vector<32x32xf32>, vector<32x128xf32>, vector<32x128xf32> -> vector<32x128xf32>
    %169 = vector.broadcast %164 : vector<1x128xf32> to vector<32x128xf32>
    %170 = arith.mulf %169, %163 : vector<32x128xf32>
    %171 = vector.broadcast %165 : vector<1x128xf32> to vector<32x128xf32>
    %172 = arith.mulf %171, %168 : vector<32x128xf32>
    %173 = arith.addf %170, %172 : vector<32x128xf32>
    %c0_53 = arith.constant 0 : index
    %c0_54 = arith.constant 0 : index
    %174 = vector.load %arg4[%c0_53, %c0_54] : memref<32x32xf32, #tpu.memory_space<vmem>>, vector<32x32xf32>
    %cst_55 = arith.constant dense<0.000000e+00> : vector<32x128xf32>
    %175 = tpu.matmul %174, %173, %cst_55 {dimension_numbers = #tpu.dot_dimension_numbers<[1], [0], [0], [1], [0, 0, 1, 1], [], []>} : vector<32x32xf32>, vector<32x128xf32>, vector<32x128xf32> -> vector<32x128xf32>
    %176 = vector.extract_strided_slice %175 {offsets = [0, 0], sizes = [16, 128], strides = [1, 1]} : vector<32x128xf32> to vector<16x128xf32>
    %177 = vector.extract_strided_slice %175 {offsets = [16, 0], sizes = [16, 128], strides = [1, 1]} : vector<32x128xf32> to vector<16x128xf32>
    %178 = arith.mulf %176, %176 : vector<16x128xf32>
    %179 = arith.mulf %177, %177 : vector<16x128xf32>
    %180 = arith.addf %178, %179 : vector<16x128xf32>
    %181 = tpu.iota {dimensions = array<i32: 0>} : vector<16x1xi32>
    %c8_i32 = arith.constant 8 : i32
    %182 = vector.broadcast %c8_i32 : i32 to vector<16x1xi32>
    %183 = arith.andi %181, %182 : vector<16x1xi32>
    %c0_i32_56 = arith.constant 0 : i32
    %184 = vector.broadcast %c0_i32_56 : i32 to vector<16x1xi32>
    %185 = arith.cmpi ne, %183, %184 : vector<16x1xi32>
    %cst_57 = arith.constant -1.000000e+00 : f32
    %cst_58 = arith.constant 1.000000e+00 : f32
    %186 = vector.broadcast %cst_57 : f32 to vector<16x1xf32>
    %187 = vector.broadcast %cst_58 : f32 to vector<16x1xf32>
    %188 = arith.select %185, %186, %187 : vector<16x1xi1>, vector<16x1xf32>
    %c4_i32 = arith.constant 4 : i32
    %189 = vector.broadcast %c4_i32 : i32 to vector<16x1xi32>
    %190 = arith.andi %181, %189 : vector<16x1xi32>
    %c0_i32_59 = arith.constant 0 : i32
    %191 = vector.broadcast %c0_i32_59 : i32 to vector<16x1xi32>
    %192 = arith.cmpi ne, %190, %191 : vector<16x1xi32>
    %cst_60 = arith.constant -1.000000e+00 : f32
    %cst_61 = arith.constant 1.000000e+00 : f32
    %193 = vector.broadcast %cst_60 : f32 to vector<16x1xf32>
    %194 = vector.broadcast %cst_61 : f32 to vector<16x1xf32>
    %195 = arith.select %192, %193, %194 : vector<16x1xi1>, vector<16x1xf32>
    %196 = arith.addf %188, %195 : vector<16x1xf32>
    %c2_i32 = arith.constant 2 : i32
    %197 = vector.broadcast %c2_i32 : i32 to vector<16x1xi32>
    %198 = arith.andi %181, %197 : vector<16x1xi32>
    %c0_i32_62 = arith.constant 0 : i32
    %199 = vector.broadcast %c0_i32_62 : i32 to vector<16x1xi32>
    %200 = arith.cmpi ne, %198, %199 : vector<16x1xi32>
    %cst_63 = arith.constant -1.000000e+00 : f32
    %cst_64 = arith.constant 1.000000e+00 : f32
    %201 = vector.broadcast %cst_63 : f32 to vector<16x1xf32>
    %202 = vector.broadcast %cst_64 : f32 to vector<16x1xf32>
    %203 = arith.select %200, %201, %202 : vector<16x1xi1>, vector<16x1xf32>
    %c1_i32 = arith.constant 1 : i32
    %204 = vector.broadcast %c1_i32 : i32 to vector<16x1xi32>
    %205 = arith.andi %181, %204 : vector<16x1xi32>
    %c0_i32_65 = arith.constant 0 : i32
    %206 = vector.broadcast %c0_i32_65 : i32 to vector<16x1xi32>
    %207 = arith.cmpi ne, %205, %206 : vector<16x1xi32>
    %cst_66 = arith.constant -1.000000e+00 : f32
    %cst_67 = arith.constant 1.000000e+00 : f32
    %208 = vector.broadcast %cst_66 : f32 to vector<16x1xf32>
    %209 = vector.broadcast %cst_67 : f32 to vector<16x1xf32>
    %210 = arith.select %207, %208, %209 : vector<16x1xi1>, vector<16x1xf32>
    %211 = arith.addf %203, %210 : vector<16x1xf32>
    %212 = vector.broadcast %196 : vector<16x1xf32> to vector<16x128xf32>
    %213 = arith.mulf %180, %212 : vector<16x128xf32>
    %cst_68 = arith.constant dense<0.000000e+00> : vector<128xf32>
    %214 = vector.multi_reduction <add>, %213, %cst_68 [0] : vector<16x128xf32> to vector<128xf32>
    %215 = vector.shape_cast %214 : vector<128xf32> to vector<1x128xf32>
    %216 = vector.broadcast %211 : vector<16x1xf32> to vector<16x128xf32>
    %217 = arith.mulf %180, %216 : vector<16x128xf32>
    %cst_69 = arith.constant dense<0.000000e+00> : vector<128xf32>
    %218 = vector.multi_reduction <add>, %217, %cst_69 [0] : vector<16x128xf32> to vector<128xf32>
    %219 = vector.shape_cast %218 : vector<128xf32> to vector<1x128xf32>
    %220 = arith.maximumf %215, %219 : vector<1x128xf32>
    %221 = arith.subf %215, %220 : vector<1x128xf32>
    %222 = math.exp %221 : vector<1x128xf32>
    %223 = arith.subf %219, %220 : vector<1x128xf32>
    %224 = math.exp %223 : vector<1x128xf32>
    %225 = arith.addf %222, %224 : vector<1x128xf32>
    %226 = math.log %225 : vector<1x128xf32>
    %227 = arith.addf %226, %220 : vector<1x128xf32>
    %228 = tpu.concatenate %215, %219 in 0 : vector<1x128xf32>, vector<1x128xf32> -> vector<2x128xf32>
    %229 = vector.broadcast %227 : vector<1x128xf32> to vector<2x128xf32>
    %230 = arith.subf %228, %229 : vector<2x128xf32>
    %c0_70 = arith.constant 0 : index
    %c0_71 = arith.constant 0 : index
    %231 = vector.load %arg5[%c0_70, %c0_71] : memref<2x128xf32, #tpu.memory_space<vmem>>, vector<2x128xf32>
    tpu.vector_store %arg5[%c0_70, %c0_71], %230 {strides = array<i32>} : memref<2x128xf32, #tpu.memory_space<vmem>>, vector<2x128xf32>,
    return
  }
  func.func @transform_0(%arg0: i32) -> (i32, i32) {
    %c0_i32 = arith.constant 0 : i32
    %c0_i32_0 = arith.constant 0 : i32
    return %arg0, %c0_i32 : i32, i32
  }
  func.func @transform_1(%arg0: i32) -> (i32, i32) {
    %c0_i32 = arith.constant 0 : i32
    %c0_i32_0 = arith.constant 0 : i32
    %c0_i32_1 = arith.constant 0 : i32
    return %c0_i32, %c0_i32_0 : i32, i32
  }
  func.func @transform_2(%arg0: i32) -> (i32, i32, i32) {
    %c0_i32 = arith.constant 0 : i32
    %c0_i32_0 = arith.constant 0 : i32
    %c0_i32_1 = arith.constant 0 : i32
    %c0_i32_2 = arith.constant 0 : i32
    return %c0_i32, %c0_i32_0, %c0_i32_1 : i32, i32, i32
  }
  func.func @transform_3(%arg0: i32) -> (i32, i32) {
    %c0_i32 = arith.constant 0 : i32
    %c0_i32_0 = arith.constant 0 : i32
    %c0_i32_1 = arith.constant 0 : i32
    return %c0_i32, %c0_i32_0 : i32, i32
  }
  func.func @transform_4(%arg0: i32) -> (i32, i32) {
    %c0_i32 = arith.constant 0 : i32
    %c0_i32_0 = arith.constant 0 : i32
    return %c0_i32, %arg0 : i32, i32
  }
}

</mosaic_0001>

<llo_original>
// kernel: qfc_forward.1
$region0: #{qfc_forward.1}
  #allocation0 [shape = 'u32[]', space=smem, size = 0x4, offset = 0x4, fixed_abs, tag = 'smem constant byte address 0x4 - core index']
  #allocation1 [shape = 'u32[144,128]{1,0:T(1,128)}', space=vmem, size = 0x12000, scoped, tag = 'internal scratch']
  %s0 = inlined_call_operand.vmem [shape: f32[128,576], index: 0, kind: input, shape index: {}]
  %s1 = inlined_call_operand.vmem [shape: f32[16,576], index: 1, kind: input, shape index: {}]
  %s2 = inlined_call_operand.vmem [shape: f32[16,32,32], index: 2, kind: input, shape index: {}]
  %s3 = inlined_call_operand.vmem [shape: f32[32,32], index: 3, kind: input, shape index: {}]
  %s4 = inlined_call_operand.vmem [shape: f32[2,128], index: 4, kind: output, shape index: {}]
  %s5 = sld [smem:[#allocation0]]
  $region26: #{qfc_forward.1} parent=0
    _
  %s7 = ssub.s32 1, %s5
  %s8 = scalar_select 0, %s7, %s5
  // Predicated region
  $region2: #{qfc_forward.1} parent=0 // pred_check
    _
  $region3: #{qfc_forward.1} parent=0 // pred_check_branch
    %10 = sbr.rel (0) target = $region5
  $region4: #{qfc_forward.1} parent=0 // pred_region
    _
  $region5: #{qfc_forward.1} parent=0 // pred_fallthru
    _
  // Predicated region
  $region6: #{qfc_forward.1} parent=0 // pred_check
    _
  $region7: #{qfc_forward.1} parent=0 // pred_check_branch
    %12 = sbr.rel (0) target = $region9
  $region8: #{qfc_forward.1} parent=0 // pred_region
    _
  $region9: #{qfc_forward.1} parent=0 // pred_fallthru
    _
  // Predicated region
  $region10: #{qfc_forward.1} parent=0 // pred_check
    _
  $region11: #{qfc_forward.1} parent=0 // pred_check_branch
    %14 = sbr.rel (0) target = $region13
  $region12: #{qfc_forward.1} parent=0 // pred_region
    _
  $region13: #{qfc_forward.1} parent=0 // pred_fallthru
    _
  // Predicated region
  $region14: #{qfc_forward.1} parent=0 // pred_check
    _
  $region15: #{qfc_forward.1} parent=0 // pred_check_branch
    %16 = sbr.rel (0) target = $region17
  $region16: #{qfc_forward.1} parent=0 // pred_region
    _
  $region17: #{qfc_forward.1} parent=0 // pred_fallthru
    _
  %v17 = vld [vmem:[%s1] sm:$0xff]
  %v18 = vld [vmem:[%s1 + $0x8] sm:$0xff]
  %v19 = vld [vmem:[%s1 + $0x10] sm:$0xff]
  %v20 = vld [vmem:[%s1 + $0x18] sm:$0xff]
  %v21 = vld [vmem:[%s1 + $0x20] sm:$0xff]
  %v22 = vld [vmem:[%s1 + $0x28] sm:$0xff]
  %v23 = vld [vmem:[%s1 + $0x30] sm:$0xff]
  %v24 = vld [vmem:[%s1 + $0x38] sm:$0xff]
  %v25 = vld [vmem:[%s1 + $0x40] sm:$0xff]
  %v26 = vld [vmem:[%s1 + $0x48] sm:$0xff]
  %v27 = vld [vmem:[%s0] sm:$0xff]
  %v28 = vld [vmem:[%s0 + $0x8] sm:$0xff]
  %v29 = vld [vmem:[%s0 + $0x10] sm:$0xff]
  %v30 = vld [vmem:[%s0 + $0x18] sm:$0xff]
  %v31 = vld [vmem:[%s0 + $0x20] sm:$0xff]
  %v32 = vld [vmem:[%s0 + $0x28] sm:$0xff]
  %v33 = vld [vmem:[%s0 + $0x30] sm:$0xff]
  %v34 = vld [vmem:[%s0 + $0x38] sm:$0xff]
  %v35 = vld [vmem:[%s0 + $0x40] sm:$0xff]
  %v36 = vld [vmem:[%s0 + $0x48] sm:$0xff]
  %v37 = vld [vmem:[%s0 + $0x50] sm:$0xff]
  %v38 = vld [vmem:[%s0 + $0x58] sm:$0xff]
  %v39 = vld [vmem:[%s0 + $0x60] sm:$0xff]
  %v40 = vld [vmem:[%s0 + $0x68] sm:$0xff]
  %v41 = vld [vmem:[%s0 + $0x70] sm:$0xff]
  %v42 = vld [vmem:[%s0 + $0x78] sm:$0xff]
  %v43 = vld [vmem:[%s0 + $0x80] sm:$0xff]
  %v44 = vld [vmem:[%s0 + $0x88] sm:$0xff]
  %v45 = vld [vmem:[%s0 + $0x90] sm:$0xff]
  %v46 = vld [vmem:[%s0 + $0x98] sm:$0xff]
  %v47 = vld [vmem:[%s0 + $0xa0] sm:$0xff]
  %v48 = vld [vmem:[%s0 + $0xa8] sm:$0xff]
  %v49 = vld [vmem:[%s0 + $0xb0] sm:$0xff]
  %v50 = vld [vmem:[%s0 + $0xb8] sm:$0xff]
  %v51 = vld [vmem:[%s0 + $0xc0] sm:$0xff]
  %v52 = vld [vmem:[%s0 + $0xc8] sm:$0xff]
  %v53 = vld [vmem:[%s0 + $0xd0] sm:$0xff]
  %v54 = vld [vmem:[%s0 + $0xd8] sm:$0xff]
  %v55 = vld [vmem:[%s0 + $0xe0] sm:$0xff]
  %v56 = vld [vmem:[%s0 + $0xe8] sm:$0xff]
  %v57 = vld [vmem:[%s0 + $0xf0] sm:$0xff]
  %v58 = vld [vmem:[%s0 + $0xf8] sm:$0xff]
  %v59 = vld [vmem:[%s0 + $0x100] sm:$0xff]
  %v60 = vld [vmem:[%s0 + $0x108] sm:$0xff]
  %v61 = vld [vmem:[%s0 + $0x110] sm:$0xff]
  %v62 = vld [vmem:[%s0 + $0x118] sm:$0xff]
  %v63 = vld [vmem:[%s0 + $0x120] sm:$0xff]
  %v64 = vld [vmem:[%s0 + $0x128] sm:$0xff]
  %v65 = vld [vmem:[%s0 + $0x130] sm:$0xff]
  %v66 = vld [vmem:[%s0 + $0x138] sm:$0xff]
  %v67 = vld [vmem:[%s0 + $0x140] sm:$0xff]
  %v68 = vld [vmem:[%s0 + $0x148] sm:$0xff]
  %v69 = vld [vmem:[%s0 + $0x150] sm:$0xff]
  %v70 = vld [vmem:[%s0 + $0x158] sm:$0xff]
  %v71 = vld [vmem:[%s0 + $0x160] sm:$0xff]
  %v72 = vld [vmem:[%s0 + $0x168] sm:$0xff]
  %v73 = vld [vmem:[%s0 + $0x170] sm:$0xff]
  %v74 = vld [vmem:[%s0 + $0x178] sm:$0xff]
  %v75 = vld [vmem:[%s0 + $0x180] sm:$0xff]
  %v76 = vld [vmem:[%s0 + $0x188] sm:$0xff]
  %v77 = vld [vmem:[%s0 + $0x190] sm:$0xff]
  %v78 = vld [vmem:[%s0 + $0x198] sm:$0xff]
  %v79 = vld [vmem:[%s0 + $0x1a0] sm:$0xff]
  %v80 = vld [vmem:[%s0 + $0x1a8] sm:$0xff]
  %v81 = vld [vmem:[%s0 + $0x1b0] sm:$0xff]
  %v82 = vld [vmem:[%s0 + $0x1b8] sm:$0xff]
  %v83 = vld [vmem:[%s0 + $0x1c0] sm:$0xff]
  %v84 = vld [vmem:[%s0 + $0x1c8] sm:$0xff]
  %v85 = vld [vmem:[%s0 + $0x1d0] sm:$0xff]
  %v86 = vld [vmem:[%s0 + $0x1d8] sm:$0xff]
  %v87 = vld [vmem:[%s0 + $0x1e0] sm:$0xff]
  %v88 = vld [vmem:[%s0 + $0x1e8] sm:$0xff]
  %v89 = vld [vmem:[%s0 + $0x1f0] sm:$0xff]
  %v90 = vld [vmem:[%s0 + $0x1f8] sm:$0xff]
  %v91 = vld [vmem:[%s0 + $0x200] sm:$0xff]
  %v92 = vld [vmem:[%s0 + $0x208] sm:$0xff]
  %v93 = vld [vmem:[%s0 + $0x210] sm:$0xff]
  %v94 = vld [vmem:[%s0 + $0x218] sm:$0xff]
  %v95 = vld [vmem:[%s0 + $0x220] sm:$0xff]
  %v96 = vld [vmem:[%s0 + $0x228] sm:$0xff]
  %v97 = vld [vmem:[%s0 + $0x230] sm:$0xff]
  %v98 = vld [vmem:[%s0 + $0x238] sm:$0xff]
  %v99 = vld [vmem:[%s0 + $0x240] sm:$0xff]
  %v100 = vld [vmem:[%s0 + $0x248] sm:$0xff]
  %v101 = vld [vmem:[%s0 + $0x250] sm:$0xff]
  %v102 = vld [vmem:[%s0 + $0x258] sm:$0xff]
  %v103 = vld [vmem:[%s0 + $0x260] sm:$0xff]
  %v104 = vld [vmem:[%s0 + $0x268] sm:$0xff]
  %v105 = vld [vmem:[%s0 + $0x270] sm:$0xff]
  %v106 = vld [vmem:[%s0 + $0x278] sm:$0xff]
  %vm107 = vcmask 523264
  %v109 = vsel %vm107, %v21, 0
  %v112 = vsel %vm107, %v26, 0
  %v115 = vsel %vm107, %v31, 0
  %v118 = vsel %vm107, %v36, 0
  %v121 = vsel %vm107, %v41, 0
  %v124 = vsel %vm107, %v46, 0
  %v127 = vsel %vm107, %v51, 0
  %v130 = vsel %vm107, %v56, 0
  %v133 = vsel %vm107, %v61, 0
  %v136 = vsel %vm107, %v66, 0
  %v139 = vsel %vm107, %v71, 0
  %v142 = vsel %vm107, %v76, 0
  %v145 = vsel %vm107, %v81, 0
  %v148 = vsel %vm107, %v86, 0
  %v151 = vsel %vm107, %v91, 0
  %v154 = vsel %vm107, %v96, 0
  %v157 = vsel %vm107, %v101, 0
  %v160 = vsel %vm107, %v106, 0
  %162 = vmatprep.subr.mxu0 %v28
  %163 = vmatpush1.xpose.msra.mxu0 %v27
  %164 = vmatprep.subr.mxu0 %v33
  %165 = vmatpush1.xpose.msra.mxu0 %v32
  %166 = vmatprep.subr.mxu0 %v38
  %167 = vmatpush1.xpose.msra.mxu0 %v37
  %168 = vmatprep.subr.mxu0 %v43
  %169 = vmatpush1.xpose.msra.mxu0 %v42
  %170 = vmatprep.subr.mxu0 %v48
  %171 = vmatpush1.xpose.msra.mxu0 %v47
  %172 = vmatprep.subr.mxu0 %v53
  %173 = vmatpush1.xpose.msra.mxu0 %v52
  %174 = vmatprep.subr.mxu0 %v58
  %175 = vmatpush1.xpose.msra.mxu0 %v57
  %176 = vmatprep.subr.mxu0 %v63
  %177 = vmatpush1.xpose.msra.mxu0 %v62
  %178 = vmatprep.subr.mxu0 %v68
  %179 = vmatpush1.xpose.msra.mxu0 %v67
  %180 = vmatprep.subr.mxu0 %v73
  %181 = vmatpush1.xpose.msra.mxu0 %v72
  %182 = vmatprep.subr.mxu0 %v78
  %183 = vmatpush1.xpose.msra.mxu0 %v77
  %184 = vmatprep.subr.mxu0 %v83
  %185 = vmatpush1.xpose.msra.mxu0 %v82
  %186 = vmatprep.subr.mxu0 %v88
  %187 = vmatpush1.xpose.msra.mxu0 %v87
  %188 = vmatprep.subr.mxu0 %v93
  %189 = vmatpush1.xpose.msra.mxu0 %v92
  %190 = vmatprep.subr.mxu0 %v98
  %191 = vmatpush1.xpose.msra.mxu0 %v97
  %192 = vmatprep.subr.mxu0 %v103
  %193 = vmatpush1.xpose.msra.mxu0 %v102
  %194 = vmatprep.subr.mxu0 0.0
  %195 = vmatpush1.xpose.msra.mxu0 0.0
  %196 = vmatprep.subr.mxu0 0.0
  %197 = vmatpush1.xpose.msra.mxu0 0.0
  %198 = vmatprep.subr.mxu0 0.0
  %199 = vmatpush1.xpose.msra.mxu0 0.0
  %200 = vmatprep.subr.mxu0 0.0
  %201 = vmatpush1.xpose.msra.mxu0 0.0
  %202 = vmatprep.subr.mxu0 0.0
  %203 = vmatpush1.xpose.msra.mxu0 0.0
  %204 = vmatprep.subr.mxu0 0.0
  %205 = vmatpush1.xpose.msra.mxu0 0.0
  %206 = vmatprep.subr.mxu0 0.0
  %207 = vmatpush1.xpose.msra.mxu0 0.0
  %208 = vmatprep.subr.mxu0 0.0
  %209 = vmatpush1.xpose.msra.mxu0 0.0
  %210 = vmatprep.subr.mxu0 0.0
  %211 = vmatpush1.xpose.msra.mxu0 0.0
  %212 = vmatprep.subr.mxu0 0.0
  %213 = vmatpush1.xpose.msra.mxu0 0.0
  %214 = vmatprep.subr.mxu0 0.0
  %215 = vmatpush1.xpose.msra.mxu0 0.0
  %216 = vmatprep.subr.mxu0 0.0
  %217 = vmatpush1.xpose.msra.mxu0 0.0
  %218 = vmatprep.subr.mxu0 0.0
  %219 = vmatpush1.xpose.msra.mxu0 0.0
  %220 = vmatprep.subr.mxu0 0.0
  %221 = vmatpush1.xpose.msra.mxu0 0.0
  %222 = vmatprep.subr.mxu0 0.0
  %223 = vmatpush1.xpose.msra.mxu0 0.0
  %224 = vmatprep.subr.mxu0 0.0
  %225 = vmatpush1.xpose.msra.mxu0 0.0
  %226 = vmatprep.mubr.f32.mxu0 %v18
  %227 = vmatmul.mubr.f32.gmra.mrb[0].mxu0 %v17
  %v228 = vpop.f32.mrb[0].mxu0
  %v229 = vadd.f32 0.0, %v228
  %v230 = vpop.f32.mrb[0].mxu0
  %231 = vmatprep.mubr.f32.mxu0 %v23
  %232 = vmatmul.mubr.f32.gmra.mrb[0].mxu0 %v22
  %v233 = vpop.f32.mrb[0].mxu0
  %v234 = vadd.f32 0.0, %v233
  %v235 = vpop.f32.mrb[0].mxu0
  %236 = vdwg.mxu0
  %237 = vmatprep.subr.mxu0 %v30
  %238 = vmatpush1.xpose.msra.mxu0 %v29
  %239 = vmatprep.subr.mxu0 %v35
  %240 = vmatpush1.xpose.msra.mxu0 %v34
  %241 = vmatprep.subr.mxu0 %v40
  %242 = vmatpush1.xpose.msra.mxu0 %v39
  %243 = vmatprep.subr.mxu0 %v45
  %244 = vmatpush1.xpose.msra.mxu0 %v44
  %245 = vmatprep.subr.mxu0 %v50
  %246 = vmatpush1.xpose.msra.mxu0 %v49
  %247 = vmatprep.subr.mxu0 %v55
  %248 = vmatpush1.xpose.msra.mxu0 %v54
  %249 = vmatprep.subr.mxu0 %v60
  %250 = vmatpush1.xpose.msra.mxu0 %v59
  %251 = vmatprep.subr.mxu0 %v65
  %252 = vmatpush1.xpose.msra.mxu0 %v64
  %253 = vmatprep.subr.mxu0 %v70
  %254 = vmatpush1.xpose.msra.mxu0 %v69
  %255 = vmatprep.subr.mxu0 %v75
  %256 = vmatpush1.xpose.msra.mxu0 %v74
  %257 = vmatprep.subr.mxu0 %v80
  %258 = vmatpush1.xpose.msra.mxu0 %v79
  %259 = vmatprep.subr.mxu0 %v85
  %260 = vmatpush1.xpose.msra.mxu0 %v84
  %261 = vmatprep.subr.mxu0 %v90
  %262 = vmatpush1.xpose.msra.mxu0 %v89
  %263 = vmatprep.subr.mxu0 %v95
  %264 = vmatpush1.xpose.msra.mxu0 %v94
  %265 = vmatprep.subr.mxu0 %v100
  %266 = vmatpush1.xpose.msra.mxu0 %v99
  %267 = vmatprep.subr.mxu0 %v105
  %268 = vmatpush1.xpose.msra.mxu0 %v104
  %269 = vmatprep.subr.mxu0 0.0
  %270 = vmatpush1.xpose.msra.mxu0 0.0
  %271 = vmatprep.subr.mxu0 0.0
  %272 = vmatpush1.xpose.msra.mxu0 0.0
  %273 = vmatprep.subr.mxu0 0.0
  %274 = vmatpush1.xpose.msra.mxu0 0.0
  %275 = vmatprep.subr.mxu0 0.0
  %276 = vmatpush1.xpose.msra.mxu0 0.0
  %277 = vmatprep.subr.mxu0 0.0
  %278 = vmatpush1.xpose.msra.mxu0 0.0
  %279 = vmatprep.subr.mxu0 0.0
  %280 = vmatpush1.xpose.msra.mxu0 0.0
  %281 = vmatprep.subr.mxu0 0.0
  %282 = vmatpush1.xpose.msra.mxu0 0.0
  %283 = vmatprep.subr.mxu0 0.0
  %284 = vmatpush1.xpose.msra.mxu0 0.0
  %285 = vmatprep.subr.mxu0 0.0
  %286 = vmatpush1.xpose.msra.mxu0 0.0
  %287 = vmatprep.subr.mxu0 0.0
  %288 = vmatpush1.xpose.msra.mxu0 0.0
  %289 = vmatprep.subr.mxu0 0.0
  %290 = vmatpush1.xpose.msra.mxu0 0.0
  %291 = vmatprep.subr.mxu0 0.0
  %292 = vmatpush1.xpose.msra.mxu0 0.0
  %293 = vmatprep.subr.mxu0 0.0
  %294 = vmatpush1.xpose.msra.mxu0 0.0
  %295 = vmatprep.subr.mxu0 0.0
  %296 = vmatpush1.xpose.msra.mxu0 0.0
  %297 = vmatprep.subr.mxu0 0.0
  %298 = vmatpush1.xpose.msra.mxu0 0.0
  %299 = vmatprep.subr.mxu0 0.0
  %300 = vmatpush1.xpose.msra.mxu0 0.0
  %301 = vmatprep.mubr.f32.mxu0 %v20
  %302 = vmatmul.mubr.f32.gmra.mrb[0].mxu0 %v19
  %v303 = vpop.f32.mrb[0].mxu0
  %v304 = vadd.f32 %v229, %v303
  %v305 = vpop.f32.mrb[0].mxu0
  %306 = vmatprep.mubr.f32.mxu0 %v25
  %307 = vmatmul.mubr.f32.gmra.mrb[0].mxu0 %v24
  %v308 = vpop.f32.mrb[0].mxu0
  %v309 = vadd.f32 %v234, %v308
  %v310 = vpop.f32.mrb[0].mxu0
  %311 = vdwg.mxu0
  %312 = vmatprep.subr.mxu0 0.0
  %313 = vmatpush1.xpose.msra.mxu0 %v115
  %314 = vmatprep.subr.mxu0 0.0
  %315 = vmatpush1.xpose.msra.mxu0 %v118
  %316 = vmatprep.subr.mxu0 0.0
  %317 = vmatpush1.xpose.msra.mxu0 %v121
  %318 = vmatprep.subr.mxu0 0.0
  %319 = vmatpush1.xpose.msra.mxu0 %v124
  %320 = vmatprep.subr.mxu0 0.0
  %321 = vmatpush1.xpose.msra.mxu0 %v127
  %322 = vmatprep.subr.mxu0 0.0
  %323 = vmatpush1.xpose.msra.mxu0 %v130
  %324 = vmatprep.subr.mxu0 0.0
  %325 = vmatpush1.xpose.msra.mxu0 %v133
  %326 = vmatprep.subr.mxu0 0.0
  %327 = vmatpush1.xpose.msra.mxu0 %v136
  %328 = vmatprep.subr.mxu0 0.0
  %329 = vmatpush1.xpose.msra.mxu0 %v139
  %330 = vmatprep.subr.mxu0 0.0
  %331 = vmatpush1.xpose.msra.mxu0 %v142
  %332 = vmatprep.subr.mxu0 0.0
  %333 = vmatpush1.xpose.msra.mxu0 %v145
  %334 = vmatprep.subr.mxu0 0.0
  %335 = vmatpush1.xpose.msra.mxu0 %v148
  %336 = vmatprep.subr.mxu0 0.0
  %337 = vmatpush1.xpose.msra.mxu0 %v151
  %338 = vmatprep.subr.mxu0 0.0
  %339 = vmatpush1.xpose.msra.mxu0 %v154
  %340 = vmatprep.subr.mxu0 0.0
  %341 = vmatpush1.xpose.msra.mxu0 %v157
  %342 = vmatprep.subr.mxu0 0.0
  %343 = vmatpush1.xpose.msra.mxu0 %v160
  %344 = vmatprep.subr.mxu0 0.0
  %345 = vmatpush1.xpose.msra.mxu0 0.0
  %346 = vmatprep.subr.mxu0 0.0
  %347 = vmatpush1.xpose.msra.mxu0 0.0
  %348 = vmatprep.subr.mxu0 0.0
  %349 = vmatpush1.xpose.msra.mxu0 0.0
  %350 = vmatprep.subr.mxu0 0.0
  %351 = vmatpush1.xpose.msra.mxu0 0.0
  %352 = vmatprep.subr.mxu0 0.0
  %353 = vmatpush1.xpose.msra.mxu0 0.0
  %354 = vmatprep.subr.mxu0 0.0
  %355 = vmatpush1.xpose.msra.mxu0 0.0
  %356 = vmatprep.subr.mxu0 0.0
  %357 = vmatpush1.xpose.msra.mxu0 0.0
  %358 = vmatprep.subr.mxu0 0.0
  %359 = vmatpush1.xpose.msra.mxu0 0.0
  %360 = vmatprep.subr.mxu0 0.0
  %361 = vmatpush1.xpose.msra.mxu0 0.0
  %362 = vmatprep.subr.mxu0 0.0
  %363 = vmatpush1.xpose.msra.mxu0 0.0
  %364 = vmatprep.subr.mxu0 0.0
  %365 = vmatpush1.xpose.msra.mxu0 0.0
  %366 = vmatprep.subr.mxu0 0.0
  %367 = vmatpush1.xpose.msra.mxu0 0.0
  %368 = vmatprep.subr.mxu0 0.0
  %369 = vmatpush1.xpose.msra.mxu0 0.0
  %370 = vmatprep.subr.mxu0 0.0
  %371 = vmatpush1.xpose.msra.mxu0 0.0
  %372 = vmatprep.subr.mxu0 0.0
  %373 = vmatpush1.xpose.msra.mxu0 0.0
  %374 = vmatprep.subr.mxu0 0.0
  %375 = vmatpush1.xpose.msra.mxu0 0.0
  %376 = vmatprep.mubr.f32.mxu0 0.0
  %377 = vmatmul.mubr.f32.gmra.mrb[0].mxu0 %v109
  %v378 = vpop.f32.mrb[0].mxu0
  %v379 = vadd.f32 %v304, %v378
  %v380 = vpop.f32.mrb[0].mxu0
  %381 = vmatprep.mubr.f32.mxu0 0.0
  %382 = vmatmul.mubr.f32.gmra.mrb[0].mxu0 %v112
  %v383 = vpop.f32.mrb[0].mxu0
  %v384 = vadd.f32 %v309, %v383
  %v385 = vpop.f32.mrb[0].mxu0
  %386 = vdwg.mxu0
  %v387 = vmul.f32 %v379, 0.5
  %v388 = vmul.f32 %v384, 0.5
  %v389 = vand.u32 2147483647, %v387
  %vm390 = vcmp.le.f32.partialorder %v389, 0.7853982
  %vm391 = vcmp.lt.s32.totalorder %v387, 0
  %v392 = vand.u32 %v387, 2139095040
  %v393 = vshrl.u32 %v392, 23
  %v394 = vsub.s32 %v393, 127
  %v395 = vand.u32 2147483647, %v387
  %v396 = vand.u32 %v395, 8388607
  %v397 = vor.u32 %v396, 8388608
  %v398 = vsub.s32 0, %v397
  %v399 = vadd.s32 %v394, 1
  %vm400 = vcmp.gt.s32.totalorder %v399, 0
  %v401 = vsel %vm400, %v399, 0
  %v402 = vshrl.u32 %v401, 5
  %v403 = vand.u32 %v401, 31
  %v404 = vsub.s32 32, %v403
  %v405 = vshrl.u32 683565275, %v404
  %v406 = vshll.u32 683565275, %v403
  %v407 = vshrl.u32 2475754826, %v404
  %v408 = vor.u32 %v406, %v407
  %v409 = vshll.u32 2475754826, %v403
  %v410 = vshrl.u32 2131351028, %v404
  %v411 = vor.u32 %v409, %v410
  %v412 = vshll.u32 2131351028, %v403
  %v413 = vshrl.u32 2102212464, %v404
  %v414 = vor.u32 %v412, %v413
  %v415 = vshll.u32 2102212464, %v403
  %v416 = vshrl.u32 920167782, %v404
  %v417 = vor.u32 %v415, %v416
  %v418 = vshll.u32 920167782, %v403
  %v419 = vshrl.u32 1326507024, %v404
  %v420 = vor.u32 %v418, %v419
  %vm421 = vcmp.lt.s32.totalorder %v402, 1
  %vm422 = vcmp.lt.s32.totalorder %v402, 2
  %vm423 = vcmp.lt.s32.totalorder %v402, 3
  %vm424 = vcmp.lt.s32.totalorder %v402, 4
  %v425 = vsel %vm421, %v405, %v408
  %v426 = vsel %vm424, %v414, 2102212464
  %v427 = vsel %vm423, %v411, %v426
  %v428 = vsel %vm422, %v425, %v427
  %v429 = vsel %vm421, %v408, %v411
  %v430 = vsel %vm424, %v417, 920167782
  %v431 = vsel %vm423, %v414, %v430
  %v432 = vsel %vm422, %v429, %v431
  %v433 = vsel %vm421, %v411, %v414
  %v434 = vsel %vm424, %v420, 1326507024
  %v435 = vsel %vm423, %v417, %v434
  %v436 = vsel %vm422, %v433, %v435
  %v437 = vshll.u32 %v397, 8
  %v438 = vmul.u32.u64.compose %v437, %v436
  %v439 = vextract.low.u32 %v438
  %v440 = vextract.high.u32 %v438
  %v441 = vmul.u32.u64.compose %v437, %v432
  %v442 = vextract.low.u32 %v441
  %v443 = vextract.high.u32 %v441
  %v444 = vmul.u32 %v437, %v428
  %v445 = vadd.s32 %v440, %v442
  %vm446 = vc.u32 %v440, %v442
  %v447 = vadd.s32 %v443, 1
  %v448 = vsel %vm446, %v447, %v443
  %v449 = vadd.s32 %v444, %v448
  %v450 = vadd.s32 %v449, 536870912
  %v451 = vshrl.u32 %v450, 30
  %v452 = vshll.u32 %v451, 30
  %v453 = vsub.s32 %v449, %v452
  %vm454 = vcmp.lt.s32.totalorder %v453, 0
  %v455 = vsub.s32 0, %v453
  %v456 = vsel %vm454, %v455, %v453
  %v457 = vclz %v456
  %v458 = vsub.s32 %v457, 2
  %vm459 = vcmp.gt.s32.totalorder 0, %v458
  %v460 = vsel %vm459, 0, %v458
  %v461 = vsub.s32 32, %v460
  %v462 = vshll.u32 %v453, %v460
  %v463 = vshrl.u32 %v445, %v461
  %v464 = vor.u32 %v462, %v463
  %v465 = vsub.s32 4294967266, %v460
  %v466 = vadd.s32 %v465, 127
  %v467 = vshll.u32 %v466, 23
  %v468 = vor.u32 4788187, %v467
  %v469 = vand.u32 2147483647, %v468
  %v471 = vcvt.s32.f32 %v464
  %v472 = vmul.f32 %v471, %v469
  %v473 = vxor.u32 %v472, 2147483648
  %v474 = vsel %vm391, %v473, %v472
  %v475 = vsub.s32 4, %v451
  %v476 = vsel %vm391, %v475, %v451
  %v477 = vsel %vm390, %v387, %v474
  %v478 = vsel %vm390, 0, %v476
  %v479 = vcosq.f32.pop %v477
  %v480 = vsinq.f32.pop %v477
  %vm481 = vweird.f32 %v387
  %v482 = vand.u32 %v478, 3
  %vm483 = vcmp.lt.s32.totalorder %v482, 2
  %vm484 = vcmp.eq.s32.totalorder %v482, 0
  %v485 = vxor.u32 %v480, 2147483648
  %v486 = vsel %vm484, %v479, %v485
  %vm487 = vcmp.eq.s32.totalorder %v482, 2
  %v488 = vxor.u32 %v479, 2147483648
  %v489 = vsel %vm487, %v488, %v480
  %v490 = vsel %vm483, %v486, %v489
  %v491 = vsel %vm481, nan, %v490
  %v492 = vand.u32 2147483647, %v388
  %vm493 = vcmp.le.f32.partialorder %v492, 0.7853982
  %vm494 = vcmp.lt.s32.totalorder %v388, 0
  %v495 = vand.u32 %v388, 2139095040
  %v496 = vshrl.u32 %v495, 23
  %v497 = vsub.s32 %v496, 127
  %v498 = vand.u32 2147483647, %v388
  %v499 = vand.u32 %v498, 8388607
  %v500 = vor.u32 %v499, 8388608
  %v501 = vsub.s32 0, %v500
  %v502 = vadd.s32 %v497, 1
  %vm503 = vcmp.gt.s32.totalorder %v502, 0
  %v504 = vsel %vm503, %v502, 0
  %v505 = vshrl.u32 %v504, 5
  %v506 = vand.u32 %v504, 31
  %v507 = vsub.s32 32, %v506
  %v508 = vshrl.u32 683565275, %v507
  %v509 = vshll.u32 683565275, %v506
  %v510 = vshrl.u32 2475754826, %v507
  %v511 = vor.u32 %v509, %v510
  %v512 = vshll.u32 2475754826, %v506
  %v513 = vshrl.u32 2131351028, %v507
  %v514 = vor.u32 %v512, %v513
  %v515 = vshll.u32 2131351028, %v506
  %v516 = vshrl.u32 2102212464, %v507
  %v517 = vor.u32 %v515, %v516
  %v518 = vshll.u32 2102212464, %v506
  %v519 = vshrl.u32 920167782, %v507
  %v520 = vor.u32 %v518, %v519
  %v521 = vshll.u32 920167782, %v506
  %v522 = vshrl.u32 1326507024, %v507
  %v523 = vor.u32 %v521, %v522
  %vm524 = vcmp.lt.s32.totalorder %v505, 1
  %vm525 = vcmp.lt.s32.totalorder %v505, 2
  %vm526 = vcmp.lt.s32.totalorder %v505, 3
  %vm527 = vcmp.lt.s32.totalorder %v505, 4
  %v528 = vsel %vm524, %v508, %v511
  %v529 = vsel %vm527, %v517, 2102212464
  %v530 = vsel %vm526, %v514, %v529
  %v531 = vsel %vm525, %v528, %v530
  %v532 = vsel %vm524, %v511, %v514
  %v533 = vsel %vm527, %v520, 920167782
  %v534 = vsel %vm526, %v517, %v533
  %v535 = vsel %vm525, %v532, %v534
  %v536 = vsel %vm524, %v514, %v517
  %v537 = vsel %vm527, %v523, 1326507024
  %v538 = vsel %vm526, %v520, %v537
  %v539 = vsel %vm525, %v536, %v538
  %v540 = vshll.u32 %v500, 8
  %v541 = vmul.u32.u64.compose %v540, %v539
  %v542 = vextract.low.u32 %v541
  %v543 = vextract.high.u32 %v541
  %v544 = vmul.u32.u64.compose %v540, %v535
  %v545 = vextract.low.u32 %v544
  %v546 = vextract.high.u32 %v544
  %v547 = vmul.u32 %v540, %v531
  %v548 = vadd.s32 %v543, %v545
  %vm549 = vc.u32 %v543, %v545
  %v550 = vadd.s32 %v546, 1
  %v551 = vsel %vm549, %v550, %v546
  %v552 = vadd.s32 %v547, %v551
  %v553 = vadd.s32 %v552, 536870912
  %v554 = vshrl.u32 %v553, 30
  %v555 = vshll.u32 %v554, 30
  %v556 = vsub.s32 %v552, %v555
  %vm557 = vcmp.lt.s32.totalorder %v556, 0
  %v558 = vsub.s32 0, %v556
  %v559 = vsel %vm557, %v558, %v556
  %v560 = vclz %v559
  %v561 = vsub.s32 %v560, 2
  %vm562 = vcmp.gt.s32.totalorder 0, %v561
  %v563 = vsel %vm562, 0, %v561
  %v564 = vsub.s32 32, %v563
  %v565 = vshll.u32 %v556, %v563
  %v566 = vshrl.u32 %v548, %v564
  %v567 = vor.u32 %v565, %v566
  %v568 = vsub.s32 4294967266, %v563
  %v569 = vadd.s32 %v568, 127
  %v570 = vshll.u32 %v569, 23
  %v571 = vor.u32 4788187, %v570
  %v572 = vand.u32 2147483647, %v571
  %v574 = vcvt.s32.f32 %v567
  %v575 = vmul.f32 %v574, %v572
  %v576 = vxor.u32 %v575, 2147483648
  %v577 = vsel %vm494, %v576, %v575
  %v578 = vsub.s32 4, %v554
  %v579 = vsel %vm494, %v578, %v554
  %v580 = vsel %vm493, %v388, %v577
  %v581 = vsel %vm493, 0, %v579
  %v582 = vcosq.f32.pop %v580
  %v583 = vsinq.f32.pop %v580
  %vm584 = vweird.f32 %v388
  %v585 = vand.u32 %v581, 3
  %vm586 = vcmp.lt.s32.totalorder %v585, 2
  %vm587 = vcmp.eq.s32.totalorder %v585, 0
  %v588 = vxor.u32 %v583, 2147483648
  %v589 = vsel %vm587, %v582, %v588
  %vm590 = vcmp.eq.s32.totalorder %v585, 2
  %v591 = vxor.u32 %v582, 2147483648
  %v592 = vsel %vm590, %v591, %v583
  %v593 = vsel %vm586, %v589, %v592
  %v594 = vsel %vm584, nan, %v593
  %v595 = vand.u32 2147483647, %v387
  %vm596 = vcmp.le.f32.partialorder %v595, 0.7853982
  %vm597 = vcmp.lt.s32.totalorder %v387, 0
  %v598 = vand.u32 %v387, 2139095040
  %v599 = vshrl.u32 %v598, 23
  %v600 = vsub.s32 %v599, 127
  %v601 = vand.u32 2147483647, %v387
  %v602 = vand.u32 %v601, 8388607
  %v603 = vor.u32 %v602, 8388608
  %v604 = vsub.s32 0, %v603
  %v605 = vadd.s32 %v600, 1
  %vm606 = vcmp.gt.s32.totalorder %v605, 0
  %v607 = vsel %vm606, %v605, 0
  %v608 = vshrl.u32 %v607, 5
  %v609 = vand.u32 %v607, 31
  %v610 = vsub.s32 32, %v609
  %v611 = vshrl.u32 683565275, %v610
  %v612 = vshll.u32 683565275, %v609
  %v613 = vshrl.u32 2475754826, %v610
  %v614 = vor.u32 %v612, %v613
  %v615 = vshll.u32 2475754826, %v609
  %v616 = vshrl.u32 2131351028, %v610
  %v617 = vor.u32 %v615, %v616
  %v618 = vshll.u32 2131351028, %v609
  %v619 = vshrl.u32 2102212464, %v610
  %v620 = vor.u32 %v618, %v619
  %v621 = vshll.u32 2102212464, %v609
  %v622 = vshrl.u32 920167782, %v610
  %v623 = vor.u32 %v621, %v622
  %v624 = vshll.u32 920167782, %v609
  %v625 = vshrl.u32 1326507024, %v610
  %v626 = vor.u32 %v624, %v625
  %vm627 = vcmp.lt.s32.totalorder %v608, 1
  %vm628 = vcmp.lt.s32.totalorder %v608, 2
  %vm629 = vcmp.lt.s32.totalorder %v608, 3
  %vm630 = vcmp.lt.s32.totalorder %v608, 4
  %v631 = vsel %vm627, %v611, %v614
  %v632 = vsel %vm630, %v620, 2102212464
  %v633 = vsel %vm629, %v617, %v632
  %v634 = vsel %vm628, %v631, %v633
  %v635 = vsel %vm627, %v614, %v617
  %v636 = vsel %vm630, %v623, 920167782
  %v637 = vsel %vm629, %v620, %v636
  %v638 = vsel %vm628, %v635, %v637
  %v639 = vsel %vm627, %v617, %v620
  %v640 = vsel %vm630, %v626, 1326507024
  %v641 = vsel %vm629, %v623, %v640
  %v642 = vsel %vm628, %v639, %v641
  %v643 = vshll.u32 %v603, 8
  %v644 = vmul.u32.u64.compose %v643, %v642
  %v645 = vextract.low.u32 %v644
  %v646 = vextract.high.u32 %v644
  %v647 = vmul.u32.u64.compose %v643, %v638
  %v648 = vextract.low.u32 %v647
  %v649 = vextract.high.u32 %v647
  %v650 = vmul.u32 %v643, %v634
  %v651 = vadd.s32 %v646, %v648
  %vm652 = vc.u32 %v646, %v648
  %v653 = vadd.s32 %v649, 1
  %v654 = vsel %vm652, %v653, %v649
  %v655 = vadd.s32 %v650, %v654
  %v656 = vadd.s32 %v655, 536870912
  %v657 = vshrl.u32 %v656, 30
  %v658 = vshll.u32 %v657, 30
  %v659 = vsub.s32 %v655, %v658
  %vm660 = vcmp.lt.s32.totalorder %v659, 0
  %v661 = vsub.s32 0, %v659
  %v662 = vsel %vm660, %v661, %v659
  %v663 = vclz %v662
  %v664 = vsub.s32 %v663, 2
  %vm665 = vcmp.gt.s32.totalorder 0, %v664
  %v666 = vsel %vm665, 0, %v664
  %v667 = vsub.s32 32, %v666
  %v668 = vshll.u32 %v659, %v666
  %v669 = vshrl.u32 %v651, %v667
  %v670 = vor.u32 %v668, %v669
  %v671 = vsub.s32 4294967266, %v666
  %v672 = vadd.s32 %v671, 127
  %v673 = vshll.u32 %v672, 23
  %v674 = vor.u32 4788187, %v673
  %v675 = vand.u32 2147483647, %v674
  %v677 = vcvt.s32.f32 %v670
  %v678 = vmul.f32 %v677, %v675
  %v679 = vxor.u32 %v678, 2147483648
  %v680 = vsel %vm597, %v679, %v678
  %v681 = vsub.s32 4, %v657
  %v682 = vsel %vm597, %v681, %v657
  %v683 = vsel %vm596, %v387, %v680
  %v684 = vsel %vm596, 0, %v682
  %v685 = vcosq.f32.pop %v683
  %v686 = vsinq.f32.pop %v683
  %vm687 = vweird.f32 %v387
  %v688 = vadd.s32 %v684, 3
  %v689 = vand.u32 %v688, 3
  %vm690 = vcmp.lt.s32.totalorder %v689, 2
  %vm691 = vcmp.eq.s32.totalorder %v689, 0
  %v692 = vxor.u32 %v686, 2147483648
  %v693 = vsel %vm691, %v685, %v692
  %vm694 = vcmp.eq.s32.totalorder %v689, 2
  %v695 = vxor.u32 %v685, 2147483648
  %v696 = vsel %vm694, %v695, %v686
  %v697 = vsel %vm690, %v693, %v696
  %v698 = vsel %vm687, nan, %v697
  %v699 = vand.u32 2147483647, %v388
  %vm700 = vcmp.le.f32.partialorder %v699, 0.7853982
  %vm701 = vcmp.lt.s32.totalorder %v388, 0
  %v702 = vand.u32 %v388, 2139095040
  %v703 = vshrl.u32 %v702, 23
  %v704 = vsub.s32 %v703, 127
  %v705 = vand.u32 2147483647, %v388
  %v706 = vand.u32 %v705, 8388607
  %v707 = vor.u32 %v706, 8388608
  %v708 = vsub.s32 0, %v707
  %v709 = vadd.s32 %v704, 1
  %vm710 = vcmp.gt.s32.totalorder %v709, 0
  %v711 = vsel %vm710, %v709, 0
  %v712 = vshrl.u32 %v711, 5
  %v713 = vand.u32 %v711, 31
  %v714 = vsub.s32 32, %v713
  %v715 = vshrl.u32 683565275, %v714
  %v716 = vshll.u32 683565275, %v713
  %v717 = vshrl.u32 2475754826, %v714
  %v718 = vor.u32 %v716, %v717
  %v719 = vshll.u32 2475754826, %v713
  %v720 = vshrl.u32 2131351028, %v714
  %v721 = vor.u32 %v719, %v720
  %v722 = vshll.u32 2131351028, %v713
  %v723 = vshrl.u32 2102212464, %v714
  %v724 = vor.u32 %v722, %v723
  %v725 = vshll.u32 2102212464, %v713
  %v726 = vshrl.u32 920167782, %v714
  %v727 = vor.u32 %v725, %v726
  %v728 = vshll.u32 920167782, %v713
  %v729 = vshrl.u32 1326507024, %v714
  %v730 = vor.u32 %v728, %v729
  %vm731 = vcmp.lt.s32.totalorder %v712, 1
  %vm732 = vcmp.lt.s32.totalorder %v712, 2
  %vm733 = vcmp.lt.s32.totalorder %v712, 3
  %vm734 = vcmp.lt.s32.totalorder %v712, 4
  %v735 = vsel %vm731, %v715, %v718
  %v736 = vsel %vm734, %v724, 2102212464
  %v737 = vsel %vm733, %v721, %v736
  %v738 = vsel %vm732, %v735, %v737
  %v739 = vsel %vm731, %v718, %v721
  %v740 = vsel %vm734, %v727, 920167782
  %v741 = vsel %vm733, %v724, %v740
  %v742 = vsel %vm732, %v739, %v741
  %v743 = vsel %vm731, %v721, %v724
  %v744 = vsel %vm734, %v730, 1326507024
  %v745 = vsel %vm733, %v727, %v744
  %v746 = vsel %vm732, %v743, %v745
  %v747 = vshll.u32 %v707, 8
  %v748 = vmul.u32.u64.compose %v747, %v746
  %v749 = vextract.low.u32 %v748
  %v750 = vextract.high.u32 %v748
  %v751 = vmul.u32.u64.compose %v747, %v742
  %v752 = vextract.low.u32 %v751
  %v753 = vextract.high.u32 %v751
  %v754 = vmul.u32 %v747, %v738
  %v755 = vadd.s32 %v750, %v752
  %vm756 = vc.u32 %v750, %v752
  %v757 = vadd.s32 %v753, 1
  %v758 = vsel %vm756, %v757, %v753
  %v759 = vadd.s32 %v754, %v758
  %v760 = vadd.s32 %v759, 536870912
  %v761 = vshrl.u32 %v760, 30
  %v762 = vshll.u32 %v761, 30
  %v763 = vsub.s32 %v759, %v762
  %vm764 = vcmp.lt.s32.totalorder %v763, 0
  %v765 = vsub.s32 0, %v763
  %v766 = vsel %vm764, %v765, %v763
  %v767 = vclz %v766
  %v768 = vsub.s32 %v767, 2
  %vm769 = vcmp.gt.s32.totalorder 0, %v768
  %v770 = vsel %vm769, 0, %v768
  %v771 = vsub.s32 32, %v770
  %v772 = vshll.u32 %v763, %v770
  %v773 = vshrl.u32 %v755, %v771
  %v774 = vor.u32 %v772, %v773
  %v775 = vsub.s32 4294967266, %v770
  %v776 = vadd.s32 %v775, 127
  %v777 = vshll.u32 %v776, 23
  %v778 = vor.u32 4788187, %v777
  %v779 = vand.u32 2147483647, %v778
  %v781 = vcvt.s32.f32 %v774
  %v782 = vmul.f32 %v781, %v779
  %v783 = vxor.u32 %v782, 2147483648
  %v784 = vsel %vm701, %v783, %v782
  %v785 = vsub.s32 4, %v761
  %v786 = vsel %vm701, %v785, %v761
  %v787 = vsel %vm700, %v388, %v784
  %v788 = vsel %vm700, 0, %v786
  %v789 = vcosq.f32.pop %v787
  %v790 = vsinq.f32.pop %v787
  %vm791 = vweird.f32 %v388
  %v792 = vadd.s32 %v788, 3
  %v793 = vand.u32 %v792, 3
  %vm794 = vcmp.lt.s32.totalorder %v793, 2
  %vm795 = vcmp.eq.s32.totalorder %v793, 0
  %v796 = vxor.u32 %v790, 2147483648
  %v797 = vsel %vm795, %v789, %v796
  %vm798 = vcmp.eq.s32.totalorder %v793, 2
  %v799 = vxor.u32 %v789, 2147483648
  %v800 = vsel %vm798, %v799, %v790
  %v801 = vsel %vm794, %v797, %v800
  %v802 = vsel %vm791, nan, %v801
  %v803 = vlaneseq
  %v804 = vshrl.u32 %v803, 7
  %v805 = vadd.s32 %v804, 8
  %v806 = vadd.s32 %v804, 16
  %v807 = vadd.s32 %v804, 24
  %vm808 = vcmp.eq.s32.totalorder %v804, 0
  %vm809 = vcmp.eq.s32.totalorder %v805, 0
  %vm810 = vcmp.eq.s32.totalorder %v806, 0
  %vm811 = vcmp.eq.s32.totalorder %v807, 0
  %v812 = vsel %vm808, 1, 0
  %v813 = vsel %vm809, 1, 0
  %v814 = vsel %vm810, 1, 0
  %v815 = vsel %vm811, 1, 0
  %v816 = vcvt.s32.f32 %v812
  %v817 = vcvt.s32.f32 %v813
  %v818 = vcvt.s32.f32 %v814
  %v819 = vcvt.s32.f32 %v815
  %v820 = vld [vmem:[%s2] sm:$0xff]
  %v821 = vld [vmem:[%s2 + $0x8] sm:$0xff]
  %v822 = vld [vmem:[%s2 + $0x10] sm:$0xff]
  %v823 = vld [vmem:[%s2 + $0x18] sm:$0xff]
  %vm824 = vcmask 261120
  %v826 = vsel %vm824, %v820, 0
  %v829 = vsel %vm824, %v821, 0
  %v832 = vsel %vm824, %v822, 0
  %v835 = vsel %vm824, %v823, 0
  %837 = vmatprep.subr.mxu0 0.0
  %838 = vmatpush1.msra.mxu0 %v816
  %839 = vmatprep.subr.mxu0 0.0
  %840 = vmatpush1.msra.mxu0 %v817
  %841 = vmatprep.subr.mxu0 0.0
  %842 = vmatpush1.msra.mxu0 %v818
  %843 = vmatprep.subr.mxu0 0.0
  %844 = vmatpush1.msra.mxu0 %v819
  %845 = vmatprep.subr.mxu0 0.0
  %846 = vmatpush1.msra.mxu0 0.0
  %847 = vmatprep.subr.mxu0 0.0
  %848 = vmatpush1.msra.mxu0 0.0
  %849 = vmatprep.subr.mxu0 0.0
  %850 = vmatpush1.msra.mxu0 0.0
  %851 = vmatprep.subr.mxu0 0.0
  %852 = vmatpush1.msra.mxu0 0.0
  %853 = vmatprep.subr.mxu0 0.0
  %854 = vmatpush1.msra.mxu0 0.0
  %855 = vmatprep.subr.mxu0 0.0
  %856 = vmatpush1.msra.mxu0 0.0
  %857 = vmatprep.subr.mxu0 0.0
  %858 = vmatpush1.msra.mxu0 0.0
  %859 = vmatprep.subr.mxu0 0.0
  %860 = vmatpush1.msra.mxu0 0.0
  %861 = vmatprep.subr.mxu0 0.0
  %862 = vmatpush1.msra.mxu0 0.0
  %863 = vmatprep.subr.mxu0 0.0
  %864 = vmatpush1.msra.mxu0 0.0
  %865 = vmatprep.subr.mxu0 0.0
  %866 = vmatpush1.msra.mxu0 0.0
  %867 = vmatprep.subr.mxu0 0.0
  %868 = vmatpush1.msra.mxu0 0.0
  %869 = vmatprep.subr.mxu0 0.0
  %870 = vmatpush1.msra.mxu0 0.0
  %871 = vmatprep.subr.mxu0 0.0
  %872 = vmatpush1.msra.mxu0 0.0
  %873 = vmatprep.subr.mxu0 0.0
  %874 = vmatpush1.msra.mxu0 0.0
  %875 = vmatprep.subr.mxu0 0.0
  %876 = vmatpush1.msra.mxu0 0.0
  %877 = vmatprep.subr.mxu0 0.0
  %878 = vmatpush1.msra.mxu0 0.0
  %879 = vmatprep.subr.mxu0 0.0
  %880 = vmatpush1.msra.mxu0 0.0
  %881 = vmatprep.subr.mxu0 0.0
  %882 = vmatpush1.msra.mxu0 0.0
  %883 = vmatprep.subr.mxu0 0.0
  %884 = vmatpush1.msra.mxu0 0.0
  %885 = vmatprep.subr.mxu0 0.0
  %886 = vmatpush1.msra.mxu0 0.0
  %887 = vmatprep.subr.mxu0 0.0
  %888 = vmatpush1.msra.mxu0 0.0
  %889 = vmatprep.subr.mxu0 0.0
  %890 = vmatpush1.msra.mxu0 0.0
  %891 = vmatprep.subr.mxu0 0.0
  %892 = vmatpush1.msra.mxu0 0.0
  %893 = vmatprep.subr.mxu0 0.0
  %894 = vmatpush1.msra.mxu0 0.0
  %895 = vmatprep.subr.mxu0 0.0
  %896 = vmatpush1.msra.mxu0 0.0
  %897 = vmatprep.subr.mxu0 0.0
  %898 = vmatpush1.msra.mxu0 0.0
  %899 = vmatprep.subr.mxu0 0.0
  %900 = vmatpush1.msra.mxu0 0.0
  %901 = vmatprep.mubr.f32.mxu0 0.0
  %902 = vmatmul.mubr.f32.gmra.mrb[0].mxu0 %v826
  %v903 = vpop.f32.mrb[0].mxu0
  %v904 = vadd.f32 0.0, %v903
  %v905 = vpop.f32.mrb[0].mxu0
  %906 = vmatprep.mubr.f32.mxu0 0.0
  %907 = vmatmul.mubr.f32.gmra.mrb[0].mxu0 %v829
  %v908 = vpop.f32.mrb[0].mxu0
  %v909 = vadd.f32 0.0, %v908
  %v910 = vpop.f32.mrb[0].mxu0
  %911 = vmatprep.mubr.f32.mxu0 0.0
  %912 = vmatmul.mubr.f32.gmra.mrb[0].mxu0 %v832
  %v913 = vpop.f32.mrb[0].mxu0
  %v914 = vadd.f32 0.0, %v913
  %v915 = vpop.f32.mrb[0].mxu0
  %916 = vmatprep.mubr.f32.mxu0 0.0
  %917 = vmatmul.mubr.f32.gmra.mrb[0].mxu0 %v835
  %v918 = vpop.f32.mrb[0].mxu0
  %v919 = vadd.f32 0.0, %v918
  %v920 = vpop.f32.mrb[0].mxu0
  %921 = vdwg.mxu0
  %v922 = vlaneseq
  %v923 = vshrl.u32 %v922, 7
  %v924 = vsub.s32 0, %v923
  %v925 = vrot.slane %v491, %v924
  %v926 = vmul.f32 %v925, %v816
  %v927 = vmul.f32 %v925, %v817
  %v928 = vmul.f32 %v925, %v818
  %v929 = vmul.f32 %v925, %v819
  %v930 = vlaneseq
  %v931 = vshrl.u32 %v930, 7
  %v932 = vsub.s32 0, %v931
  %v933 = vrot.slane %v698, %v932
  %v934 = vmul.f32 %v933, %v904
  %v935 = vmul.f32 %v933, %v909
  %v936 = vmul.f32 %v933, %v914
  %v937 = vmul.f32 %v933, %v919
  %v938 = vadd.f32 %v926, %v934
  %v939 = vadd.f32 %v927, %v935
  %v940 = vadd.f32 %v928, %v936
  %v941 = vadd.f32 %v929, %v937
  %s942 = scalar_lea.vmem %s2, 32
  %v943 = vld [vmem:[%s942] sm:$0xff]
  %v944 = vld [vmem:[%s942 + $0x8] sm:$0xff]
  %v945 = vld [vmem:[%s942 + $0x10] sm:$0xff]
  %v946 = vld [vmem:[%s942 + $0x18] sm:$0xff]
  %v948 = vsel %vm824, %v943, 0
  %v951 = vsel %vm824, %v944, 0
  %v954 = vsel %vm824, %v945, 0
  %v957 = vsel %vm824, %v946, 0
  %959 = vmatprep.subr.mxu0 0.0
  %960 = vmatpush1.msra.mxu0 %v938
  %961 = vmatprep.subr.mxu0 0.0
  %962 = vmatpush1.msra.mxu0 %v939
  %963 = vmatprep.subr.mxu0 0.0
  %964 = vmatpush1.msra.mxu0 %v940
  %965 = vmatprep.subr.mxu0 0.0
  %966 = vmatpush1.msra.mxu0 %v941
  %967 = vmatprep.subr.mxu0 0.0
  %968 = vmatpush1.msra.mxu0 0.0
  %969 = vmatprep.subr.mxu0 0.0
  %970 = vmatpush1.msra.mxu0 0.0
  %971 = vmatprep.subr.mxu0 0.0
  %972 = vmatpush1.msra.mxu0 0.0
  %973 = vmatprep.subr.mxu0 0.0
  %974 = vmatpush1.msra.mxu0 0.0
  %975 = vmatprep.subr.mxu0 0.0
  %976 = vmatpush1.msra.mxu0 0.0
  %977 = vmatprep.subr.mxu0 0.0
  %978 = vmatpush1.msra.mxu0 0.0
  %979 = vmatprep.subr.mxu0 0.0
  %980 = vmatpush1.msra.mxu0 0.0
  %981 = vmatprep.subr.mxu0 0.0
  %982 = vmatpush1.msra.mxu0 0.0
  %983 = vmatprep.subr.mxu0 0.0
  %984 = vmatpush1.msra.mxu0 0.0
  %985 = vmatprep.subr.mxu0 0.0
  %986 = vmatpush1.msra.mxu0 0.0
  %987 = vmatprep.subr.mxu0 0.0
  %988 = vmatpush1.msra.mxu0 0.0
  %989 = vmatprep.subr.mxu0 0.0
  %990 = vmatpush1.msra.mxu0 0.0
  %991 = vmatprep.subr.mxu0 0.0
  %992 = vmatpush1.msra.mxu0 0.0
  %993 = vmatprep.subr.mxu0 0.0
  %994 = vmatpush1.msra.mxu0 0.0
  %995 = vmatprep.subr.mxu0 0.0
  %996 = vmatpush1.msra.mxu0 0.0
  %997 = vmatprep.subr.mxu0 0.0
  %998 = vmatpush1.msra.mxu0 0.0
  %999 = vmatprep.subr.mxu0 0.0
  %1000 = vmatpush1.msra.mxu0 0.0
  %1001 = vmatprep.subr.mxu0 0.0
  %1002 = vmatpush1.msra.mxu0 0.0
  %1003 = vmatprep.subr.mxu0 0.0
  %1004 = vmatpush1.msra.mxu0 0.0
  %1005 = vmatprep.subr.mxu0 0.0
  %1006 = vmatpush1.msra.mxu0 0.0
  %1007 = vmatprep.subr.mxu0 0.0
  %1008 = vmatpush1.msra.mxu0 0.0
  %1009 = vmatprep.subr.mxu0 0.0
  %1010 = vmatpush1.msra.mxu0 0.0
  %1011 = vmatprep.subr.mxu0 0.0
  %1012 = vmatpush1.msra.mxu0 0.0
  %1013 = vmatprep.subr.mxu0 0.0
  %1014 = vmatpush1.msra.mxu0 0.0
  %1015 = vmatprep.subr.mxu0 0.0
  %1016 = vmatpush1.msra.mxu0 0.0
  %1017 = vmatprep.subr.mxu0 0.0
  %1018 = vmatpush1.msra.mxu0 0.0
  %1019 = vmatprep.subr.mxu0 0.0
  %1020 = vmatpush1.msra.mxu0 0.0
  %1021 = vmatprep.subr.mxu0 0.0
  %1022 = vmatpush1.msra.mxu0 0.0
  %1023 = vmatprep.mubr.f32.mxu0 0.0
  %1024 = vmatmul.mubr.f32.gmra.mrb[0].mxu0 %v948
  %v1025 = vpop.f32.mrb[0].mxu0
  %v1026 = vadd.f32 0.0, %v1025
  %v1027 = vpop.f32.mrb[0].mxu0
  %1028 = vmatprep.mubr.f32.mxu0 0.0
  %1029 = vmatmul.mubr.f32.gmra.mrb[0].mxu0 %v951
  %v1030 = vpop.f32.mrb[0].mxu0
  %v1031 = vadd.f32 0.0, %v1030
  %v1032 = vpop.f32.mrb[0].mxu0
  %1033 = vmatprep.mubr.f32.mxu0 0.0
  %1034 = vmatmul.mubr.f32.gmra.mrb[0].mxu0 %v954
  %v1035 = vpop.f32.mrb[0].mxu0
  %v1036 = vadd.f32 0.0, %v1035
  %v1037 = vpop.f32.mrb[0].mxu0
  %1038 = vmatprep.mubr.f32.mxu0 0.0
  %1039 = vmatmul.mubr.f32.gmra.mrb[0].mxu0 %v957
  %v1040 = vpop.f32.mrb[0].mxu0
  %v1041 = vadd.f32 0.0, %v1040
  %v1042 = vpop.f32.mrb[0].mxu0
  %1043 = vdwg.mxu0
  %v1044 = vlaneseq
  %v1045 = vshrl.u32 %v1044, 7
  %v1046 = vsub.s32 1, %v1045
  %v1047 = vrot.slane %v491, %v1046
  %v1048 = vmul.f32 %v1047, %v938
  %v1049 = vmul.f32 %v1047, %v939
  %v1050 = vmul.f32 %v1047, %v940
  %v1051 = vmul.f32 %v1047, %v941
  %v1052 = vlaneseq
  %v1053 = vshrl.u32 %v1052, 7
  %v1054 = vsub.s32 1, %v1053
  %v1055 = vrot.slane %v698, %v1054
  %v1056 = vmul.f32 %v1055, %v1026
  %v1057 = vmul.f32 %v1055, %v1031
  %v1058 = vmul.f32 %v1055, %v1036
  %v1059 = vmul.f32 %v1055, %v1041
  %v1060 = vadd.f32 %v1048, %v1056
  %v1061 = vadd.f32 %v1049, %v1057
  %v1062 = vadd.f32 %v1050, %v1058
  %v1063 = vadd.f32 %v1051, %v1059
  %s1064 = scalar_lea.vmem %s2, 64
  %v1065 = vld [vmem:[%s1064] sm:$0xff]
  %v1066 = vld [vmem:[%s1064 + $0x8] sm:$0xff]
  %v1067 = vld [vmem:[%s1064 + $0x10] sm:$0xff]
  %v1068 = vld [vmem:[%s1064 + $0x18] sm:$0xff]
  %v1070 = vsel %vm824, %v1065, 0
  %v1073 = vsel %vm824, %v1066, 0
  %v1076 = vsel %vm824, %v1067, 0
  %v1079 = vsel %vm824, %v1068, 0
  %1081 = vmatprep.subr.mxu0 0.0
  %1082 = vmatpush1.msra.mxu0 %v1060
  %1083 = vmatprep.subr.mxu0 0.0
  %1084 = vmatpush1.msra.mxu0 %v1061
  %1085 = vmatprep.subr.mxu0 0.0
  %1086 = vmatpush1.msra.mxu0 %v1062
  %1087 = vmatprep.subr.mxu0 0.0
  %1088 = vmatpush1.msra.mxu0 %v1063
  %1089 = vmatprep.subr.mxu0 0.0
  %1090 = vmatpush1.msra.mxu0 0.0
  %1091 = vmatprep.subr.mxu0 0.0
  %1092 = vmatpush1.msra.mxu0 0.0
  %1093 = vmatprep.subr.mxu0 0.0
  %1094 = vmatpush1.msra.mxu0 0.0
  %1095 = vmatprep.subr.mxu0 0.0
  %1096 = vmatpush1.msra.mxu0 0.0
  %1097 = vmatprep.subr.mxu0 0.0
  %1098 = vmatpush1.msra.mxu0 0.0
  %1099 = vmatprep.subr.mxu0 0.0
  %1100 = vmatpush1.msra.mxu0 0.0
  %1101 = vmatprep.subr.mxu0 0.0
  %1102 = vmatpush1.msra.mxu0 0.0
  %1103 = vmatprep.subr.mxu0 0.0
  %1104 = vmatpush1.msra.mxu0 0.0
  %1105 = vmatprep.subr.mxu0 0.0
  %1106 = vmatpush1.msra.mxu0 0.0
  %1107 = vmatprep.subr.mxu0 0.0
  %1108 = vmatpush1.msra.mxu0 0.0
  %1109 = vmatprep.subr.mxu0 0.0
  %1110 = vmatpush1.msra.mxu0 0.0
  %1111 = vmatprep.subr.mxu0 0.0
  %1112 = vmatpush1.msra.mxu0 0.0
  %1113 = vmatprep.subr.mxu0 0.0
  %1114 = vmatpush1.msra.mxu0 0.0
  %1115 = vmatprep.subr.mxu0 0.0
  %1116 = vmatpush1.msra.mxu0 0.0
  %1117 = vmatprep.subr.mxu0 0.0
  %1118 = vmatpush1.msra.mxu0 0.0
  %1119 = vmatprep.subr.mxu0 0.0
  %1120 = vmatpush1.msra.mxu0 0.0
  %1121 = vmatprep.subr.mxu0 0.0
  %1122 = vmatpush1.msra.mxu0 0.0
  %1123 = vmatprep.subr.mxu0 0.0
  %1124 = vmatpush1.msra.mxu0 0.0
  %1125 = vmatprep.subr.mxu0 0.0
  %1126 = vmatpush1.msra.mxu0 0.0
  %1127 = vmatprep.subr.mxu0 0.0
  %1128 = vmatpush1.msra.mxu0 0.0
  %1129 = vmatprep.subr.mxu0 0.0
  %1130 = vmatpush1.msra.mxu0 0.0
  %1131 = vmatprep.subr.mxu0 0.0
  %1132 = vmatpush1.msra.mxu0 0.0
  %1133 = vmatprep.subr.mxu0 0.0
  %1134 = vmatpush1.msra.mxu0 0.0
  %1135 = vmatprep.subr.mxu0 0.0
  %1136 = vmatpush1.msra.mxu0 0.0
  %1137 = vmatprep.subr.mxu0 0.0
  %1138 = vmatpush1.msra.mxu0 0.0
  %1139 = vmatprep.subr.mxu0 0.0
  %1140 = vmatpush1.msra.mxu0 0.0
  %1141 = vmatprep.subr.mxu0 0.0
  %1142 = vmatpush1.msra.mxu0 0.0
  %1143 = vmatprep.subr.mxu0 0.0
  %1144 = vmatpush1.msra.mxu0 0.0
  %1145 = vmatprep.mubr.f32.mxu0 0.0
  %1146 = vmatmul.mubr.f32.gmra.mrb[0].mxu0 %v1070
  %v1147 = vpop.f32.mrb[0].mxu0
  %v1148 = vadd.f32 0.0, %v1147
  %v1149 = vpop.f32.mrb[0].mxu0
  %1150 = vmatprep.mubr.f32.mxu0 0.0
  %1151 = vmatmul.mubr.f32.gmra.mrb[0].mxu0 %v1073
  %v1152 = vpop.f32.mrb[0].mxu0
  %v1153 = vadd.f32 0.0, %v1152
  %v1154 = vpop.f32.mrb[0].mxu0
  %1155 = vmatprep.mubr.f32.mxu0 0.0
  %1156 = vmatmul.mubr.f32.gmra.mrb[0].mxu0 %v1076
  %v1157 = vpop.f32.mrb[0].mxu0
  %v1158 = vadd.f32 0.0, %v1157
  %v1159 = vpop.f32.mrb[0].mxu0
  %1160 = vmatprep.mubr.f32.mxu0 0.0
  %1161 = vmatmul.mubr.f32.gmra.mrb[0].mxu0 %v1079
  %v1162 = vpop.f32.mrb[0].mxu0
  %v1163 = vadd.f32 0.0, %v1162
  %v1164 = vpop.f32.mrb[0].mxu0
  %1165 = vdwg.mxu0
  %v1166 = vlaneseq
  %v1167 = vshrl.u32 %v1166, 7
  %v1168 = vsub.s32 2, %v1167
  %v1169 = vrot.slane %v491, %v1168
  %v1170 = vmul.f32 %v1169, %v1060
  %v1171 = vmul.f32 %v1169, %v1061
  %v1172 = vmul.f32 %v1169, %v1062
  %v1173 = vmul.f32 %v1169, %v1063
  %v1174 = vlaneseq
  %v1175 = vshrl.u32 %v1174, 7
  %v1176 = vsub.s32 2, %v1175
  %v1177 = vrot.slane %v698, %v1176
  %v1178 = vmul.f32 %v1177, %v1148
  %v1179 = vmul.f32 %v1177, %v1153
  %v1180 = vmul.f32 %v1177, %v1158
  %v1181 = vmul.f32 %v1177, %v1163
  %v1182 = vadd.f32 %v1170, %v1178
  %v1183 = vadd.f32 %v1171, %v1179
  %v1184 = vadd.f32 %v1172, %v1180
  %v1185 = vadd.f32 %v1173, %v1181
  %s1186 = scalar_lea.vmem %s2, 96
  %v1187 = vld [vmem:[%s1186] sm:$0xff]
  %v1188 = vld [vmem:[%s1186 + $0x8] sm:$0xff]
  %v1189 = vld [vmem:[%s1186 + $0x10] sm:$0xff]
  %v1190 = vld [vmem:[%s1186 + $0x18] sm:$0xff]
  %v1192 = vsel %vm824, %v1187, 0
  %v1195 = vsel %vm824, %v1188, 0
  %v1198 = vsel %vm824, %v1189, 0
  %v1201 = vsel %vm824, %v1190, 0
  %1203 = vmatprep.subr.mxu0 0.0
  %1204 = vmatpush1.msra.mxu0 %v1182
  %1205 = vmatprep.subr.mxu0 0.0
  %1206 = vmatpush1.msra.mxu0 %v1183
  %1207 = vmatprep.subr.mxu0 0.0
  %1208 = vmatpush1.msra.mxu0 %v1184
  %1209 = vmatprep.subr.mxu0 0.0
  %1210 = vmatpush1.msra.mxu0 %v1185
  %1211 = vmatprep.subr.mxu0 0.0
  %1212 = vmatpush1.msra.mxu0 0.0
  %1213 = vmatprep.subr.mxu0 0.0
  %1214 = vmatpush1.msra.mxu0 0.0
  %1215 = vmatprep.subr.mxu0 0.0
  %1216 = vmatpush1.msra.mxu0 0.0
  %1217 = vmatprep.subr.mxu0 0.0
  %1218 = vmatpush1.msra.mxu0 0.0
  %1219 = vmatprep.subr.mxu0 0.0
  %1220 = vmatpush1.msra.mxu0 0.0
  %1221 = vmatprep.subr.mxu0 0.0
  %1222 = vmatpush1.msra.mxu0 0.0
  %1223 = vmatprep.subr.mxu0 0.0
  %1224 = vmatpush1.msra.mxu0 0.0
  %1225 = vmatprep.subr.mxu0 0.0
  %1226 = vmatpush1.msra.mxu0 0.0
  %1227 = vmatprep.subr.mxu0 0.0
  %1228 = vmatpush1.msra.mxu0 0.0
  %1229 = vmatprep.subr.mxu0 0.0
  %1230 = vmatpush1.msra.mxu0 0.0
  %1231 = vmatprep.subr.mxu0 0.0
  %1232 = vmatpush1.msra.mxu0 0.0
  %1233 = vmatprep.subr.mxu0 0.0
  %1234 = vmatpush1.msra.mxu0 0.0
  %1235 = vmatprep.subr.mxu0 0.0
  %1236 = vmatpush1.msra.mxu0 0.0
  %1237 = vmatprep.subr.mxu0 0.0
  %1238 = vmatpush1.msra.mxu0 0.0
  %1239 = vmatprep.subr.mxu0 0.0
  %1240 = vmatpush1.msra.mxu0 0.0
  %1241 = vmatprep.subr.mxu0 0.0
  %1242 = vmatpush1.msra.mxu0 0.0
  %1243 = vmatprep.subr.mxu0 0.0
  %1244 = vmatpush1.msra.mxu0 0.0
  %1245 = vmatprep.subr.mxu0 0.0
  %1246 = vmatpush1.msra.mxu0 0.0
  %1247 = vmatprep.subr.mxu0 0.0
  %1248 = vmatpush1.msra.mxu0 0.0
  %1249 = vmatprep.subr.mxu0 0.0
  %1250 = vmatpush1.msra.mxu0 0.0
  %1251 = vmatprep.subr.mxu0 0.0
  %1252 = vmatpush1.msra.mxu0 0.0
  %1253 = vmatprep.subr.mxu0 0.0
  %1254 = vmatpush1.msra.mxu0 0.0
  %1255 = vmatprep.subr.mxu0 0.0
  %1256 = vmatpush1.msra.mxu0 0.0
  %1257 = vmatprep.subr.mxu0 0.0
  %1258 = vmatpush1.msra.mxu0 0.0
  %1259 = vmatprep.subr.mxu0 0.0
  %1260 = vmatpush1.msra.mxu0 0.0
  %1261 = vmatprep.subr.mxu0 0.0
  %1262 = vmatpush1.msra.mxu0 0.0
  %1263 = vmatprep.subr.mxu0 0.0
  %1264 = vmatpush1.msra.mxu0 0.0
  %1265 = vmatprep.subr.mxu0 0.0
  %1266 = vmatpush1.msra.mxu0 0.0
  %1267 = vmatprep.mubr.f32.mxu0 0.0
  %1268 = vmatmul.mubr.f32.gmra.mrb[0].mxu0 %v1192
  %v1269 = vpop.f32.mrb[0].mxu0
  %v1270 = vadd.f32 0.0, %v1269
  %v1271 = vpop.f32.mrb[0].mxu0
  %1272 = vmatprep.mubr.f32.mxu0 0.0
  %1273 = vmatmul.mubr.f32.gmra.mrb[0].mxu0 %v1195
  %v1274 = vpop.f32.mrb[0].mxu0
  %v1275 = vadd.f32 0.0, %v1274
  %v1276 = vpop.f32.mrb[0].mxu0
  %1277 = vmatprep.mubr.f32.mxu0 0.0
  %1278 = vmatmul.mubr.f32.gmra.mrb[0].mxu0 %v1198
  %v1279 = vpop.f32.mrb[0].mxu0
  %v1280 = vadd.f32 0.0, %v1279
  %v1281 = vpop.f32.mrb[0].mxu0
  %1282 = vmatprep.mubr.f32.mxu0 0.0
  %1283 = vmatmul.mubr.f32.gmra.mrb[0].mxu0 %v1201
  %v1284 = vpop.f32.mrb[0].mxu0
  %v1285 = vadd.f32 0.0, %v1284
  %v1286 = vpop.f32.mrb[0].mxu0
  %1287 = vdwg.mxu0
  %v1288 = vlaneseq
  %v1289 = vshrl.u32 %v1288, 7
  %v1290 = vsub.s32 3, %v1289
  %v1291 = vrot.slane %v491, %v1290
  %v1292 = vmul.f32 %v1291, %v1182
  %v1293 = vmul.f32 %v1291, %v1183
  %v1294 = vmul.f32 %v1291, %v1184
  %v1295 = vmul.f32 %v1291, %v1185
  %v1296 = vlaneseq
  %v1297 = vshrl.u32 %v1296, 7
  %v1298 = vsub.s32 3, %v1297
  %v1299 = vrot.slane %v698, %v1298
  %v1300 = vmul.f32 %v1299, %v1270
  %v1301 = vmul.f32 %v1299, %v1275
  %v1302 = vmul.f32 %v1299, %v1280
  %v1303 = vmul.f32 %v1299, %v1285
  %v1304 = vadd.f32 %v1292, %v1300
  %v1305 = vadd.f32 %v1293, %v1301
  %v1306 = vadd.f32 %v1294, %v1302
  %v1307 = vadd.f32 %v1295, %v1303
  %s1308 = scalar_lea.vmem %s2, 128
  %v1309 = vld [vmem:[%s1308] sm:$0xff]
  %v1310 = vld [vmem:[%s1308 + $0x8] sm:$0xff]
  %v1311 = vld [vmem:[%s1308 + $0x10] sm:$0xff]
  %v1312 = vld [vmem:[%s1308 + $0x18] sm:$0xff]
  %v1314 = vsel %vm824, %v1309, 0
  %v1317 = vsel %vm824, %v1310, 0
  %v1320 = vsel %vm824, %v1311, 0
  %v1323 = vsel %vm824, %v1312, 0
  %1325 = vmatprep.subr.mxu0 0.0
  %1326 = vmatpush1.msra.mxu0 %v1304
  %1327 = vmatprep.subr.mxu0 0.0
  %1328 = vmatpush1.msra.mxu0 %v1305
  %1329 = vmatprep.subr.mxu0 0.0
  %1330 = vmatpush1.msra.mxu0 %v1306
  %1331 = vmatprep.subr.mxu0 0.0
  %1332 = vmatpush1.msra.mxu0 %v1307
  %1333 = vmatprep.subr.mxu0 0.0
  %1334 = vmatpush1.msra.mxu0 0.0
  %1335 = vmatprep.subr.mxu0 0.0
  %1336 = vmatpush1.msra.mxu0 0.0
  %1337 = vmatprep.subr.mxu0 0.0
  %1338 = vmatpush1.msra.mxu0 0.0
  %1339 = vmatprep.subr.mxu0 0.0
  %1340 = vmatpush1.msra.mxu0 0.0
  %1341 = vmatprep.subr.mxu0 0.0
  %1342 = vmatpush1.msra.mxu0 0.0
  %1343 = vmatprep.subr.mxu0 0.0
  %1344 = vmatpush1.msra.mxu0 0.0
  %1345 = vmatprep.subr.mxu0 0.0
  %1346 = vmatpush1.msra.mxu0 0.0
  %1347 = vmatprep.subr.mxu0 0.0
  %1348 = vmatpush1.msra.mxu0 0.0
  %1349 = vmatprep.subr.mxu0 0.0
  %1350 = vmatpush1.msra.mxu0 0.0
  %1351 = vmatprep.subr.mxu0 0.0
  %1352 = vmatpush1.msra.mxu0 0.0
  %1353 = vmatprep.subr.mxu0 0.0
  %1354 = vmatpush1.msra.mxu0 0.0
  %1355 = vmatprep.subr.mxu0 0.0
  %1356 = vmatpush1.msra.mxu0 0.0
  %1357 = vmatprep.subr.mxu0 0.0
  %1358 = vmatpush1.msra.mxu0 0.0
  %1359 = vmatprep.subr.mxu0 0.0
  %1360 = vmatpush1.msra.mxu0 0.0
  %1361 = vmatprep.subr.mxu0 0.0
  %1362 = vmatpush1.msra.mxu0 0.0
  %1363 = vmatprep.subr.mxu0 0.0
  %1364 = vmatpush1.msra.mxu0 0.0
  %1365 = vmatprep.subr.mxu0 0.0
  %1366 = vmatpush1.msra.mxu0 0.0
  %1367 = vmatprep.subr.mxu0 0.0
  %1368 = vmatpush1.msra.mxu0 0.0
  %1369 = vmatprep.subr.mxu0 0.0
  %1370 = vmatpush1.msra.mxu0 0.0
  %1371 = vmatprep.subr.mxu0 0.0
  %1372 = vmatpush1.msra.mxu0 0.0
  %1373 = vmatprep.subr.mxu0 0.0
  %1374 = vmatpush1.msra.mxu0 0.0
  %1375 = vmatprep.subr.mxu0 0.0
  %1376 = vmatpush1.msra.mxu0 0.0
  %1377 = vmatprep.subr.mxu0 0.0
  %1378 = vmatpush1.msra.mxu0 0.0
  %1379 = vmatprep.subr.mxu0 0.0
  %1380 = vmatpush1.msra.mxu0 0.0
  %1381 = vmatprep.subr.mxu0 0.0
  %1382 = vmatpush1.msra.mxu0 0.0
  %1383 = vmatprep.subr.mxu0 0.0
  %1384 = vmatpush1.msra.mxu0 0.0
  %1385 = vmatprep.subr.mxu0 0.0
  %1386 = vmatpush1.msra.mxu0 0.0
  %1387 = vmatprep.subr.mxu0 0.0
  %1388 = vmatpush1.msra.mxu0 0.0
  %1389 = vmatprep.mubr.f32.mxu0 0.0
  %1390 = vmatmul.mubr.f32.gmra.mrb[0].mxu0 %v1314
  %v1391 = vpop.f32.mrb[0].mxu0
  %v1392 = vadd.f32 0.0, %v1391
  %v1393 = vpop.f32.mrb[0].mxu0
  %1394 = vmatprep.mubr.f32.mxu0 0.0
  %1395 = vmatmul.mubr.f32.gmra.mrb[0].mxu0 %v1317
  %v1396 = vpop.f32.mrb[0].mxu0
  %v1397 = vadd.f32 0.0, %v1396
  %v1398 = vpop.f32.mrb[0].mxu0
  %1399 = vmatprep.mubr.f32.mxu0 0.0
  %1400 = vmatmul.mubr.f32.gmra.mrb[0].mxu0 %v1320
  %v1401 = vpop.f32.mrb[0].mxu0
  %v1402 = vadd.f32 0.0, %v1401
  %v1403 = vpop.f32.mrb[0].mxu0
  %1404 = vmatprep.mubr.f32.mxu0 0.0
  %1405 = vmatmul.mubr.f32.gmra.mrb[0].mxu0 %v1323
  %v1406 = vpop.f32.mrb[0].mxu0
  %v1407 = vadd.f32 0.0, %v1406
  %v1408 = vpop.f32.mrb[0].mxu0
  %1409 = vdwg.mxu0
  %v1410 = vlaneseq
  %v1411 = vshrl.u32 %v1410, 7
  %v1412 = vsub.s32 4, %v1411
  %v1413 = vrot.slane %v491, %v1412
  %v1414 = vmul.f32 %v1413, %v1304
  %v1415 = vmul.f32 %v1413, %v1305
  %v1416 = vmul.f32 %v1413, %v1306
  %v1417 = vmul.f32 %v1413, %v1307
  %v1418 = vlaneseq
  %v1419 = vshrl.u32 %v1418, 7
  %v1420 = vsub.s32 4, %v1419
  %v1421 = vrot.slane %v698, %v1420
  %v1422 = vmul.f32 %v1421, %v1392
  %v1423 = vmul.f32 %v1421, %v1397
  %v1424 = vmul.f32 %v1421, %v1402
  %v1425 = vmul.f32 %v1421, %v1407
  %v1426 = vadd.f32 %v1414, %v1422
  %v1427 = vadd.f32 %v1415, %v1423
  %v1428 = vadd.f32 %v1416, %v1424
  %v1429 = vadd.f32 %v1417, %v1425
  %s1430 = scalar_lea.vmem %s2, 160
  %v1431 = vld [vmem:[%s1430] sm:$0xff]
  %v1432 = vld [vmem:[%s1430 + $0x8] sm:$0xff]
  %v1433 = vld [vmem:[%s1430 + $0x10] sm:$0xff]
  %v1434 = vld [vmem:[%s1430 + $0x18] sm:$0xff]
  %v1436 = vsel %vm824, %v1431, 0
  %v1439 = vsel %vm824, %v1432, 0
  %v1442 = vsel %vm824, %v1433, 0
  %v1445 = vsel %vm824, %v1434, 0
  %1447 = vmatprep.subr.mxu0 0.0
  %1448 = vmatpush1.msra.mxu0 %v1426
  %1449 = vmatprep.subr.mxu0 0.0
  %1450 = vmatpush1.msra.mxu0 %v1427
  %1451 = vmatprep.subr.mxu0 0.0
  %1452 = vmatpush1.msra.mxu0 %v1428
  %1453 = vmatprep.subr.mxu0 0.0
  %1454 = vmatpush1.msra.mxu0 %v1429
  %1455 = vmatprep.subr.mxu0 0.0
  %1456 = vmatpush1.msra.mxu0 0.0
  %1457 = vmatprep.subr.mxu0 0.0
  %1458 = vmatpush1.msra.mxu0 0.0
  %1459 = vmatprep.subr.mxu0 0.0
  %1460 = vmatpush1.msra.mxu0 0.0
  %1461 = vmatprep.subr.mxu0 0.0
  %1462 = vmatpush1.msra.mxu0 0.0
  %1463 = vmatprep.subr.mxu0 0.0
  %1464 = vmatpush1.msra.mxu0 0.0
  %1465 = vmatprep.subr.mxu0 0.0
  %1466 = vmatpush1.msra.mxu0 0.0
  %1467 = vmatprep.subr.mxu0 0.0
  %1468 = vmatpush1.msra.mxu0 0.0
  %1469 = vmatprep.subr.mxu0 0.0
  %1470 = vmatpush1.msra.mxu0 0.0
  %1471 = vmatprep.subr.mxu0 0.0
  %1472 = vmatpush1.msra.mxu0 0.0
  %1473 = vmatprep.subr.mxu0 0.0
  %1474 = vmatpush1.msra.mxu0 0.0
  %1475 = vmatprep.subr.mxu0 0.0
  %1476 = vmatpush1.msra.mxu0 0.0
  %1477 = vmatprep.subr.mxu0 0.0
  %1478 = vmatpush1.msra.mxu0 0.0
  %1479 = vmatprep.subr.mxu0 0.0
  %1480 = vmatpush1.msra.mxu0 0.0
  %1481 = vmatprep.subr.mxu0 0.0
  %1482 = vmatpush1.msra.mxu0 0.0
  %1483 = vmatprep.subr.mxu0 0.0
  %1484 = vmatpush1.msra.mxu0 0.0
  %1485 = vmatprep.subr.mxu0 0.0
  %1486 = vmatpush1.msra.mxu0 0.0
  %1487 = vmatprep.subr.mxu0 0.0
  %1488 = vmatpush1.msra.mxu0 0.0
  %1489 = vmatprep.subr.mxu0 0.0
  %1490 = vmatpush1.msra.mxu0 0.0
  %1491 = vmatprep.subr.mxu0 0.0
  %1492 = vmatpush1.msra.mxu0 0.0
  %1493 = vmatprep.subr.mxu0 0.0
  %1494 = vmatpush1.msra.mxu0 0.0
  %1495 = vmatprep.subr.mxu0 0.0
  %1496 = vmatpush1.msra.mxu0 0.0
  %1497 = vmatprep.subr.mxu0 0.0
  %1498 = vmatpush1.msra.mxu0 0.0
  %1499 = vmatprep.subr.mxu0 0.0
  %1500 = vmatpush1.msra.mxu0 0.0
  %1501 = vmatprep.subr.mxu0 0.0
  %1502 = vmatpush1.msra.mxu0 0.0
  %1503 = vmatprep.subr.mxu0 0.0
  %1504 = vmatpush1.msra.mxu0 0.0
  %1505 = vmatprep.subr.mxu0 0.0
  %1506 = vmatpush1.msra.mxu0 0.0
  %1507 = vmatprep.subr.mxu0 0.0
  %1508 = vmatpush1.msra.mxu0 0.0
  %1509 = vmatprep.subr.mxu0 0.0
  %1510 = vmatpush1.msra.mxu0 0.0
  %1511 = vmatprep.mubr.f32.mxu0 0.0
  %1512 = vmatmul.mubr.f32.gmra.mrb[0].mxu0 %v1436
  %v1513 = vpop.f32.mrb[0].mxu0
  %v1514 = vadd.f32 0.0, %v1513
  %v1515 = vpop.f32.mrb[0].mxu0
  %1516 = vmatprep.mubr.f32.mxu0 0.0
  %1517 = vmatmul.mubr.f32.gmra.mrb[0].mxu0 %v1439
  %v1518 = vpop.f32.mrb[0].mxu0
  %v1519 = vadd.f32 0.0, %v1518
  %v1520 = vpop.f32.mrb[0].mxu0
  %1521 = vmatprep.mubr.f32.mxu0 0.0
  %1522 = vmatmul.mubr.f32.gmra.mrb[0].mxu0 %v1442
  %v1523 = vpop.f32.mrb[0].mxu0
  %v1524 = vadd.f32 0.0, %v1523
  %v1525 = vpop.f32.mrb[0].mxu0
  %1526 = vmatprep.mubr.f32.mxu0 0.0
  %1527 = vmatmul.mubr.f32.gmra.mrb[0].mxu0 %v1445
  %v1528 = vpop.f32.mrb[0].mxu0
  %v1529 = vadd.f32 0.0, %v1528
  %v1530 = vpop.f32.mrb[0].mxu0
  %1531 = vdwg.mxu0
  %v1532 = vlaneseq
  %v1533 = vshrl.u32 %v1532, 7
  %v1534 = vsub.s32 5, %v1533
  %v1535 = vrot.slane %v491, %v1534
  %v1536 = vmul.f32 %v1535, %v1426
  %v1537 = vmul.f32 %v1535, %v1427
  %v1538 = vmul.f32 %v1535, %v1428
  %v1539 = vmul.f32 %v1535, %v1429
  %v1540 = vlaneseq
  %v1541 = vshrl.u32 %v1540, 7
  %v1542 = vsub.s32 5, %v1541
  %v1543 = vrot.slane %v698, %v1542
  %v1544 = vmul.f32 %v1543, %v1514
  %v1545 = vmul.f32 %v1543, %v1519
  %v1546 = vmul.f32 %v1543, %v1524
  %v1547 = vmul.f32 %v1543, %v1529
  %v1548 = vadd.f32 %v1536, %v1544
  %v1549 = vadd.f32 %v1537, %v1545
  %v1550 = vadd.f32 %v1538, %v1546
  %v1551 = vadd.f32 %v1539, %v1547
  %s1552 = scalar_lea.vmem %s2, 192
  %v1553 = vld [vmem:[%s1552] sm:$0xff]
  %v1554 = vld [vmem:[%s1552 + $0x8] sm:$0xff]
  %v1555 = vld [vmem:[%s1552 + $0x10] sm:$0xff]
  %v1556 = vld [vmem:[%s1552 + $0x18] sm:$0xff]
  %v1558 = vsel %vm824, %v1553, 0
  %v1561 = vsel %vm824, %v1554, 0
  %v1564 = vsel %vm824, %v1555, 0
  %v1567 = vsel %vm824, %v1556, 0
  %1569 = vmatprep.subr.mxu0 0.0
  %1570 = vmatpush1.msra.mxu0 %v1548
  %1571 = vmatprep.subr.mxu0 0.0
  %1572 = vmatpush1.msra.mxu0 %v1549
  %1573 = vmatprep.subr.mxu0 0.0
  %1574 = vmatpush1.msra.mxu0 %v1550
  %1575 = vmatprep.subr.mxu0 0.0
  %1576 = vmatpush1.msra.mxu0 %v1551
  %1577 = vmatprep.subr.mxu0 0.0
  %1578 = vmatpush1.msra.mxu0 0.0
  %1579 = vmatprep.subr.mxu0 0.0
  %1580 = vmatpush1.msra.mxu0 0.0
  %1581 = vmatprep.subr.mxu0 0.0
  %1582 = vmatpush1.msra.mxu0 0.0
  %1583 = vmatprep.subr.mxu0 0.0
  %1584 = vmatpush1.msra.mxu0 0.0
  %1585 = vmatprep.subr.mxu0 0.0
  %1586 = vmatpush1.msra.mxu0 0.0
  %1587 = vmatprep.subr.mxu0 0.0
  %1588 = vmatpush1.msra.mxu0 0.0
  %1589 = vmatprep.subr.mxu0 0.0
  %1590 = vmatpush1.msra.mxu0 0.0
  %1591 = vmatprep.subr.mxu0 0.0
  %1592 = vmatpush1.msra.mxu0 0.0
  %1593 = vmatprep.subr.mxu0 0.0
  %1594 = vmatpush1.msra.mxu0 0.0
  %1595 = vmatprep.subr.mxu0 0.0
  %1596 = vmatpush1.msra.mxu0 0.0
  %1597 = vmatprep.subr.mxu0 0.0
  %1598 = vmatpush1.msra.mxu0 0.0
  %1599 = vmatprep.subr.mxu0 0.0
  %1600 = vmatpush1.msra.mxu0 0.0
  %1601 = vmatprep.subr.mxu0 0.0
  %1602 = vmatpush1.msra.mxu0 0.0
  %1603 = vmatprep.subr.mxu0 0.0
  %1604 = vmatpush1.msra.mxu0 0.0
  %1605 = vmatprep.subr.mxu0 0.0
  %1606 = vmatpush1.msra.mxu0 0.0
  %1607 = vmatprep.subr.mxu0 0.0
  %1608 = vmatpush1.msra.mxu0 0.0
  %1609 = vmatprep.subr.mxu0 0.0
  %1610 = vmatpush1.msra.mxu0 0.0
  %1611 = vmatprep.subr.mxu0 0.0
  %1612 = vmatpush1.msra.mxu0 0.0
  %1613 = vmatprep.subr.mxu0 0.0
  %1614 = vmatpush1.msra.mxu0 0.0
  %1615 = vmatprep.subr.mxu0 0.0
  %1616 = vmatpush1.msra.mxu0 0.0
  %1617 = vmatprep.subr.mxu0 0.0
  %1618 = vmatpush1.msra.mxu0 0.0
  %1619 = vmatprep.subr.mxu0 0.0
  %1620 = vmatpush1.msra.mxu0 0.0
  %1621 = vmatprep.subr.mxu0 0.0
  %1622 = vmatpush1.msra.mxu0 0.0
  %1623 = vmatprep.subr.mxu0 0.0
  %1624 = vmatpush1.msra.mxu0 0.0
  %1625 = vmatprep.subr.mxu0 0.0
  %1626 = vmatpush1.msra.mxu0 0.0
  %1627 = vmatprep.subr.mxu0 0.0
  %1628 = vmatpush1.msra.mxu0 0.0
  %1629 = vmatprep.subr.mxu0 0.0
  %1630 = vmatpush1.msra.mxu0 0.0
  %1631 = vmatprep.subr.mxu0 0.0
  %1632 = vmatpush1.msra.mxu0 0.0
  %1633 = vmatprep.mubr.f32.mxu0 0.0
  %1634 = vmatmul.mubr.f32.gmra.mrb[0].mxu0 %v1558
  %v1635 = vpop.f32.mrb[0].mxu0
  %v1636 = vadd.f32 0.0, %v1635
  %v1637 = vpop.f32.mrb[0].mxu0
  %1638 = vmatprep.mubr.f32.mxu0 0.0
  %1639 = vmatmul.mubr.f32.gmra.mrb[0].mxu0 %v1561
  %v1640 = vpop.f32.mrb[0].mxu0
  %v1641 = vadd.f32 0.0, %v1640
  %v1642 = vpop.f32.mrb[0].mxu0
  %1643 = vmatprep.mubr.f32.mxu0 0.0
  %1644 = vmatmul.mubr.f32.gmra.mrb[0].mxu0 %v1564
  %v1645 = vpop.f32.mrb[0].mxu0
  %v1646 = vadd.f32 0.0, %v1645
  %v1647 = vpop.f32.mrb[0].mxu0
  %1648 = vmatprep.mubr.f32.mxu0 0.0
  %1649 = vmatmul.mubr.f32.gmra.mrb[0].mxu0 %v1567
  %v1650 = vpop.f32.mrb[0].mxu0
  %v1651 = vadd.f32 0.0, %v1650
  %v1652 = vpop.f32.mrb[0].mxu0
  %1653 = vdwg.mxu0
  %v1654 = vlaneseq
  %v1655 = vshrl.u32 %v1654, 7
  %v1656 = vsub.s32 6, %v1655
  %v1657 = vrot.slane %v491, %v1656
  %v1658 = vmul.f32 %v1657, %v1548
  %v1659 = vmul.f32 %v1657, %v1549
  %v1660 = vmul.f32 %v1657, %v1550
  %v1661 = vmul.f32 %v1657, %v1551
  %v1662 = vlaneseq
  %v1663 = vshrl.u32 %v1662, 7
  %v1664 = vsub.s32 6, %v1663
  %v1665 = vrot.slane %v698, %v1664
  %v1666 = vmul.f32 %v1665, %v1636
  %v1667 = vmul.f32 %v1665, %v1641
  %v1668 = vmul.f32 %v1665, %v1646
  %v1669 = vmul.f32 %v1665, %v1651
  %v1670 = vadd.f32 %v1658, %v1666
  %v1671 = vadd.f32 %v1659, %v1667
  %v1672 = vadd.f32 %v1660, %v1668
  %v1673 = vadd.f32 %v1661, %v1669
  %s1674 = scalar_lea.vmem %s2, 224
  %v1675 = vld [vmem:[%s1674] sm:$0xff]
  %v1676 = vld [vmem:[%s1674 + $0x8] sm:$0xff]
  %v1677 = vld [vmem:[%s1674 + $0x10] sm:$0xff]
  %v1678 = vld [vmem:[%s1674 + $0x18] sm:$0xff]
  %v1680 = vsel %vm824, %v1675, 0
  %v1683 = vsel %vm824, %v1676, 0
  %v1686 = vsel %vm824, %v1677, 0
  %v1689 = vsel %vm824, %v1678, 0
  %1691 = vmatprep.subr.mxu0 0.0
  %1692 = vmatpush1.msra.mxu0 %v1670
  %1693 = vmatprep.subr.mxu0 0.0
  %1694 = vmatpush1.msra.mxu0 %v1671
  %1695 = vmatprep.subr.mxu0 0.0
  %1696 = vmatpush1.msra.mxu0 %v1672
  %1697 = vmatprep.subr.mxu0 0.0
  %1698 = vmatpush1.msra.mxu0 %v1673
  %1699 = vmatprep.subr.mxu0 0.0
  %1700 = vmatpush1.msra.mxu0 0.0
  %1701 = vmatprep.subr.mxu0 0.0
  %1702 = vmatpush1.msra.mxu0 0.0
  %1703 = vmatprep.subr.mxu0 0.0
  %1704 = vmatpush1.msra.mxu0 0.0
  %1705 = vmatprep.subr.mxu0 0.0
  %1706 = vmatpush1.msra.mxu0 0.0
  %1707 = vmatprep.subr.mxu0 0.0
  %1708 = vmatpush1.msra.mxu0 0.0
  %1709 = vmatprep.subr.mxu0 0.0
  %1710 = vmatpush1.msra.mxu0 0.0
  %1711 = vmatprep.subr.mxu0 0.0
  %1712 = vmatpush1.msra.mxu0 0.0
  %1713 = vmatprep.subr.mxu0 0.0
  %1714 = vmatpush1.msra.mxu0 0.0
  %1715 = vmatprep.subr.mxu0 0.0
  %1716 = vmatpush1.msra.mxu0 0.0
  %1717 = vmatprep.subr.mxu0 0.0
  %1718 = vmatpush1.msra.mxu0 0.0
  %1719 = vmatprep.subr.mxu0 0.0
  %1720 = vmatpush1.msra.mxu0 0.0
  %1721 = vmatprep.subr.mxu0 0.0
  %1722 = vmatpush1.msra.mxu0 0.0
  %1723 = vmatprep.subr.mxu0 0.0
  %1724 = vmatpush1.msra.mxu0 0.0
  %1725 = vmatprep.subr.mxu0 0.0
  %1726 = vmatpush1.msra.mxu0 0.0
  %1727 = vmatprep.subr.mxu0 0.0
  %1728 = vmatpush1.msra.mxu0 0.0
  %1729 = vmatprep.subr.mxu0 0.0
  %1730 = vmatpush1.msra.mxu0 0.0
  %1731 = vmatprep.subr.mxu0 0.0
  %1732 = vmatpush1.msra.mxu0 0.0
  %1733 = vmatprep.subr.mxu0 0.0
  %1734 = vmatpush1.msra.mxu0 0.0
  %1735 = vmatprep.subr.mxu0 0.0
  %1736 = vmatpush1.msra.mxu0 0.0
  %1737 = vmatprep.subr.mxu0 0.0
  %1738 = vmatpush1.msra.mxu0 0.0
  %1739 = vmatprep.subr.mxu0 0.0
  %1740 = vmatpush1.msra.mxu0 0.0
  %1741 = vmatprep.subr.mxu0 0.0
  %1742 = vmatpush1.msra.mxu0 0.0
  %1743 = vmatprep.subr.mxu0 0.0
  %1744 = vmatpush1.msra.mxu0 0.0
  %1745 = vmatprep.subr.mxu0 0.0
  %1746 = vmatpush1.msra.mxu0 0.0
  %1747 = vmatprep.subr.mxu0 0.0
  %1748 = vmatpush1.msra.mxu0 0.0
  %1749 = vmatprep.subr.mxu0 0.0
  %1750 = vmatpush1.msra.mxu0 0.0
  %1751 = vmatprep.subr.mxu0 0.0
  %1752 = vmatpush1.msra.mxu0 0.0
  %1753 = vmatprep.subr.mxu0 0.0
  %1754 = vmatpush1.msra.mxu0 0.0
  %1755 = vmatprep.mubr.f32.mxu0 0.0
  %1756 = vmatmul.mubr.f32.gmra.mrb[0].mxu0 %v1680
  %v1757 = vpop.f32.mrb[0].mxu0
  %v1758 = vadd.f32 0.0, %v1757
  %v1759 = vpop.f32.mrb[0].mxu0
  %1760 = vmatprep.mubr.f32.mxu0 0.0
  %1761 = vmatmul.mubr.f32.gmra.mrb[0].mxu0 %v1683
  %v1762 = vpop.f32.mrb[0].mxu0
  %v1763 = vadd.f32 0.0, %v1762
  %v1764 = vpop.f32.mrb[0].mxu0
  %1765 = vmatprep.mubr.f32.mxu0 0.0
  %1766 = vmatmul.mubr.f32.gmra.mrb[0].mxu0 %v1686
  %v1767 = vpop.f32.mrb[0].mxu0
  %v1768 = vadd.f32 0.0, %v1767
  %v1769 = vpop.f32.mrb[0].mxu0
  %1770 = vmatprep.mubr.f32.mxu0 0.0
  %1771 = vmatmul.mubr.f32.gmra.mrb[0].mxu0 %v1689
  %v1772 = vpop.f32.mrb[0].mxu0
  %v1773 = vadd.f32 0.0, %v1772
  %v1774 = vpop.f32.mrb[0].mxu0
  %1775 = vdwg.mxu0
  %v1776 = vlaneseq
  %v1777 = vshrl.u32 %v1776, 7
  %v1778 = vsub.s32 7, %v1777
  %v1779 = vrot.slane %v491, %v1778
  %v1780 = vmul.f32 %v1779, %v1670
  %v1781 = vmul.f32 %v1779, %v1671
  %v1782 = vmul.f32 %v1779, %v1672
  %v1783 = vmul.f32 %v1779, %v1673
  %v1784 = vlaneseq
  %v1785 = vshrl.u32 %v1784, 7
  %v1786 = vsub.s32 7, %v1785
  %v1787 = vrot.slane %v698, %v1786
  %v1788 = vmul.f32 %v1787, %v1758
  %v1789 = vmul.f32 %v1787, %v1763
  %v1790 = vmul.f32 %v1787, %v1768
  %v1791 = vmul.f32 %v1787, %v1773
  %v1792 = vadd.f32 %v1780, %v1788
  %v1793 = vadd.f32 %v1781, %v1789
  %v1794 = vadd.f32 %v1782, %v1790
  %v1795 = vadd.f32 %v1783, %v1791
  %s1796 = scalar_lea.vmem %s2, 256
  %v1797 = vld [vmem:[%s1796] sm:$0xff]
  %v1798 = vld [vmem:[%s1796 + $0x8] sm:$0xff]
  %v1799 = vld [vmem:[%s1796 + $0x10] sm:$0xff]
  %v1800 = vld [vmem:[%s1796 + $0x18] sm:$0xff]
  %v1802 = vsel %vm824, %v1797, 0
  %v1805 = vsel %vm824, %v1798, 0
  %v1808 = vsel %vm824, %v1799, 0
  %v1811 = vsel %vm824, %v1800, 0
  %1813 = vmatprep.subr.mxu0 0.0
  %1814 = vmatpush1.msra.mxu0 %v1792
  %1815 = vmatprep.subr.mxu0 0.0
  %1816 = vmatpush1.msra.mxu0 %v1793
  %1817 = vmatprep.subr.mxu0 0.0
  %1818 = vmatpush1.msra.mxu0 %v1794
  %1819 = vmatprep.subr.mxu0 0.0
  %1820 = vmatpush1.msra.mxu0 %v1795
  %1821 = vmatprep.subr.mxu0 0.0
  %1822 = vmatpush1.msra.mxu0 0.0
  %1823 = vmatprep.subr.mxu0 0.0
  %1824 = vmatpush1.msra.mxu0 0.0
  %1825 = vmatprep.subr.mxu0 0.0
  %1826 = vmatpush1.msra.mxu0 0.0
  %1827 = vmatprep.subr.mxu0 0.0
  %1828 = vmatpush1.msra.mxu0 0.0
  %1829 = vmatprep.subr.mxu0 0.0
  %1830 = vmatpush1.msra.mxu0 0.0
  %1831 = vmatprep.subr.mxu0 0.0
  %1832 = vmatpush1.msra.mxu0 0.0
  %1833 = vmatprep.subr.mxu0 0.0
  %1834 = vmatpush1.msra.mxu0 0.0
  %1835 = vmatprep.subr.mxu0 0.0
  %1836 = vmatpush1.msra.mxu0 0.0
  %1837 = vmatprep.subr.mxu0 0.0
  %1838 = vmatpush1.msra.mxu0 0.0
  %1839 = vmatprep.subr.mxu0 0.0
  %1840 = vmatpush1.msra.mxu0 0.0
  %1841 = vmatprep.subr.mxu0 0.0
  %1842 = vmatpush1.msra.mxu0 0.0
  %1843 = vmatprep.subr.mxu0 0.0
  %1844 = vmatpush1.msra.mxu0 0.0
  %1845 = vmatprep.subr.mxu0 0.0
  %1846 = vmatpush1.msra.mxu0 0.0
  %1847 = vmatprep.subr.mxu0 0.0
  %1848 = vmatpush1.msra.mxu0 0.0
  %1849 = vmatprep.subr.mxu0 0.0
  %1850 = vmatpush1.msra.mxu0 0.0
  %1851 = vmatprep.subr.mxu0 0.0
  %1852 = vmatpush1.msra.mxu0 0.0
  %1853 = vmatprep.subr.mxu0 0.0
  %1854 = vmatpush1.msra.mxu0 0.0
  %1855 = vmatprep.subr.mxu0 0.0
  %1856 = vmatpush1.msra.mxu0 0.0
  %1857 = vmatprep.subr.mxu0 0.0
  %1858 = vmatpush1.msra.mxu0 0.0
  %1859 = vmatprep.subr.mxu0 0.0
  %1860 = vmatpush1.msra.mxu0 0.0
  %1861 = vmatprep.subr.mxu0 0.0
  %1862 = vmatpush1.msra.mxu0 0.0
  %1863 = vmatprep.subr.mxu0 0.0
  %1864 = vmatpush1.msra.mxu0 0.0
  %1865 = vmatprep.subr.mxu0 0.0
  %1866 = vmatpush1.msra.mxu0 0.0
  %1867 = vmatprep.subr.mxu0 0.0
  %1868 = vmatpush1.msra.mxu0 0.0
  %1869 = vmatprep.subr.mxu0 0.0
  %1870 = vmatpush1.msra.mxu0 0.0
  %1871 = vmatprep.subr.mxu0 0.0
  %1872 = vmatpush1.msra.mxu0 0.0
  %1873 = vmatprep.subr.mxu0 0.0
  %1874 = vmatpush1.msra.mxu0 0.0
  %1875 = vmatprep.subr.mxu0 0.0
  %1876 = vmatpush1.msra.mxu0 0.0
  %1877 = vmatprep.mubr.f32.mxu0 0.0
  %1878 = vmatmul.mubr.f32.gmra.mrb[0].mxu0 %v1802
  %v1879 = vpop.f32.mrb[0].mxu0
  %v1880 = vadd.f32 0.0, %v1879
  %v1881 = vpop.f32.mrb[0].mxu0
  %1882 = vmatprep.mubr.f32.mxu0 0.0
  %1883 = vmatmul.mubr.f32.gmra.mrb[0].mxu0 %v1805
  %v1884 = vpop.f32.mrb[0].mxu0
  %v1885 = vadd.f32 0.0, %v1884
  %v1886 = vpop.f32.mrb[0].mxu0
  %1887 = vmatprep.mubr.f32.mxu0 0.0
  %1888 = vmatmul.mubr.f32.gmra.mrb[0].mxu0 %v1808
  %v1889 = vpop.f32.mrb[0].mxu0
  %v1890 = vadd.f32 0.0, %v1889
  %v1891 = vpop.f32.mrb[0].mxu0
  %1892 = vmatprep.mubr.f32.mxu0 0.0
  %1893 = vmatmul.mubr.f32.gmra.mrb[0].mxu0 %v1811
  %v1894 = vpop.f32.mrb[0].mxu0
  %v1895 = vadd.f32 0.0, %v1894
  %v1896 = vpop.f32.mrb[0].mxu0
  %1897 = vdwg.mxu0
  %v1898 = vlaneseq
  %v1899 = vshrl.u32 %v1898, 7
  %v1900 = vsub.s32 0, %v1899
  %v1901 = vrot.slane %v594, %v1900
  %v1902 = vmul.f32 %v1901, %v1792
  %v1903 = vmul.f32 %v1901, %v1793
  %v1904 = vmul.f32 %v1901, %v1794
  %v1905 = vmul.f32 %v1901, %v1795
  %v1906 = vlaneseq
  %v1907 = vshrl.u32 %v1906, 7
  %v1908 = vsub.s32 0, %v1907
  %v1909 = vrot.slane %v802, %v1908
  %v1910 = vmul.f32 %v1909, %v1880
  %v1911 = vmul.f32 %v1909, %v1885
  %v1912 = vmul.f32 %v1909, %v1890
  %v1913 = vmul.f32 %v1909, %v1895
  %v1914 = vadd.f32 %v1902, %v1910
  %v1915 = vadd.f32 %v1903, %v1911
  %v1916 = vadd.f32 %v1904, %v1912
  %v1917 = vadd.f32 %v1905, %v1913
  %s1918 = scalar_lea.vmem %s2, 288
  %v1919 = vld [vmem:[%s1918] sm:$0xff]
  %v1920 = vld [vmem:[%s1918 + $0x8] sm:$0xff]
  %v1921 = vld [vmem:[%s1918 + $0x10] sm:$0xff]
  %v1922 = vld [vmem:[%s1918 + $0x18] sm:$0xff]
  %v1924 = vsel %vm824, %v1919, 0
  %v1927 = vsel %vm824, %v1920, 0
  %v1930 = vsel %vm824, %v1921, 0
  %v1933 = vsel %vm824, %v1922, 0
  %1935 = vmatprep.subr.mxu0 0.0
  %1936 = vmatpush1.msra.mxu0 %v1914
  %1937 = vmatprep.subr.mxu0 0.0
  %1938 = vmatpush1.msra.mxu0 %v1915
  %1939 = vmatprep.subr.mxu0 0.0
  %1940 = vmatpush1.msra.mxu0 %v1916
  %1941 = vmatprep.subr.mxu0 0.0
  %1942 = vmatpush1.msra.mxu0 %v1917
  %1943 = vmatprep.subr.mxu0 0.0
  %1944 = vmatpush1.msra.mxu0 0.0
  %1945 = vmatprep.subr.mxu0 0.0
  %1946 = vmatpush1.msra.mxu0 0.0
  %1947 = vmatprep.subr.mxu0 0.0
  %1948 = vmatpush1.msra.mxu0 0.0
  %1949 = vmatprep.subr.mxu0 0.0
  %1950 = vmatpush1.msra.mxu0 0.0
  %1951 = vmatprep.subr.mxu0 0.0
  %1952 = vmatpush1.msra.mxu0 0.0
  %1953 = vmatprep.subr.mxu0 0.0
  %1954 = vmatpush1.msra.mxu0 0.0
  %1955 = vmatprep.subr.mxu0 0.0
  %1956 = vmatpush1.msra.mxu0 0.0
  %1957 = vmatprep.subr.mxu0 0.0
  %1958 = vmatpush1.msra.mxu0 0.0
  %1959 = vmatprep.subr.mxu0 0.0
  %1960 = vmatpush1.msra.mxu0 0.0
  %1961 = vmatprep.subr.mxu0 0.0
  %1962 = vmatpush1.msra.mxu0 0.0
  %1963 = vmatprep.subr.mxu0 0.0
  %1964 = vmatpush1.msra.mxu0 0.0
  %1965 = vmatprep.subr.mxu0 0.0
  %1966 = vmatpush1.msra.mxu0 0.0
  %1967 = vmatprep.subr.mxu0 0.0
  %1968 = vmatpush1.msra.mxu0 0.0
  %1969 = vmatprep.subr.mxu0 0.0
  %1970 = vmatpush1.msra.mxu0 0.0
  %1971 = vmatprep.subr.mxu0 0.0
  %1972 = vmatpush1.msra.mxu0 0.0
  %1973 = vmatprep.subr.mxu0 0.0
  %1974 = vmatpush1.msra.mxu0 0.0
  %1975 = vmatprep.subr.mxu0 0.0
  %1976 = vmatpush1.msra.mxu0 0.0
  %1977 = vmatprep.subr.mxu0 0.0
  %1978 = vmatpush1.msra.mxu0 0.0
  %1979 = vmatprep.subr.mxu0 0.0
  %1980 = vmatpush1.msra.mxu0 0.0
  %1981 = vmatprep.subr.mxu0 0.0
  %1982 = vmatpush1.msra.mxu0 0.0
  %1983 = vmatprep.subr.mxu0 0.0
  %1984 = vmatpush1.msra.mxu0 0.0
  %1985 = vmatprep.subr.mxu0 0.0
  %1986 = vmatpush1.msra.mxu0 0.0
  %1987 = vmatprep.subr.mxu0 0.0
  %1988 = vmatpush1.msra.mxu0 0.0
  %1989 = vmatprep.subr.mxu0 0.0
  %1990 = vmatpush1.msra.mxu0 0.0
  %1991 = vmatprep.subr.mxu0 0.0
  %1992 = vmatpush1.msra.mxu0 0.0
  %1993 = vmatprep.subr.mxu0 0.0
  %1994 = vmatpush1.msra.mxu0 0.0
  %1995 = vmatprep.subr.mxu0 0.0
  %1996 = vmatpush1.msra.mxu0 0.0
  %1997 = vmatprep.subr.mxu0 0.0
  %1998 = vmatpush1.msra.mxu0 0.0
  %1999 = vmatprep.mubr.f32.mxu0 0.0
  %2000 = vmatmul.mubr.f32.gmra.mrb[0].mxu0 %v1924
  %v2001 = vpop.f32.mrb[0].mxu0
  %v2002 = vadd.f32 0.0, %v2001
  %v2003 = vpop.f32.mrb[0].mxu0
  %2004 = vmatprep.mubr.f32.mxu0 0.0
  %2005 = vmatmul.mubr.f32.gmra.mrb[0].mxu0 %v1927
  %v2006 = vpop.f32.mrb[0].mxu0
  %v2007 = vadd.f32 0.0, %v2006
  %v2008 = vpop.f32.mrb[0].mxu0
  %2009 = vmatprep.mubr.f32.mxu0 0.0
  %2010 = vmatmul.mubr.f32.gmra.mrb[0].mxu0 %v1930
  %v2011 = vpop.f32.mrb[0].mxu0
  %v2012 = vadd.f32 0.0, %v2011
  %v2013 = vpop.f32.mrb[0].mxu0
  %2014 = vmatprep.mubr.f32.mxu0 0.0
  %2015 = vmatmul.mubr.f32.gmra.mrb[0].mxu0 %v1933
  %v2016 = vpop.f32.mrb[0].mxu0
  %v2017 = vadd.f32 0.0, %v2016
  %v2018 = vpop.f32.mrb[0].mxu0
  %2019 = vdwg.mxu0
  %v2020 = vlaneseq
  %v2021 = vshrl.u32 %v2020, 7
  %v2022 = vsub.s32 1, %v2021
  %v2023 = vrot.slane %v594, %v2022
  %v2024 = vmul.f32 %v2023, %v1914
  %v2025 = vmul.f32 %v2023, %v1915
  %v2026 = vmul.f32 %v2023, %v1916
  %v2027 = vmul.f32 %v2023, %v1917
  %v2028 = vlaneseq
  %v2029 = vshrl.u32 %v2028, 7
  %v2030 = vsub.s32 1, %v2029
  %v2031 = vrot.slane %v802, %v2030
  %v2032 = vmul.f32 %v2031, %v2002
  %v2033 = vmul.f32 %v2031, %v2007
  %v2034 = vmul.f32 %v2031, %v2012
  %v2035 = vmul.f32 %v2031, %v2017
  %v2036 = vadd.f32 %v2024, %v2032
  %v2037 = vadd.f32 %v2025, %v2033
  %v2038 = vadd.f32 %v2026, %v2034
  %v2039 = vadd.f32 %v2027, %v2035
  %s2040 = scalar_lea.vmem %s2, 320
  %v2041 = vld [vmem:[%s2040] sm:$0xff]
  %v2042 = vld [vmem:[%s2040 + $0x8] sm:$0xff]
  %v2043 = vld [vmem:[%s2040 + $0x10] sm:$0xff]
  %v2044 = vld [vmem:[%s2040 + $0x18] sm:$0xff]
  %v2046 = vsel %vm824, %v2041, 0
  %v2049 = vsel %vm824, %v2042, 0
  %v2052 = vsel %vm824, %v2043, 0
  %v2055 = vsel %vm824, %v2044, 0
  %2057 = vmatprep.subr.mxu0 0.0
  %2058 = vmatpush1.msra.mxu0 %v2036
  %2059 = vmatprep.subr.mxu0 0.0
  %2060 = vmatpush1.msra.mxu0 %v2037
  %2061 = vmatprep.subr.mxu0 0.0
  %2062 = vmatpush1.msra.mxu0 %v2038
  %2063 = vmatprep.subr.mxu0 0.0
  %2064 = vmatpush1.msra.mxu0 %v2039
  %2065 = vmatprep.subr.mxu0 0.0
  %2066 = vmatpush1.msra.mxu0 0.0
  %2067 = vmatprep.subr.mxu0 0.0
  %2068 = vmatpush1.msra.mxu0 0.0
  %2069 = vmatprep.subr.mxu0 0.0
  %2070 = vmatpush1.msra.mxu0 0.0
  %2071 = vmatprep.subr.mxu0 0.0
  %2072 = vmatpush1.msra.mxu0 0.0
  %2073 = vmatprep.subr.mxu0 0.0
  %2074 = vmatpush1.msra.mxu0 0.0
  %2075 = vmatprep.subr.mxu0 0.0
  %2076 = vmatpush1.msra.mxu0 0.0
  %2077 = vmatprep.subr.mxu0 0.0
  %2078 = vmatpush1.msra.mxu0 0.0
  %2079 = vmatprep.subr.mxu0 0.0
  %2080 = vmatpush1.msra.mxu0 0.0
  %2081 = vmatprep.subr.mxu0 0.0
  %2082 = vmatpush1.msra.mxu0 0.0
  %2083 = vmatprep.subr.mxu0 0.0
  %2084 = vmatpush1.msra.mxu0 0.0
  %2085 = vmatprep.subr.mxu0 0.0
  %2086 = vmatpush1.msra.mxu0 0.0
  %2087 = vmatprep.subr.mxu0 0.0
  %2088 = vmatpush1.msra.mxu0 0.0
  %2089 = vmatprep.subr.mxu0 0.0
  %2090 = vmatpush1.msra.mxu0 0.0
  %2091 = vmatprep.subr.mxu0 0.0
  %2092 = vmatpush1.msra.mxu0 0.0
  %2093 = vmatprep.subr.mxu0 0.0
  %2094 = vmatpush1.msra.mxu0 0.0
  %2095 = vmatprep.subr.mxu0 0.0
  %2096 = vmatpush1.msra.mxu0 0.0
  %2097 = vmatprep.subr.mxu0 0.0
  %2098 = vmatpush1.msra.mxu0 0.0
  %2099 = vmatprep.subr.mxu0 0.0
  %2100 = vmatpush1.msra.mxu0 0.0
  %2101 = vmatprep.subr.mxu0 0.0
  %2102 = vmatpush1.msra.mxu0 0.0
  %2103 = vmatprep.subr.mxu0 0.0
  %2104 = vmatpush1.msra.mxu0 0.0
  %2105 = vmatprep.subr.mxu0 0.0
  %2106 = vmatpush1.msra.mxu0 0.0
  %2107 = vmatprep.subr.mxu0 0.0
  %2108 = vmatpush1.msra.mxu0 0.0
  %2109 = vmatprep.subr.mxu0 0.0
  %2110 = vmatpush1.msra.mxu0 0.0
  %2111 = vmatprep.subr.mxu0 0.0
  %2112 = vmatpush1.msra.mxu0 0.0
  %2113 = vmatprep.subr.mxu0 0.0
  %2114 = vmatpush1.msra.mxu0 0.0
  %2115 = vmatprep.subr.mxu0 0.0
  %2116 = vmatpush1.msra.mxu0 0.0
  %2117 = vmatprep.subr.mxu0 0.0
  %2118 = vmatpush1.msra.mxu0 0.0
  %2119 = vmatprep.subr.mxu0 0.0
  %2120 = vmatpush1.msra.mxu0 0.0
  %2121 = vmatprep.mubr.f32.mxu0 0.0
  %2122 = vmatmul.mubr.f32.gmra.mrb[0].mxu0 %v2046
  %v2123 = vpop.f32.mrb[0].mxu0
  %v2124 = vadd.f32 0.0, %v2123
  %v2125 = vpop.f32.mrb[0].mxu0
  %2126 = vmatprep.mubr.f32.mxu0 0.0
  %2127 = vmatmul.mubr.f32.gmra.mrb[0].mxu0 %v2049
  %v2128 = vpop.f32.mrb[0].mxu0
  %v2129 = vadd.f32 0.0, %v2128
  %v2130 = vpop.f32.mrb[0].mxu0
  %2131 = vmatprep.mubr.f32.mxu0 0.0
  %2132 = vmatmul.mubr.f32.gmra.mrb[0].mxu0 %v2052
  %v2133 = vpop.f32.mrb[0].mxu0
  %v2134 = vadd.f32 0.0, %v2133
  %v2135 = vpop.f32.mrb[0].mxu0
  %2136 = vmatprep.mubr.f32.mxu0 0.0
  %2137 = vmatmul.mubr.f32.gmra.mrb[0].mxu0 %v2055
  %v2138 = vpop.f32.mrb[0].mxu0
  %v2139 = vadd.f32 0.0, %v2138
  %v2140 = vpop.f32.mrb[0].mxu0
  %2141 = vdwg.mxu0
  %v2142 = vlaneseq
  %v2143 = vshrl.u32 %v2142, 7
  %v2144 = vsub.s32 2, %v2143
  %v2145 = vrot.slane %v594, %v2144
  %v2146 = vmul.f32 %v2145, %v2036
  %v2147 = vmul.f32 %v2145, %v2037
  %v2148 = vmul.f32 %v2145, %v2038
  %v2149 = vmul.f32 %v2145, %v2039
  %v2150 = vlaneseq
  %v2151 = vshrl.u32 %v2150, 7
  %v2152 = vsub.s32 2, %v2151
  %v2153 = vrot.slane %v802, %v2152
  %v2154 = vmul.f32 %v2153, %v2124
  %v2155 = vmul.f32 %v2153, %v2129
  %v2156 = vmul.f32 %v2153, %v2134
  %v2157 = vmul.f32 %v2153, %v2139
  %v2158 = vadd.f32 %v2146, %v2154
  %v2159 = vadd.f32 %v2147, %v2155
  %v2160 = vadd.f32 %v2148, %v2156
  %v2161 = vadd.f32 %v2149, %v2157
  %s2162 = scalar_lea.vmem %s2, 352
  %v2163 = vld [vmem:[%s2162] sm:$0xff]
  %v2164 = vld [vmem:[%s2162 + $0x8] sm:$0xff]
  %v2165 = vld [vmem:[%s2162 + $0x10] sm:$0xff]
  %v2166 = vld [vmem:[%s2162 + $0x18] sm:$0xff]
  %v2168 = vsel %vm824, %v2163, 0
  %v2171 = vsel %vm824, %v2164, 0
  %v2174 = vsel %vm824, %v2165, 0
  %v2177 = vsel %vm824, %v2166, 0
  %2179 = vmatprep.subr.mxu0 0.0
  %2180 = vmatpush1.msra.mxu0 %v2158
  %2181 = vmatprep.subr.mxu0 0.0
  %2182 = vmatpush1.msra.mxu0 %v2159
  %2183 = vmatprep.subr.mxu0 0.0
  %2184 = vmatpush1.msra.mxu0 %v2160
  %2185 = vmatprep.subr.mxu0 0.0
  %2186 = vmatpush1.msra.mxu0 %v2161
  %2187 = vmatprep.subr.mxu0 0.0
  %2188 = vmatpush1.msra.mxu0 0.0
  %2189 = vmatprep.subr.mxu0 0.0
  %2190 = vmatpush1.msra.mxu0 0.0
  %2191 = vmatprep.subr.mxu0 0.0
  %2192 = vmatpush1.msra.mxu0 0.0
  %2193 = vmatprep.subr.mxu0 0.0
  %2194 = vmatpush1.msra.mxu0 0.0
  %2195 = vmatprep.subr.mxu0 0.0
  %2196 = vmatpush1.msra.mxu0 0.0
  %2197 = vmatprep.subr.mxu0 0.0
  %2198 = vmatpush1.msra.mxu0 0.0
  %2199 = vmatprep.subr.mxu0 0.0
  %2200 = vmatpush1.msra.mxu0 0.0
  %2201 = vmatprep.subr.mxu0 0.0
  %2202 = vmatpush1.msra.mxu0 0.0
  %2203 = vmatprep.subr.mxu0 0.0
  %2204 = vmatpush1.msra.mxu0 0.0
  %2205 = vmatprep.subr.mxu0 0.0
  %2206 = vmatpush1.msra.mxu0 0.0
  %2207 = vmatprep.subr.mxu0 0.0
  %2208 = vmatpush1.msra.mxu0 0.0
  %2209 = vmatprep.subr.mxu0 0.0
  %2210 = vmatpush1.msra.mxu0 0.0
  %2211 = vmatprep.subr.mxu0 0.0
  %2212 = vmatpush1.msra.mxu0 0.0
  %2213 = vmatprep.subr.mxu0 0.0
  %2214 = vmatpush1.msra.mxu0 0.0
  %2215 = vmatprep.subr.mxu0 0.0
  %2216 = vmatpush1.msra.mxu0 0.0
  %2217 = vmatprep.subr.mxu0 0.0
  %2218 = vmatpush1.msra.mxu0 0.0
  %2219 = vmatprep.subr.mxu0 0.0
  %2220 = vmatpush1.msra.mxu0 0.0
  %2221 = vmatprep.subr.mxu0 0.0
  %2222 = vmatpush1.msra.mxu0 0.0
  %2223 = vmatprep.subr.mxu0 0.0
  %2224 = vmatpush1.msra.mxu0 0.0
  %2225 = vmatprep.subr.mxu0 0.0
  %2226 = vmatpush1.msra.mxu0 0.0
  %2227 = vmatprep.subr.mxu0 0.0
  %2228 = vmatpush1.msra.mxu0 0.0
  %2229 = vmatprep.subr.mxu0 0.0
  %2230 = vmatpush1.msra.mxu0 0.0
  %2231 = vmatprep.subr.mxu0 0.0
  %2232 = vmatpush1.msra.mxu0 0.0
  %2233 = vmatprep.subr.mxu0 0.0
  %2234 = vmatpush1.msra.mxu0 0.0
  %2235 = vmatprep.subr.mxu0 0.0
  %2236 = vmatpush1.msra.mxu0 0.0
  %2237 = vmatprep.subr.mxu0 0.0
  %2238 = vmatpush1.msra.mxu0 0.0
  %2239 = vmatprep.subr.mxu0 0.0
  %2240 = vmatpush1.msra.mxu0 0.0
  %2241 = vmatprep.subr.mxu0 0.0
  %2242 = vmatpush1.msra.mxu0 0.0
  %2243 = vmatprep.mubr.f32.mxu0 0.0
  %2244 = vmatmul.mubr.f32.gmra.mrb[0].mxu0 %v2168
  %v2245 = vpop.f32.mrb[0].mxu0
  %v2246 = vadd.f32 0.0, %v2245
  %v2247 = vpop.f32.mrb[0].mxu0
  %2248 = vmatprep.mubr.f32.mxu0 0.0
  %2249 = vmatmul.mubr.f32.gmra.mrb[0].mxu0 %v2171
  %v2250 = vpop.f32.mrb[0].mxu0
  %v2251 = vadd.f32 0.0, %v2250
  %v2252 = vpop.f32.mrb[0].mxu0
  %2253 = vmatprep.mubr.f32.mxu0 0.0
  %2254 = vmatmul.mubr.f32.gmra.mrb[0].mxu0 %v2174
  %v2255 = vpop.f32.mrb[0].mxu0
  %v2256 = vadd.f32 0.0, %v2255
  %v2257 = vpop.f32.mrb[0].mxu0
  %2258 = vmatprep.mubr.f32.mxu0 0.0
  %2259 = vmatmul.mubr.f32.gmra.mrb[0].mxu0 %v2177
  %v2260 = vpop.f32.mrb[0].mxu0
  %v2261 = vadd.f32 0.0, %v2260
  %v2262 = vpop.f32.mrb[0].mxu0
  %2263 = vdwg.mxu0
  %v2264 = vlaneseq
  %v2265 = vshrl.u32 %v2264, 7
  %v2266 = vsub.s32 3, %v2265
  %v2267 = vrot.slane %v594, %v2266
  %v2268 = vmul.f32 %v2267, %v2158
  %v2269 = vmul.f32 %v2267, %v2159
  %v2270 = vmul.f32 %v2267, %v2160
  %v2271 = vmul.f32 %v2267, %v2161
  %v2272 = vlaneseq
  %v2273 = vshrl.u32 %v2272, 7
  %v2274 = vsub.s32 3, %v2273
  %v2275 = vrot.slane %v802, %v2274
  %v2276 = vmul.f32 %v2275, %v2246
  %v2277 = vmul.f32 %v2275, %v2251
  %v2278 = vmul.f32 %v2275, %v2256
  %v2279 = vmul.f32 %v2275, %v2261
  %v2280 = vadd.f32 %v2268, %v2276
  %v2281 = vadd.f32 %v2269, %v2277
  %v2282 = vadd.f32 %v2270, %v2278
  %v2283 = vadd.f32 %v2271, %v2279
  %s2284 = scalar_lea.vmem %s2, 384
  %v2285 = vld [vmem:[%s2284] sm:$0xff]
  %v2286 = vld [vmem:[%s2284 + $0x8] sm:$0xff]
  %v2287 = vld [vmem:[%s2284 + $0x10] sm:$0xff]
  %v2288 = vld [vmem:[%s2284 + $0x18] sm:$0xff]
  %v2290 = vsel %vm824, %v2285, 0
  %v2293 = vsel %vm824, %v2286, 0
  %v2296 = vsel %vm824, %v2287, 0
  %v2299 = vsel %vm824, %v2288, 0
  %2301 = vmatprep.subr.mxu0 0.0
  %2302 = vmatpush1.msra.mxu0 %v2280
  %2303 = vmatprep.subr.mxu0 0.0
  %2304 = vmatpush1.msra.mxu0 %v2281
  %2305 = vmatprep.subr.mxu0 0.0
  %2306 = vmatpush1.msra.mxu0 %v2282
  %2307 = vmatprep.subr.mxu0 0.0
  %2308 = vmatpush1.msra.mxu0 %v2283
  %2309 = vmatprep.subr.mxu0 0.0
  %2310 = vmatpush1.msra.mxu0 0.0
  %2311 = vmatprep.subr.mxu0 0.0
  %2312 = vmatpush1.msra.mxu0 0.0
  %2313 = vmatprep.subr.mxu0 0.0
  %2314 = vmatpush1.msra.mxu0 0.0
  %2315 = vmatprep.subr.mxu0 0.0
  %2316 = vmatpush1.msra.mxu0 0.0
  %2317 = vmatprep.subr.mxu0 0.0
  %2318 = vmatpush1.msra.mxu0 0.0
  %2319 = vmatprep.subr.mxu0 0.0
  %2320 = vmatpush1.msra.mxu0 0.0
  %2321 = vmatprep.subr.mxu0 0.0
  %2322 = vmatpush1.msra.mxu0 0.0
  %2323 = vmatprep.subr.mxu0 0.0
  %2324 = vmatpush1.msra.mxu0 0.0
  %2325 = vmatprep.subr.mxu0 0.0
  %2326 = vmatpush1.msra.mxu0 0.0
  %2327 = vmatprep.subr.mxu0 0.0
  %2328 = vmatpush1.msra.mxu0 0.0
  %2329 = vmatprep.subr.mxu0 0.0
  %2330 = vmatpush1.msra.mxu0 0.0
  %2331 = vmatprep.subr.mxu0 0.0
  %2332 = vmatpush1.msra.mxu0 0.0
  %2333 = vmatprep.subr.mxu0 0.0
  %2334 = vmatpush1.msra.mxu0 0.0
  %2335 = vmatprep.subr.mxu0 0.0
  %2336 = vmatpush1.msra.mxu0 0.0
  %2337 = vmatprep.subr.mxu0 0.0
  %2338 = vmatpush1.msra.mxu0 0.0
  %2339 = vmatprep.subr.mxu0 0.0
  %2340 = vmatpush1.msra.mxu0 0.0
  %2341 = vmatprep.subr.mxu0 0.0
  %2342 = vmatpush1.msra.mxu0 0.0
  %2343 = vmatprep.subr.mxu0 0.0
  %2344 = vmatpush1.msra.mxu0 0.0
  %2345 = vmatprep.subr.mxu0 0.0
  %2346 = vmatpush1.msra.mxu0 0.0
  %2347 = vmatprep.subr.mxu0 0.0
  %2348 = vmatpush1.msra.mxu0 0.0
  %2349 = vmatprep.subr.mxu0 0.0
  %2350 = vmatpush1.msra.mxu0 0.0
  %2351 = vmatprep.subr.mxu0 0.0
  %2352 = vmatpush1.msra.mxu0 0.0
  %2353 = vmatprep.subr.mxu0 0.0
  %2354 = vmatpush1.msra.mxu0 0.0
  %2355 = vmatprep.subr.mxu0 0.0
  %2356 = vmatpush1.msra.mxu0 0.0
  %2357 = vmatprep.subr.mxu0 0.0
  %2358 = vmatpush1.msra.mxu0 0.0
  %2359 = vmatprep.subr.mxu0 0.0
  %2360 = vmatpush1.msra.mxu0 0.0
  %2361 = vmatprep.subr.mxu0 0.0
  %2362 = vmatpush1.msra.mxu0 0.0
  %2363 = vmatprep.subr.mxu0 0.0
  %2364 = vmatpush1.msra.mxu0 0.0
  %2365 = vmatprep.mubr.f32.mxu0 0.0
  %2366 = vmatmul.mubr.f32.gmra.mrb[0].mxu0 %v2290
  %v2367 = vpop.f32.mrb[0].mxu0
  %v2368 = vadd.f32 0.0, %v2367
  %v2369 = vpop.f32.mrb[0].mxu0
  %2370 = vmatprep.mubr.f32.mxu0 0.0
  %2371 = vmatmul.mubr.f32.gmra.mrb[0].mxu0 %v2293
  %v2372 = vpop.f32.mrb[0].mxu0
  %v2373 = vadd.f32 0.0, %v2372
  %v2374 = vpop.f32.mrb[0].mxu0
  %2375 = vmatprep.mubr.f32.mxu0 0.0
  %2376 = vmatmul.mubr.f32.gmra.mrb[0].mxu0 %v2296
  %v2377 = vpop.f32.mrb[0].mxu0
  %v2378 = vadd.f32 0.0, %v2377
  %v2379 = vpop.f32.mrb[0].mxu0
  %2380 = vmatprep.mubr.f32.mxu0 0.0
  %2381 = vmatmul.mubr.f32.gmra.mrb[0].mxu0 %v2299
  %v2382 = vpop.f32.mrb[0].mxu0
  %v2383 = vadd.f32 0.0, %v2382
  %v2384 = vpop.f32.mrb[0].mxu0
  %2385 = vdwg.mxu0
  %v2386 = vlaneseq
  %v2387 = vshrl.u32 %v2386, 7
  %v2388 = vsub.s32 4, %v2387
  %v2389 = vrot.slane %v594, %v2388
  %v2390 = vmul.f32 %v2389, %v2280
  %v2391 = vmul.f32 %v2389, %v2281
  %v2392 = vmul.f32 %v2389, %v2282
  %v2393 = vmul.f32 %v2389, %v2283
  %v2394 = vlaneseq
  %v2395 = vshrl.u32 %v2394, 7
  %v2396 = vsub.s32 4, %v2395
  %v2397 = vrot.slane %v802, %v2396
  %v2398 = vmul.f32 %v2397, %v2368
  %v2399 = vmul.f32 %v2397, %v2373
  %v2400 = vmul.f32 %v2397, %v2378
  %v2401 = vmul.f32 %v2397, %v2383
  %v2402 = vadd.f32 %v2390, %v2398
  %v2403 = vadd.f32 %v2391, %v2399
  %v2404 = vadd.f32 %v2392, %v2400
  %v2405 = vadd.f32 %v2393, %v2401
  %s2406 = scalar_lea.vmem %s2, 416
  %v2407 = vld [vmem:[%s2406] sm:$0xff]
  %v2408 = vld [vmem:[%s2406 + $0x8] sm:$0xff]
  %v2409 = vld [vmem:[%s2406 + $0x10] sm:$0xff]
  %v2410 = vld [vmem:[%s2406 + $0x18] sm:$0xff]
  %v2412 = vsel %vm824, %v2407, 0
  %v2415 = vsel %vm824, %v2408, 0
  %v2418 = vsel %vm824, %v2409, 0
  %v2421 = vsel %vm824, %v2410, 0
  %2423 = vmatprep.subr.mxu0 0.0
  %2424 = vmatpush1.msra.mxu0 %v2402
  %2425 = vmatprep.subr.mxu0 0.0
  %2426 = vmatpush1.msra.mxu0 %v2403
  %2427 = vmatprep.subr.mxu0 0.0
  %2428 = vmatpush1.msra.mxu0 %v2404
  %2429 = vmatprep.subr.mxu0 0.0
  %2430 = vmatpush1.msra.mxu0 %v2405
  %2431 = vmatprep.subr.mxu0 0.0
  %2432 = vmatpush1.msra.mxu0 0.0
  %2433 = vmatprep.subr.mxu0 0.0
  %2434 = vmatpush1.msra.mxu0 0.0
  %2435 = vmatprep.subr.mxu0 0.0
  %2436 = vmatpush1.msra.mxu0 0.0
  %2437 = vmatprep.subr.mxu0 0.0
  %2438 = vmatpush1.msra.mxu0 0.0
  %2439 = vmatprep.subr.mxu0 0.0
  %2440 = vmatpush1.msra.mxu0 0.0
  %2441 = vmatprep.subr.mxu0 0.0
  %2442 = vmatpush1.msra.mxu0 0.0
  %2443 = vmatprep.subr.mxu0 0.0
  %2444 = vmatpush1.msra.mxu0 0.0
  %2445 = vmatprep.subr.mxu0 0.0
  %2446 = vmatpush1.msra.mxu0 0.0
  %2447 = vmatprep.subr.mxu0 0.0
  %2448 = vmatpush1.msra.mxu0 0.0
  %2449 = vmatprep.subr.mxu0 0.0
  %2450 = vmatpush1.msra.mxu0 0.0
  %2451 = vmatprep.subr.mxu0 0.0
  %2452 = vmatpush1.msra.mxu0 0.0
  %2453 = vmatprep.subr.mxu0 0.0
  %2454 = vmatpush1.msra.mxu0 0.0
  %2455 = vmatprep.subr.mxu0 0.0
  %2456 = vmatpush1.msra.mxu0 0.0
  %2457 = vmatprep.subr.mxu0 0.0
  %2458 = vmatpush1.msra.mxu0 0.0
  %2459 = vmatprep.subr.mxu0 0.0
  %2460 = vmatpush1.msra.mxu0 0.0
  %2461 = vmatprep.subr.mxu0 0.0
  %2462 = vmatpush1.msra.mxu0 0.0
  %2463 = vmatprep.subr.mxu0 0.0
  %2464 = vmatpush1.msra.mxu0 0.0
  %2465 = vmatprep.subr.mxu0 0.0
  %2466 = vmatpush1.msra.mxu0 0.0
  %2467 = vmatprep.subr.mxu0 0.0
  %2468 = vmatpush1.msra.mxu0 0.0
  %2469 = vmatprep.subr.mxu0 0.0
  %2470 = vmatpush1.msra.mxu0 0.0
  %2471 = vmatprep.subr.mxu0 0.0
  %2472 = vmatpush1.msra.mxu0 0.0
  %2473 = vmatprep.subr.mxu0 0.0
  %2474 = vmatpush1.msra.mxu0 0.0
  %2475 = vmatprep.subr.mxu0 0.0
  %2476 = vmatpush1.msra.mxu0 0.0
  %2477 = vmatprep.subr.mxu0 0.0
  %2478 = vmatpush1.msra.mxu0 0.0
  %2479 = vmatprep.subr.mxu0 0.0
  %2480 = vmatpush1.msra.mxu0 0.0
  %2481 = vmatprep.subr.mxu0 0.0
  %2482 = vmatpush1.msra.mxu0 0.0
  %2483 = vmatprep.subr.mxu0 0.0
  %2484 = vmatpush1.msra.mxu0 0.0
  %2485 = vmatprep.subr.mxu0 0.0
  %2486 = vmatpush1.msra.mxu0 0.0
  %2487 = vmatprep.mubr.f32.mxu0 0.0
  %2488 = vmatmul.mubr.f32.gmra.mrb[0].mxu0 %v2412
  %v2489 = vpop.f32.mrb[0].mxu0
  %v2490 = vadd.f32 0.0, %v2489
  %v2491 = vpop.f32.mrb[0].mxu0
  %2492 = vmatprep.mubr.f32.mxu0 0.0
  %2493 = vmatmul.mubr.f32.gmra.mrb[0].mxu0 %v2415
  %v2494 = vpop.f32.mrb[0].mxu0
  %v2495 = vadd.f32 0.0, %v2494
  %v2496 = vpop.f32.mrb[0].mxu0
  %2497 = vmatprep.mubr.f32.mxu0 0.0
  %2498 = vmatmul.mubr.f32.gmra.mrb[0].mxu0 %v2418
  %v2499 = vpop.f32.mrb[0].mxu0
  %v2500 = vadd.f32 0.0, %v2499
  %v2501 = vpop.f32.mrb[0].mxu0
  %2502 = vmatprep.mubr.f32.mxu0 0.0
  %2503 = vmatmul.mubr.f32.gmra.mrb[0].mxu0 %v2421
  %v2504 = vpop.f32.mrb[0].mxu0
  %v2505 = vadd.f32 0.0, %v2504
  %v2506 = vpop.f32.mrb[0].mxu0
  %2507 = vdwg.mxu0
  %v2508 = vlaneseq
  %v2509 = vshrl.u32 %v2508, 7
  %v2510 = vsub.s32 5, %v2509
  %v2511 = vrot.slane %v594, %v2510
  %v2512 = vmul.f32 %v2511, %v2402
  %v2513 = vmul.f32 %v2511, %v2403
  %v2514 = vmul.f32 %v2511, %v2404
  %v2515 = vmul.f32 %v2511, %v2405
  %v2516 = vlaneseq
  %v2517 = vshrl.u32 %v2516, 7
  %v2518 = vsub.s32 5, %v2517
  %v2519 = vrot.slane %v802, %v2518
  %v2520 = vmul.f32 %v2519, %v2490
  %v2521 = vmul.f32 %v2519, %v2495
  %v2522 = vmul.f32 %v2519, %v2500
  %v2523 = vmul.f32 %v2519, %v2505
  %v2524 = vadd.f32 %v2512, %v2520
  %v2525 = vadd.f32 %v2513, %v2521
  %v2526 = vadd.f32 %v2514, %v2522
  %v2527 = vadd.f32 %v2515, %v2523
  %s2528 = scalar_lea.vmem %s2, 448
  %v2529 = vld [vmem:[%s2528] sm:$0xff]
  %v2530 = vld [vmem:[%s2528 + $0x8] sm:$0xff]
  %v2531 = vld [vmem:[%s2528 + $0x10] sm:$0xff]
  %v2532 = vld [vmem:[%s2528 + $0x18] sm:$0xff]
  %v2534 = vsel %vm824, %v2529, 0
  %v2537 = vsel %vm824, %v2530, 0
  %v2540 = vsel %vm824, %v2531, 0
  %v2543 = vsel %vm824, %v2532, 0
  %2545 = vmatprep.subr.mxu0 0.0
  %2546 = vmatpush1.msra.mxu0 %v2524
  %2547 = vmatprep.subr.mxu0 0.0
  %2548 = vmatpush1.msra.mxu0 %v2525
  %2549 = vmatprep.subr.mxu0 0.0
  %2550 = vmatpush1.msra.mxu0 %v2526
  %2551 = vmatprep.subr.mxu0 0.0
  %2552 = vmatpush1.msra.mxu0 %v2527
  %2553 = vmatprep.subr.mxu0 0.0
  %2554 = vmatpush1.msra.mxu0 0.0
  %2555 = vmatprep.subr.mxu0 0.0
  %2556 = vmatpush1.msra.mxu0 0.0
  %2557 = vmatprep.subr.mxu0 0.0
  %2558 = vmatpush1.msra.mxu0 0.0
  %2559 = vmatprep.subr.mxu0 0.0
  %2560 = vmatpush1.msra.mxu0 0.0
  %2561 = vmatprep.subr.mxu0 0.0
  %2562 = vmatpush1.msra.mxu0 0.0
  %2563 = vmatprep.subr.mxu0 0.0
  %2564 = vmatpush1.msra.mxu0 0.0
  %2565 = vmatprep.subr.mxu0 0.0
  %2566 = vmatpush1.msra.mxu0 0.0
  %2567 = vmatprep.subr.mxu0 0.0
  %2568 = vmatpush1.msra.mxu0 0.0
  %2569 = vmatprep.subr.mxu0 0.0
  %2570 = vmatpush1.msra.mxu0 0.0
  %2571 = vmatprep.subr.mxu0 0.0
  %2572 = vmatpush1.msra.mxu0 0.0
  %2573 = vmatprep.subr.mxu0 0.0
  %2574 = vmatpush1.msra.mxu0 0.0
  %2575 = vmatprep.subr.mxu0 0.0
  %2576 = vmatpush1.msra.mxu0 0.0
  %2577 = vmatprep.subr.mxu0 0.0
  %2578 = vmatpush1.msra.mxu0 0.0
  %2579 = vmatprep.subr.mxu0 0.0
  %2580 = vmatpush1.msra.mxu0 0.0
  %2581 = vmatprep.subr.mxu0 0.0
  %2582 = vmatpush1.msra.mxu0 0.0
  %2583 = vmatprep.subr.mxu0 0.0
  %2584 = vmatpush1.msra.mxu0 0.0
  %2585 = vmatprep.subr.mxu0 0.0
  %2586 = vmatpush1.msra.mxu0 0.0
  %2587 = vmatprep.subr.mxu0 0.0
  %2588 = vmatpush1.msra.mxu0 0.0
  %2589 = vmatprep.subr.mxu0 0.0
  %2590 = vmatpush1.msra.mxu0 0.0
  %2591 = vmatprep.subr.mxu0 0.0
  %2592 = vmatpush1.msra.mxu0 0.0
  %2593 = vmatprep.subr.mxu0 0.0
  %2594 = vmatpush1.msra.mxu0 0.0
  %2595 = vmatprep.subr.mxu0 0.0
  %2596 = vmatpush1.msra.mxu0 0.0
  %2597 = vmatprep.subr.mxu0 0.0
  %2598 = vmatpush1.msra.mxu0 0.0
  %2599 = vmatprep.subr.mxu0 0.0
  %2600 = vmatpush1.msra.mxu0 0.0
  %2601 = vmatprep.subr.mxu0 0.0
  %2602 = vmatpush1.msra.mxu0 0.0
  %2603 = vmatprep.subr.mxu0 0.0
  %2604 = vmatpush1.msra.mxu0 0.0
  %2605 = vmatprep.subr.mxu0 0.0
  %2606 = vmatpush1.msra.mxu0 0.0
  %2607 = vmatprep.subr.mxu0 0.0
  %2608 = vmatpush1.msra.mxu0 0.0
  %2609 = vmatprep.mubr.f32.mxu0 0.0
  %2610 = vmatmul.mubr.f32.gmra.mrb[0].mxu0 %v2534
  %v2611 = vpop.f32.mrb[0].mxu0
  %v2612 = vadd.f32 0.0, %v2611
  %v2613 = vpop.f32.mrb[0].mxu0
  %2614 = vmatprep.mubr.f32.mxu0 0.0
  %2615 = vmatmul.mubr.f32.gmra.mrb[0].mxu0 %v2537
  %v2616 = vpop.f32.mrb[0].mxu0
  %v2617 = vadd.f32 0.0, %v2616
  %v2618 = vpop.f32.mrb[0].mxu0
  %2619 = vmatprep.mubr.f32.mxu0 0.0
  %2620 = vmatmul.mubr.f32.gmra.mrb[0].mxu0 %v2540
  %v2621 = vpop.f32.mrb[0].mxu0
  %v2622 = vadd.f32 0.0, %v2621
  %v2623 = vpop.f32.mrb[0].mxu0
  %2624 = vmatprep.mubr.f32.mxu0 0.0
  %2625 = vmatmul.mubr.f32.gmra.mrb[0].mxu0 %v2543
  %v2626 = vpop.f32.mrb[0].mxu0
  %v2627 = vadd.f32 0.0, %v2626
  %v2628 = vpop.f32.mrb[0].mxu0
  %2629 = vdwg.mxu0
  %v2630 = vlaneseq
  %v2631 = vshrl.u32 %v2630, 7
  %v2632 = vsub.s32 6, %v2631
  %v2633 = vrot.slane %v594, %v2632
  %v2634 = vmul.f32 %v2633, %v2524
  %v2635 = vmul.f32 %v2633, %v2525
  %v2636 = vmul.f32 %v2633, %v2526
  %v2637 = vmul.f32 %v2633, %v2527
  %v2638 = vlaneseq
  %v2639 = vshrl.u32 %v2638, 7
  %v2640 = vsub.s32 6, %v2639
  %v2641 = vrot.slane %v802, %v2640
  %v2642 = vmul.f32 %v2641, %v2612
  %v2643 = vmul.f32 %v2641, %v2617
  %v2644 = vmul.f32 %v2641, %v2622
  %v2645 = vmul.f32 %v2641, %v2627
  %v2646 = vadd.f32 %v2634, %v2642
  %v2647 = vadd.f32 %v2635, %v2643
  %v2648 = vadd.f32 %v2636, %v2644
  %v2649 = vadd.f32 %v2637, %v2645
  %s2650 = scalar_lea.vmem %s2, 480
  %v2651 = vld [vmem:[%s2650] sm:$0xff]
  %v2652 = vld [vmem:[%s2650 + $0x8] sm:$0xff]
  %v2653 = vld [vmem:[%s2650 + $0x10] sm:$0xff]
  %v2654 = vld [vmem:[%s2650 + $0x18] sm:$0xff]
  %v2656 = vsel %vm824, %v2651, 0
  %v2659 = vsel %vm824, %v2652, 0
  %v2662 = vsel %vm824, %v2653, 0
  %v2665 = vsel %vm824, %v2654, 0
  %2667 = vmatprep.subr.mxu0 0.0
  %2668 = vmatpush1.msra.mxu0 %v2646
  %2669 = vmatprep.subr.mxu0 0.0
  %2670 = vmatpush1.msra.mxu0 %v2647
  %2671 = vmatprep.subr.mxu0 0.0
  %2672 = vmatpush1.msra.mxu0 %v2648
  %2673 = vmatprep.subr.mxu0 0.0
  %2674 = vmatpush1.msra.mxu0 %v2649
  %2675 = vmatprep.subr.mxu0 0.0
  %2676 = vmatpush1.msra.mxu0 0.0
  %2677 = vmatprep.subr.mxu0 0.0
  %2678 = vmatpush1.msra.mxu0 0.0
  %2679 = vmatprep.subr.mxu0 0.0
  %2680 = vmatpush1.msra.mxu0 0.0
  %2681 = vmatprep.subr.mxu0 0.0
  %2682 = vmatpush1.msra.mxu0 0.0
  %2683 = vmatprep.subr.mxu0 0.0
  %2684 = vmatpush1.msra.mxu0 0.0
  %2685 = vmatprep.subr.mxu0 0.0
  %2686 = vmatpush1.msra.mxu0 0.0
  %2687 = vmatprep.subr.mxu0 0.0
  %2688 = vmatpush1.msra.mxu0 0.0
  %2689 = vmatprep.subr.mxu0 0.0
  %2690 = vmatpush1.msra.mxu0 0.0
  %2691 = vmatprep.subr.mxu0 0.0
  %2692 = vmatpush1.msra.mxu0 0.0
  %2693 = vmatprep.subr.mxu0 0.0
  %2694 = vmatpush1.msra.mxu0 0.0
  %2695 = vmatprep.subr.mxu0 0.0
  %2696 = vmatpush1.msra.mxu0 0.0
  %2697 = vmatprep.subr.mxu0 0.0
  %2698 = vmatpush1.msra.mxu0 0.0
  %2699 = vmatprep.subr.mxu0 0.0
  %2700 = vmatpush1.msra.mxu0 0.0
  %2701 = vmatprep.subr.mxu0 0.0
  %2702 = vmatpush1.msra.mxu0 0.0
  %2703 = vmatprep.subr.mxu0 0.0
  %2704 = vmatpush1.msra.mxu0 0.0
  %2705 = vmatprep.subr.mxu0 0.0
  %2706 = vmatpush1.msra.mxu0 0.0
  %2707 = vmatprep.subr.mxu0 0.0
  %2708 = vmatpush1.msra.mxu0 0.0
  %2709 = vmatprep.subr.mxu0 0.0
  %2710 = vmatpush1.msra.mxu0 0.0
  %2711 = vmatprep.subr.mxu0 0.0
  %2712 = vmatpush1.msra.mxu0 0.0
  %2713 = vmatprep.subr.mxu0 0.0
  %2714 = vmatpush1.msra.mxu0 0.0
  %2715 = vmatprep.subr.mxu0 0.0
  %2716 = vmatpush1.msra.mxu0 0.0
  %2717 = vmatprep.subr.mxu0 0.0
  %2718 = vmatpush1.msra.mxu0 0.0
  %2719 = vmatprep.subr.mxu0 0.0
  %2720 = vmatpush1.msra.mxu0 0.0
  %2721 = vmatprep.subr.mxu0 0.0
  %2722 = vmatpush1.msra.mxu0 0.0
  %2723 = vmatprep.subr.mxu0 0.0
  %2724 = vmatpush1.msra.mxu0 0.0
  %2725 = vmatprep.subr.mxu0 0.0
  %2726 = vmatpush1.msra.mxu0 0.0
  %2727 = vmatprep.subr.mxu0 0.0
  %2728 = vmatpush1.msra.mxu0 0.0
  %2729 = vmatprep.subr.mxu0 0.0
  %2730 = vmatpush1.msra.mxu0 0.0
  %2731 = vmatprep.mubr.f32.mxu0 0.0
  %2732 = vmatmul.mubr.f32.gmra.mrb[0].mxu0 %v2656
  %v2733 = vpop.f32.mrb[0].mxu0
  %v2734 = vadd.f32 0.0, %v2733
  %v2735 = vpop.f32.mrb[0].mxu0
  %2736 = vmatprep.mubr.f32.mxu0 0.0
  %2737 = vmatmul.mubr.f32.gmra.mrb[0].mxu0 %v2659
  %v2738 = vpop.f32.mrb[0].mxu0
  %v2739 = vadd.f32 0.0, %v2738
  %v2740 = vpop.f32.mrb[0].mxu0
  %2741 = vmatprep.mubr.f32.mxu0 0.0
  %2742 = vmatmul.mubr.f32.gmra.mrb[0].mxu0 %v2662
  %v2743 = vpop.f32.mrb[0].mxu0
  %v2744 = vadd.f32 0.0, %v2743
  %v2745 = vpop.f32.mrb[0].mxu0
  %2746 = vmatprep.mubr.f32.mxu0 0.0
  %2747 = vmatmul.mubr.f32.gmra.mrb[0].mxu0 %v2665
  %v2748 = vpop.f32.mrb[0].mxu0
  %v2749 = vadd.f32 0.0, %v2748
  %v2750 = vpop.f32.mrb[0].mxu0
  %2751 = vdwg.mxu0
  %v2752 = vlaneseq
  %v2753 = vshrl.u32 %v2752, 7
  %v2754 = vsub.s32 7, %v2753
  %v2755 = vrot.slane %v594, %v2754
  %v2756 = vmul.f32 %v2755, %v2646
  %v2757 = vmul.f32 %v2755, %v2647
  %v2758 = vmul.f32 %v2755, %v2648
  %v2759 = vmul.f32 %v2755, %v2649
  %v2760 = vlaneseq
  %v2761 = vshrl.u32 %v2760, 7
  %v2762 = vsub.s32 7, %v2761
  %v2763 = vrot.slane %v802, %v2762
  %v2764 = vmul.f32 %v2763, %v2734
  %v2765 = vmul.f32 %v2763, %v2739
  %v2766 = vmul.f32 %v2763, %v2744
  %v2767 = vmul.f32 %v2763, %v2749
  %v2768 = vadd.f32 %v2756, %v2764
  %v2769 = vadd.f32 %v2757, %v2765
  %v2770 = vadd.f32 %v2758, %v2766
  %v2771 = vadd.f32 %v2759, %v2767
  %v2772 = vld [vmem:[%s3] sm:$0xff]
  %v2773 = vld [vmem:[%s3 + $0x8] sm:$0xff]
  %v2774 = vld [vmem:[%s3 + $0x10] sm:$0xff]
  %v2775 = vld [vmem:[%s3 + $0x18] sm:$0xff]
  %v2777 = vsel %vm824, %v2772, 0
  %v2780 = vsel %vm824, %v2773, 0
  %v2783 = vsel %vm824, %v2774, 0
  %v2786 = vsel %vm824, %v2775, 0
  %2788 = vmatprep.subr.mxu0 0.0
  %2789 = vmatpush1.msra.mxu0 %v2768
  %2790 = vmatprep.subr.mxu0 0.0
  %2791 = vmatpush1.msra.mxu0 %v2769
  %2792 = vmatprep.subr.mxu0 0.0
  %2793 = vmatpush1.msra.mxu0 %v2770
  %2794 = vmatprep.subr.mxu0 0.0
  %2795 = vmatpush1.msra.mxu0 %v2771
  %2796 = vmatprep.subr.mxu0 0.0
  %2797 = vmatpush1.msra.mxu0 0.0
  %2798 = vmatprep.subr.mxu0 0.0
  %2799 = vmatpush1.msra.mxu0 0.0
  %2800 = vmatprep.subr.mxu0 0.0
  %2801 = vmatpush1.msra.mxu0 0.0
  %2802 = vmatprep.subr.mxu0 0.0
  %2803 = vmatpush1.msra.mxu0 0.0
  %2804 = vmatprep.subr.mxu0 0.0
  %2805 = vmatpush1.msra.mxu0 0.0
  %2806 = vmatprep.subr.mxu0 0.0
  %2807 = vmatpush1.msra.mxu0 0.0
  %2808 = vmatprep.subr.mxu0 0.0
  %2809 = vmatpush1.msra.mxu0 0.0
  %2810 = vmatprep.subr.mxu0 0.0
  %2811 = vmatpush1.msra.mxu0 0.0
  %2812 = vmatprep.subr.mxu0 0.0
  %2813 = vmatpush1.msra.mxu0 0.0
  %2814 = vmatprep.subr.mxu0 0.0
  %2815 = vmatpush1.msra.mxu0 0.0
  %2816 = vmatprep.subr.mxu0 0.0
  %2817 = vmatpush1.msra.mxu0 0.0
  %2818 = vmatprep.subr.mxu0 0.0
  %2819 = vmatpush1.msra.mxu0 0.0
  %2820 = vmatprep.subr.mxu0 0.0
  %2821 = vmatpush1.msra.mxu0 0.0
  %2822 = vmatprep.subr.mxu0 0.0
  %2823 = vmatpush1.msra.mxu0 0.0
  %2824 = vmatprep.subr.mxu0 0.0
  %2825 = vmatpush1.msra.mxu0 0.0
  %2826 = vmatprep.subr.mxu0 0.0
  %2827 = vmatpush1.msra.mxu0 0.0
  %2828 = vmatprep.subr.mxu0 0.0
  %2829 = vmatpush1.msra.mxu0 0.0
  %2830 = vmatprep.subr.mxu0 0.0
  %2831 = vmatpush1.msra.mxu0 0.0
  %2832 = vmatprep.subr.mxu0 0.0
  %2833 = vmatpush1.msra.mxu0 0.0
  %2834 = vmatprep.subr.mxu0 0.0
  %2835 = vmatpush1.msra.mxu0 0.0
  %2836 = vmatprep.subr.mxu0 0.0
  %2837 = vmatpush1.msra.mxu0 0.0
  %2838 = vmatprep.subr.mxu0 0.0
  %2839 = vmatpush1.msra.mxu0 0.0
  %2840 = vmatprep.subr.mxu0 0.0
  %2841 = vmatpush1.msra.mxu0 0.0
  %2842 = vmatprep.subr.mxu0 0.0
  %2843 = vmatpush1.msra.mxu0 0.0
  %2844 = vmatprep.subr.mxu0 0.0
  %2845 = vmatpush1.msra.mxu0 0.0
  %2846 = vmatprep.subr.mxu0 0.0
  %2847 = vmatpush1.msra.mxu0 0.0
  %2848 = vmatprep.subr.mxu0 0.0
  %2849 = vmatpush1.msra.mxu0 0.0
  %2850 = vmatprep.subr.mxu0 0.0
  %2851 = vmatpush1.msra.mxu0 0.0
  %2852 = vmatprep.mubr.f32.mxu0 0.0
  %2853 = vmatmul.mubr.f32.gmra.mrb[0].mxu0 %v2777
  %v2854 = vpop.f32.mrb[0].mxu0
  %v2855 = vadd.f32 0.0, %v2854
  %v2856 = vpop.f32.mrb[0].mxu0
  %2857 = vmatprep.mubr.f32.mxu0 0.0
  %2858 = vmatmul.mubr.f32.gmra.mrb[0].mxu0 %v2780
  %v2859 = vpop.f32.mrb[0].mxu0
  %v2860 = vadd.f32 0.0, %v2859
  %v2861 = vpop.f32.mrb[0].mxu0
  %2862 = vmatprep.mubr.f32.mxu0 0.0
  %2863 = vmatmul.mubr.f32.gmra.mrb[0].mxu0 %v2783
  %v2864 = vpop.f32.mrb[0].mxu0
  %v2865 = vadd.f32 0.0, %v2864
  %v2866 = vpop.f32.mrb[0].mxu0
  %2867 = vmatprep.mubr.f32.mxu0 0.0
  %2868 = vmatmul.mubr.f32.gmra.mrb[0].mxu0 %v2786
  %v2869 = vpop.f32.mrb[0].mxu0
  %v2870 = vadd.f32 0.0, %v2869
  %v2871 = vpop.f32.mrb[0].mxu0
  %2872 = vdwg.mxu0
  %v2873 = vmul.f32 %v2855, %v2855
  %v2874 = vmul.f32 %v2860, %v2860
  %v2875 = vmul.f32 %v2865, %v2865
  %v2876 = vmul.f32 %v2870, %v2870
  %v2877 = vadd.f32 %v2873, %v2875
  %v2878 = vadd.f32 %v2874, %v2876
  %v2879 = vand.u32 %v804, 8
  %v2880 = vand.u32 %v805, 8
  %vm2881 = vcmp.ne.s32.totalorder %v2879, 0
  %vm2882 = vcmp.ne.s32.totalorder %v2880, 0
  %v2883 = vsel %vm2881, -1.0, 1.0
  %v2884 = vsel %vm2882, -1.0, 1.0
  %v2885 = vand.u32 %v804, 4
  %v2886 = vand.u32 %v805, 4
  %vm2887 = vcmp.ne.s32.totalorder %v2885, 0
  %vm2888 = vcmp.ne.s32.totalorder %v2886, 0
  %v2889 = vsel %vm2887, -1.0, 1.0
  %v2890 = vsel %vm2888, -1.0, 1.0
  %v2891 = vadd.f32 %v2883, %v2889
  %v2892 = vadd.f32 %v2884, %v2890
  %v2893 = vand.u32 %v804, 2
  %v2894 = vand.u32 %v805, 2
  %vm2895 = vcmp.ne.s32.totalorder %v2893, 0
  %vm2896 = vcmp.ne.s32.totalorder %v2894, 0
  %v2897 = vsel %vm2895, -1.0, 1.0
  %v2898 = vsel %vm2896, -1.0, 1.0
  %v2899 = vand.u32 %v804, 1
  %v2900 = vand.u32 %v805, 1
  %vm2901 = vcmp.ne.s32.totalorder %v2899, 0
  %vm2902 = vcmp.ne.s32.totalorder %v2900, 0
  %v2903 = vsel %vm2901, -1.0, 1.0
  %v2904 = vsel %vm2902, -1.0, 1.0
  %v2905 = vadd.f32 %v2897, %v2903
  %v2906 = vadd.f32 %v2898, %v2904
  %v2907 = vmul.f32 %v2877, %v2891
  %v2908 = vmul.f32 %v2878, %v2892
  %v2909 = vadd.f32 %v2907, %v2908
  %v2910 = vrot.slane %v2909, 4
  %v2911 = vadd.f32 %v2909, %v2910
  %v2912 = vrot.slane %v2911, 2
  %v2913 = vadd.f32 %v2911, %v2912
  %v2914 = vrot.slane %v2913, 1
  %v2915 = vadd.f32 %v2913, %v2914
  %v2916 = vmul.f32 %v2877, %v2905
  %v2917 = vmul.f32 %v2878, %v2906
  %v2918 = vadd.f32 %v2916, %v2917
  %v2919 = vrot.slane %v2918, 4
  %v2920 = vadd.f32 %v2918, %v2919
  %v2921 = vrot.slane %v2920, 2
  %v2922 = vadd.f32 %v2920, %v2921
  %v2923 = vrot.slane %v2922, 1
  %v2924 = vadd.f32 %v2922, %v2923
  %v2925 = vmax.f32 %v2915, %v2924
  %v2926 = vsub.f32 %v2915, %v2925
  %v2927 = vmul.f32 %v2926, 1.442695
  %v2928 = vpow.pop %v2927
  %v2929 = vsub.f32 %v2924, %v2925
  %v2930 = vmul.f32 %v2929, 1.442695
  %v2931 = vpow.pop %v2930
  %v2932 = vadd.f32 %v2928, %v2931
  %v2933 = vlog2.pop %v2932
  %v2934 = vmul.f32 %v2933, 0.6931472
  %v2935 = vadd.f32 %v2934, %v2925
  %vm2936 = vcmask 1040384
  %v2937 = vsel %vm2936, %v2915, %v2924
  %v2938 = vsub.f32 %v2937, %v2935
  %2939 = vst [vmem:[%s4] sm:$0x3] %v2938
  // Predicated region
  $region18: #{qfc_forward.1} parent=0 // pred_check
    _
  $region19: #{qfc_forward.1} parent=0 // pred_check_branch
    %2941 = sbr.rel (0) target = $region21
  $region20: #{qfc_forward.1} parent=0 // pred_region
    _
  $region21: #{qfc_forward.1} parent=0 // pred_fallthru
    _
  // Predicated region
  $region22: #{qfc_forward.1} parent=0 // pred_check
    _
  $region23: #{qfc_forward.1} parent=0 // pred_check_branch
    %2943 = sbr.rel (0) target = $region25
  $region24: #{qfc_forward.1} parent=0 // pred_region
    _
  $region25: #{qfc_forward.1} parent=0 // pred_fallthru
    _

</llo_original>
